<compile_context>
chip_gen: v7x
topology: tpu7x:2x2x1
jax: 0.10.0
libtpu: 0.0.40
codegen_flags: <defaults>
</compile_context>

<pallas_src>
import numpy as np
import jax
import jax.numpy as jnp
from jax import lax
from jax.experimental import pallas as pl
from jax.experimental.pallas import tpu as pltpu

NEG_SLOPE = 0.01  # torch.nn.LeakyReLU default


def _leaky(x):
    return jnp.where(x > 0, x, NEG_SLOPE * x)


# ------------------------------ Pallas kernel ------------------------------- #

def fused_kernel(x_ref, mp_ref, mn_ref,
                 w1_ref, b1_ref, w2_ref, b2_ref, w3_ref, b3_ref,
                 w4_ref, b4_ref, w5_ref, b5_ref,
                 o_ref, flat_ref):
    """Whole fcglVNN forward for the full batch in one kernel invocation.

    x_ref    : (1, B*L)    concatenated [X_real, y_target], positions on lanes
    mp_ref   : (1, B*L)    1.0 where l > 0      (valid "previous" tap)
    mn_ref   : (1, B*L)    1.0 where l < L-1    (valid "next" tap)
    w1_ref   : (C1, 3)     conv1 taps (Cin == 1)
    w2_ref   : (C2, 3*C1)  conv2 im2col weight (tap-major, cin-minor rows)
    w3_ref   : (C3, 3*C2)  conv3 im2col weight
    bN_ref   : (CN, 1)
    w4_ref   : (C3*L, H)   first Linear weight, bf16, columns in torch c*L+l order
    b4_ref   : (1, H)
    w5_ref   : (1, H)      second Linear weight
    b5_ref   : (1, 1)
    o_ref    : (B, 1)
    flat_ref : (B, C3*L)   VMEM scratch holding the flattened conv output
    """
    M = x_ref.shape[1]
    B = flat_ref.shape[0]
    C3 = w3_ref.shape[0]
    L = M // B

    mp = mp_ref[...]
    mn = mn_ref[...]

    def taps(a):
        prev = pltpu.roll(a, 1, 1) * mp        # a[.., m-1], zeroed at l == 0
        nxt = pltpu.roll(a, M - 1, 1) * mn     # a[.., m+1], zeroed at l == L-1
        return prev, nxt

    # --- conv layer 1 (Cin == 1): broadcast multiply-adds on the VPU ---
    x = x_ref[...]                                         # (1, M)
    xp, xn = taps(x)
    w1 = w1_ref[...]                                       # (C1, 3)
    y = w1[:, 0:1] * xp + w1[:, 1:2] * x + w1[:, 2:3] * xn + b1_ref[...]
    y = _leaky(y)                                          # (C1, M)

    # --- conv layers 2 and 3: one im2col MXU matmul each ---
    for w_ref, b_ref in ((w2_ref, b2_ref), (w3_ref, b3_ref)):
        ap, an = taps(y)
        im2col = jnp.concatenate([ap, y, an], axis=0)      # (3*Cin, M)
        y = jnp.dot(w_ref[...], im2col,
                    preferred_element_type=jnp.float32) + b_ref[...]
        y = _leaky(y)                                      # (Cout, M)

    # --- flatten (C3, B*L) -> (B, C3*L) in torch order: flat[b, c*L+l] = y[c, b*L+l]
    for b in range(B):
        for c in range(C3):
            flat_ref[pl.ds(b, 1), pl.ds(c * L, L)] = y[c:c + 1, b * L:(b + 1) * L]

    # --- Linear -> LeakyReLU -> Linear (H -> 1 done as a lane reduction) ---
    flat = flat_ref[...].astype(w4_ref.dtype)              # (B, D) bf16
    h = jnp.dot(flat, w4_ref[...],
                preferred_element_type=jnp.float32) + b4_ref[...]
    h = _leaky(h)                                          # (B, H) f32
    o_ref[...] = jnp.sum(h * w5_ref[...], axis=1, keepdims=True) + b5_ref[...]


# --------------------------------- Wrapper ----------------------------------- #

def prepare_params(params):
    """One-time re-layout / casting of the PyTorch-shaped parameters (hoisted)."""
    (w1, b1, w2, b2, w3, b3, lw1, lb1, lw2, lb2) = params
    C1, C2, C3 = w1.shape[0], w2.shape[0], w3.shape[0]
    w1t = w1[:, 0, :].astype(jnp.float32)                               # (C1, 3)
    w2c = jnp.transpose(w2, (0, 2, 1)).reshape(C2, 3 * C1)              # (C2, 3*C1)
    w3c = jnp.transpose(w3, (0, 2, 1)).reshape(C3, 3 * C2)              # (C3, 3*C2)
    w4 = jnp.transpose(lw1, (1, 0)).astype(jnp.bfloat16)                # (D, H), torch c*L+l rows
    return (w1t, b1[:, None], w2c, b2[:, None], w3c, b3[:, None],
            w4, lb1[None, :], lw2, lb2.reshape(1, 1))


def fcglvnn_forward(X_real, y_target, prep):
    """Pallas implementation of fcglVNN.forward (num_hidden == 3), fully fused."""
    (w1t, b1c, w2c, b2c, w3c, b3c, w4, b4r, w5r, b5r) = prep
    B = X_real.shape[0]
    x = jnp.concatenate([X_real, y_target], axis=1).astype(jnp.float32)  # (B, L)
    L = x.shape[1]
    M = B * L
    C3 = w3c.shape[0]
    D = C3 * L

    xrow = x.reshape(1, M)                                 # free row-major reshape
    l_idx = jnp.arange(M, dtype=jnp.int32) % L
    mprev = (l_idx != 0).astype(jnp.float32)[None, :]      # (1, M)
    mnext = (l_idx != L - 1).astype(jnp.float32)[None, :]  # (1, M)

    vmem = pl.BlockSpec(memory_space=pltpu.MemorySpace.VMEM)
    return pl.pallas_call(
        fused_kernel,
        out_shape=jax.ShapeDtypeStruct((B, 1), jnp.float32),
        in_specs=[vmem] * 13,
        out_specs=vmem,
        scratch_shapes=[pltpu.VMEM((B, D), jnp.float32)],
    )(xrow, mprev, mnext, w1t, b1c, w2c, b2c, w3c, b3c, w4, b4r, w5r, b5r)


# ----------------------------- Pure-JAX reference ----------------------------- #

def ref_forward(X_real, y_target, params):
    (w1, b1, w2, b2, w3, b3, lw1, lb1, lw2, lb2) = params
    out = jnp.concatenate([X_real, y_target], axis=1)[:, None, :]   # (B, 1, L) NCW
    for w, b in ((w1, b1), (w2, b2), (w3, b3)):
        Lx = out.shape[2]
        xp = jnp.pad(out, ((0, 0), (0, 0), (1, 1)))
        y = jnp.broadcast_to(b[None, :, None], (out.shape[0], w.shape[0], Lx))
        for k in range(3):
            y = y + jnp.einsum('bcl,oc->bol', xp[:, :, k:k + Lx], w[:, :, k],
                               precision=lax.Precision.HIGHEST)
        out = jnp.where(y > 0, y, NEG_SLOPE * y)
    flat = out.reshape(out.shape[0], -1)
    h = jnp.dot(flat, lw1.T, precision=lax.Precision.HIGHEST) + lb1
    h = jnp.where(h > 0, h, NEG_SLOPE * h)
    return jnp.dot(h, lw2.T, precision=lax.Precision.HIGHEST) + lb2


# -------------------------------- Param init ---------------------------------- #

def init_params(key, in_channels, num_labels, num_hidden, var_hidden):
    L = in_channels + num_labels
    chans = [1] + [var_hidden // (2 ** i) for i in reversed(range(num_hidden))]
    keys = jax.random.split(key, 2 * num_hidden + 4)
    params = []
    ki = 0
    for cin, cout in zip(chans[:-1], chans[1:]):
        w = 0.3 * jax.random.normal(keys[ki], (cout, cin, 3), jnp.float32) / np.sqrt(3.0 * cin)
        b = 0.1 * jax.random.normal(keys[ki + 1], (cout,), jnp.float32)
        params += [w, b]
        ki += 2
    D = var_hidden * L
    H = var_hidden * 2
    lw1 = jax.random.normal(keys[ki], (H, D), jnp.float32) / np.sqrt(D)
    lb1 = 0.1 * jax.random.normal(keys[ki + 1], (H,), jnp.float32)
    lw2 = jax.random.normal(keys[ki + 2], (1, H), jnp.float32) / np.sqrt(H)
    lb2 = 0.1 * jax.random.normal(keys[ki + 3], (1,), jnp.float32)
    params += [lw1, lb1, lw2, lb2]
    return tuple(params)


# ----------------------------------- Main -------------------------------------- #

if __name__ == "__main__":
    # small config consistent with the module: L = in_channels + num_labels = 128,
    # conv channels 8 -> 16 -> 32, flatten D = 32*128 = 4096, MLP hidden = 64.
    num_labels, in_channels, num_hidden, var_hidden = 5, 123, 3, 32
    B = 2

    key = jax.random.PRNGKey(0)
    kx, ky, kp = jax.random.split(key, 3)
    X_real = jax.random.normal(kx, (B, in_channels), jnp.float32)
    y_target = jax.random.normal(ky, (B, num_labels), jnp.float32)
    params = init_params(kp, in_channels, num_labels, num_hidden, var_hidden)
    prep = prepare_params(params)   # weight re-layout hoisted out of the forward path

    out = jax.block_until_ready(jax.jit(fcglvnn_forward)(X_real, y_target, prep))
    ref = ref_forward(X_real, y_target, params)

    assert out.shape == (B, 1)
    np.testing.assert_allclose(np.asarray(out), np.asarray(ref), rtol=1e-2, atol=1e-2)
    print("KERNEL_OK")
</pallas_src>

<mosaic_0001>
module attributes {stable_mosaic.version = 11 : i64} {
  func.func @fused_kernel(%arg0: memref<1x256xf32, #tpu.memory_space<vmem>>, %arg1: memref<1x256xf32, #tpu.memory_space<vmem>>, %arg2: memref<1x256xf32, #tpu.memory_space<vmem>>, %arg3: memref<8x3xf32, #tpu.memory_space<vmem>>, %arg4: memref<8x1xf32, #tpu.memory_space<vmem>>, %arg5: memref<16x24xf32, #tpu.memory_space<vmem>>, %arg6: memref<16x1xf32, #tpu.memory_space<vmem>>, %arg7: memref<32x48xf32, #tpu.memory_space<vmem>>, %arg8: memref<32x1xf32, #tpu.memory_space<vmem>>, %arg9: memref<4096x64xbf16, #tpu.memory_space<vmem>>, %arg10: memref<1x64xf32, #tpu.memory_space<vmem>>, %arg11: memref<1x64xf32, #tpu.memory_space<vmem>>, %arg12: memref<1x1xf32, #tpu.memory_space<vmem>>, %arg13: memref<2x1xf32, #tpu.memory_space<vmem>>, %arg14: memref<2x4096xf32, #tpu.memory_space<vmem>>) attributes {dimension_semantics = [], scalar_prefetch = 0 : i64, scratch_operands = 1 : i64, tpu.core_type = #tpu.core_type<tc>} {
    %c0 = arith.constant 0 : index
    %c0_0 = arith.constant 0 : index
    %0 = vector.load %arg1[%c0, %c0_0] : memref<1x256xf32, #tpu.memory_space<vmem>>, vector<1x256xf32>
    %c0_1 = arith.constant 0 : index
    %c0_2 = arith.constant 0 : index
    %1 = vector.load %arg2[%c0_1, %c0_2] : memref<1x256xf32, #tpu.memory_space<vmem>>, vector<1x256xf32>
    %c0_3 = arith.constant 0 : index
    %c0_4 = arith.constant 0 : index
    %2 = vector.load %arg0[%c0_3, %c0_4] : memref<1x256xf32, #tpu.memory_space<vmem>>, vector<1x256xf32>
    %c1_i32 = arith.constant 1 : i32
    %3 = tpu.dynamic_rotate %2 by %c1_i32 dim 1 : vector<1x256xf32>, i32 -> vector<1x256xf32>
    %4 = arith.mulf %3, %0 : vector<1x256xf32>
    %c255_i32 = arith.constant 255 : i32
    %5 = tpu.dynamic_rotate %2 by %c255_i32 dim 1 : vector<1x256xf32>, i32 -> vector<1x256xf32>
    %6 = arith.mulf %5, %1 : vector<1x256xf32>
    %c0_5 = arith.constant 0 : index
    %c0_6 = arith.constant 0 : index
    %7 = vector.load %arg3[%c0_5, %c0_6] : memref<8x3xf32, #tpu.memory_space<vmem>>, vector<8x3xf32>
    %8 = vector.extract_strided_slice %7 {offsets = [0, 0], sizes = [8, 1], strides = [1, 1]} : vector<8x3xf32> to vector<8x1xf32>
    %9 = vector.broadcast %8 : vector<8x1xf32> to vector<8x256xf32>
    %10 = vector.broadcast %4 : vector<1x256xf32> to vector<8x256xf32>
    %11 = arith.mulf %9, %10 : vector<8x256xf32>
    %12 = vector.extract_strided_slice %7 {offsets = [0, 1], sizes = [8, 1], strides = [1, 1]} : vector<8x3xf32> to vector<8x1xf32>
    %13 = vector.broadcast %12 : vector<8x1xf32> to vector<8x256xf32>
    %14 = vector.broadcast %2 : vector<1x256xf32> to vector<8x256xf32>
    %15 = arith.mulf %13, %14 : vector<8x256xf32>
    %16 = arith.addf %11, %15 : vector<8x256xf32>
    %17 = vector.extract_strided_slice %7 {offsets = [0, 2], sizes = [8, 1], strides = [1, 1]} : vector<8x3xf32> to vector<8x1xf32>
    %18 = vector.broadcast %17 : vector<8x1xf32> to vector<8x256xf32>
    %19 = vector.broadcast %6 : vector<1x256xf32> to vector<8x256xf32>
    %20 = arith.mulf %18, %19 : vector<8x256xf32>
    %21 = arith.addf %16, %20 : vector<8x256xf32>
    %c0_7 = arith.constant 0 : index
    %c0_8 = arith.constant 0 : index
    %22 = vector.load %arg4[%c0_7, %c0_8] : memref<8x1xf32, #tpu.memory_space<vmem>>, vector<8x1xf32>
    %23 = vector.broadcast %22 : vector<8x1xf32> to vector<8x256xf32>
    %24 = arith.addf %21, %23 : vector<8x256xf32>
    %cst = arith.constant 0.000000e+00 : f32
    %25 = vector.broadcast %cst : f32 to vector<8x256xf32>
    %26 = arith.cmpf ogt, %24, %25 : vector<8x256xf32>
    %cst_9 = arith.constant 0.00999999977 : f32
    %27 = vector.broadcast %cst_9 : f32 to vector<8x256xf32>
    %28 = arith.mulf %27, %24 : vector<8x256xf32>
    %29 = arith.select %26, %24, %28 : vector<8x256xi1>, vector<8x256xf32>
    %c1_i32_10 = arith.constant 1 : i32
    %30 = tpu.dynamic_rotate %29 by %c1_i32_10 dim 1 : vector<8x256xf32>, i32 -> vector<8x256xf32>
    %31 = vector.broadcast %0 : vector<1x256xf32> to vector<8x256xf32>
    %32 = arith.mulf %30, %31 : vector<8x256xf32>
    %c255_i32_11 = arith.constant 255 : i32
    %33 = tpu.dynamic_rotate %29 by %c255_i32_11 dim 1 : vector<8x256xf32>, i32 -> vector<8x256xf32>
    %34 = vector.broadcast %1 : vector<1x256xf32> to vector<8x256xf32>
    %35 = arith.mulf %33, %34 : vector<8x256xf32>
    %36 = tpu.concatenate %32, %29, %35 in 0 : vector<8x256xf32>, vector<8x256xf32>, vector<8x256xf32> -> vector<24x256xf32>
    %c0_12 = arith.constant 0 : index
    %c0_13 = arith.constant 0 : index
    %37 = vector.load %arg5[%c0_12, %c0_13] : memref<16x24xf32, #tpu.memory_space<vmem>>, vector<16x24xf32>
    %cst_14 = arith.constant dense<0.000000e+00> : vector<16x256xf32>
    %38 = tpu.matmul %37, %36, %cst_14 {dimension_numbers = #tpu.dot_dimension_numbers<[1], [0], [0], [1], [0, 0, 1, 1], [], []>} : vector<16x24xf32>, vector<24x256xf32>, vector<16x256xf32> -> vector<16x256xf32>
    %c0_15 = arith.constant 0 : index
    %c0_16 = arith.constant 0 : index
    %39 = vector.load %arg6[%c0_15, %c0_16] : memref<16x1xf32, #tpu.memory_space<vmem>>, vector<16x1xf32>
    %40 = vector.broadcast %39 : vector<16x1xf32> to vector<16x256xf32>
    %41 = arith.addf %38, %40 : vector<16x256xf32>
    %cst_17 = arith.constant 0.000000e+00 : f32
    %42 = vector.broadcast %cst_17 : f32 to vector<16x256xf32>
    %43 = arith.cmpf ogt, %41, %42 : vector<16x256xf32>
    %cst_18 = arith.constant 0.00999999977 : f32
    %44 = vector.broadcast %cst_18 : f32 to vector<16x256xf32>
    %45 = arith.mulf %44, %41 : vector<16x256xf32>
    %46 = arith.select %43, %41, %45 : vector<16x256xi1>, vector<16x256xf32>
    %c1_i32_19 = arith.constant 1 : i32
    %47 = tpu.dynamic_rotate %46 by %c1_i32_19 dim 1 : vector<16x256xf32>, i32 -> vector<16x256xf32>
    %48 = vector.broadcast %0 : vector<1x256xf32> to vector<16x256xf32>
    %49 = arith.mulf %47, %48 : vector<16x256xf32>
    %c255_i32_20 = arith.constant 255 : i32
    %50 = tpu.dynamic_rotate %46 by %c255_i32_20 dim 1 : vector<16x256xf32>, i32 -> vector<16x256xf32>
    %51 = vector.broadcast %1 : vector<1x256xf32> to vector<16x256xf32>
    %52 = arith.mulf %50, %51 : vector<16x256xf32>
    %53 = tpu.concatenate %49, %46, %52 in 0 : vector<16x256xf32>, vector<16x256xf32>, vector<16x256xf32> -> vector<48x256xf32>
    %c0_21 = arith.constant 0 : index
    %c0_22 = arith.constant 0 : index
    %54 = vector.load %arg7[%c0_21, %c0_22] : memref<32x48xf32, #tpu.memory_space<vmem>>, vector<32x48xf32>
    %cst_23 = arith.constant dense<0.000000e+00> : vector<32x256xf32>
    %55 = tpu.matmul %54, %53, %cst_23 {dimension_numbers = #tpu.dot_dimension_numbers<[1], [0], [0], [1], [0, 0, 1, 1], [], []>} : vector<32x48xf32>, vector<48x256xf32>, vector<32x256xf32> -> vector<32x256xf32>
    %c0_24 = arith.constant 0 : index
    %c0_25 = arith.constant 0 : index
    %56 = vector.load %arg8[%c0_24, %c0_25] : memref<32x1xf32, #tpu.memory_space<vmem>>, vector<32x1xf32>
    %57 = vector.broadcast %56 : vector<32x1xf32> to vector<32x256xf32>
    %58 = arith.addf %55, %57 : vector<32x256xf32>
    %cst_26 = arith.constant 0.000000e+00 : f32
    %59 = vector.broadcast %cst_26 : f32 to vector<32x256xf32>
    %60 = arith.cmpf ogt, %58, %59 : vector<32x256xf32>
    %cst_27 = arith.constant 0.00999999977 : f32
    %61 = vector.broadcast %cst_27 : f32 to vector<32x256xf32>
    %62 = arith.mulf %61, %58 : vector<32x256xf32>
    %63 = arith.select %60, %58, %62 : vector<32x256xi1>, vector<32x256xf32>
    %64 = vector.extract_strided_slice %63 {offsets = [0, 0], sizes = [1, 128], strides = [1, 1]} : vector<32x256xf32> to vector<1x128xf32>
    %c0_28 = arith.constant 0 : index
    %c0_29 = arith.constant 0 : index
    %65 = vector.load %arg14[%c0_28, %c0_29] : memref<2x4096xf32, #tpu.memory_space<vmem>>, vector<1x128xf32>
    tpu.vector_store %arg14[%c0_28, %c0_29], %64 {strides = array<i32>} : memref<2x4096xf32, #tpu.memory_space<vmem>>, vector<1x128xf32>,
    %66 = vector.extract_strided_slice %63 {offsets = [1, 0], sizes = [1, 128], strides = [1, 1]} : vector<32x256xf32> to vector<1x128xf32>
    %c0_30 = arith.constant 0 : index
    %c128 = arith.constant 128 : index
    %67 = vector.load %arg14[%c0_30, %c128] : memref<2x4096xf32, #tpu.memory_space<vmem>>, vector<1x128xf32>
    tpu.vector_store %arg14[%c0_30, %c128], %66 {strides = array<i32>} : memref<2x4096xf32, #tpu.memory_space<vmem>>, vector<1x128xf32>,
    %68 = vector.extract_strided_slice %63 {offsets = [2, 0], sizes = [1, 128], strides = [1, 1]} : vector<32x256xf32> to vector<1x128xf32>
    %c0_31 = arith.constant 0 : index
    %c256 = arith.constant 256 : index
    %69 = vector.load %arg14[%c0_31, %c256] : memref<2x4096xf32, #tpu.memory_space<vmem>>, vector<1x128xf32>
    tpu.vector_store %arg14[%c0_31, %c256], %68 {strides = array<i32>} : memref<2x4096xf32, #tpu.memory_space<vmem>>, vector<1x128xf32>,
    %70 = vector.extract_strided_slice %63 {offsets = [3, 0], sizes = [1, 128], strides = [1, 1]} : vector<32x256xf32> to vector<1x128xf32>
    %c0_32 = arith.constant 0 : index
    %c384 = arith.constant 384 : index
    %71 = vector.load %arg14[%c0_32, %c384] : memref<2x4096xf32, #tpu.memory_space<vmem>>, vector<1x128xf32>
    tpu.vector_store %arg14[%c0_32, %c384], %70 {strides = array<i32>} : memref<2x4096xf32, #tpu.memory_space<vmem>>, vector<1x128xf32>,
    %72 = vector.extract_strided_slice %63 {offsets = [4, 0], sizes = [1, 128], strides = [1, 1]} : vector<32x256xf32> to vector<1x128xf32>
    %c0_33 = arith.constant 0 : index
    %c512 = arith.constant 512 : index
    %73 = vector.load %arg14[%c0_33, %c512] : memref<2x4096xf32, #tpu.memory_space<vmem>>, vector<1x128xf32>
    tpu.vector_store %arg14[%c0_33, %c512], %72 {strides = array<i32>} : memref<2x4096xf32, #tpu.memory_space<vmem>>, vector<1x128xf32>,
    %74 = vector.extract_strided_slice %63 {offsets = [5, 0], sizes = [1, 128], strides = [1, 1]} : vector<32x256xf32> to vector<1x128xf32>
    %c0_34 = arith.constant 0 : index
    %c640 = arith.constant 640 : index
    %75 = vector.load %arg14[%c0_34, %c640] : memref<2x4096xf32, #tpu.memory_space<vmem>>, vector<1x128xf32>
    tpu.vector_store %arg14[%c0_34, %c640], %74 {strides = array<i32>} : memref<2x4096xf32, #tpu.memory_space<vmem>>, vector<1x128xf32>,
    %76 = vector.extract_strided_slice %63 {offsets = [6, 0], sizes = [1, 128], strides = [1, 1]} : vector<32x256xf32> to vector<1x128xf32>
    %c0_35 = arith.constant 0 : index
    %c768 = arith.constant 768 : index
    %77 = vector.load %arg14[%c0_35, %c768] : memref<2x4096xf32, #tpu.memory_space<vmem>>, vector<1x128xf32>
    tpu.vector_store %arg14[%c0_35, %c768], %76 {strides = array<i32>} : memref<2x4096xf32, #tpu.memory_space<vmem>>, vector<1x128xf32>,
    %78 = vector.extract_strided_slice %63 {offsets = [7, 0], sizes = [1, 128], strides = [1, 1]} : vector<32x256xf32> to vector<1x128xf32>
    %c0_36 = arith.constant 0 : index
    %c896 = arith.constant 896 : index
    %79 = vector.load %arg14[%c0_36, %c896] : memref<2x4096xf32, #tpu.memory_space<vmem>>, vector<1x128xf32>
    tpu.vector_store %arg14[%c0_36, %c896], %78 {strides = array<i32>} : memref<2x4096xf32, #tpu.memory_space<vmem>>, vector<1x128xf32>,
    %80 = vector.extract_strided_slice %63 {offsets = [8, 0], sizes = [1, 128], strides = [1, 1]} : vector<32x256xf32> to vector<1x128xf32>
    %c0_37 = arith.constant 0 : index
    %c1024 = arith.constant 1024 : index
    %81 = vector.load %arg14[%c0_37, %c1024] : memref<2x4096xf32, #tpu.memory_space<vmem>>, vector<1x128xf32>
    tpu.vector_store %arg14[%c0_37, %c1024], %80 {strides = array<i32>} : memref<2x4096xf32, #tpu.memory_space<vmem>>, vector<1x128xf32>,
    %82 = vector.extract_strided_slice %63 {offsets = [9, 0], sizes = [1, 128], strides = [1, 1]} : vector<32x256xf32> to vector<1x128xf32>
    %c0_38 = arith.constant 0 : index
    %c1152 = arith.constant 1152 : index
    %83 = vector.load %arg14[%c0_38, %c1152] : memref<2x4096xf32, #tpu.memory_space<vmem>>, vector<1x128xf32>
    tpu.vector_store %arg14[%c0_38, %c1152], %82 {strides = array<i32>} : memref<2x4096xf32, #tpu.memory_space<vmem>>, vector<1x128xf32>,
    %84 = vector.extract_strided_slice %63 {offsets = [10, 0], sizes = [1, 128], strides = [1, 1]} : vector<32x256xf32> to vector<1x128xf32>
    %c0_39 = arith.constant 0 : index
    %c1280 = arith.constant 1280 : index
    %85 = vector.load %arg14[%c0_39, %c1280] : memref<2x4096xf32, #tpu.memory_space<vmem>>, vector<1x128xf32>
    tpu.vector_store %arg14[%c0_39, %c1280], %84 {strides = array<i32>} : memref<2x4096xf32, #tpu.memory_space<vmem>>, vector<1x128xf32>,
    %86 = vector.extract_strided_slice %63 {offsets = [11, 0], sizes = [1, 128], strides = [1, 1]} : vector<32x256xf32> to vector<1x128xf32>
    %c0_40 = arith.constant 0 : index
    %c1408 = arith.constant 1408 : index
    %87 = vector.load %arg14[%c0_40, %c1408] : memref<2x4096xf32, #tpu.memory_space<vmem>>, vector<1x128xf32>
    tpu.vector_store %arg14[%c0_40, %c1408], %86 {strides = array<i32>} : memref<2x4096xf32, #tpu.memory_space<vmem>>, vector<1x128xf32>,
    %88 = vector.extract_strided_slice %63 {offsets = [12, 0], sizes = [1, 128], strides = [1, 1]} : vector<32x256xf32> to vector<1x128xf32>
    %c0_41 = arith.constant 0 : index
    %c1536 = arith.constant 1536 : index
    %89 = vector.load %arg14[%c0_41, %c1536] : memref<2x4096xf32, #tpu.memory_space<vmem>>, vector<1x128xf32>
    tpu.vector_store %arg14[%c0_41, %c1536], %88 {strides = array<i32>} : memref<2x4096xf32, #tpu.memory_space<vmem>>, vector<1x128xf32>,
    %90 = vector.extract_strided_slice %63 {offsets = [13, 0], sizes = [1, 128], strides = [1, 1]} : vector<32x256xf32> to vector<1x128xf32>
    %c0_42 = arith.constant 0 : index
    %c1664 = arith.constant 1664 : index
    %91 = vector.load %arg14[%c0_42, %c1664] : memref<2x4096xf32, #tpu.memory_space<vmem>>, vector<1x128xf32>
    tpu.vector_store %arg14[%c0_42, %c1664], %90 {strides = array<i32>} : memref<2x4096xf32, #tpu.memory_space<vmem>>, vector<1x128xf32>,
    %92 = vector.extract_strided_slice %63 {offsets = [14, 0], sizes = [1, 128], strides = [1, 1]} : vector<32x256xf32> to vector<1x128xf32>
    %c0_43 = arith.constant 0 : index
    %c1792 = arith.constant 1792 : index
    %93 = vector.load %arg14[%c0_43, %c1792] : memref<2x4096xf32, #tpu.memory_space<vmem>>, vector<1x128xf32>
    tpu.vector_store %arg14[%c0_43, %c1792], %92 {strides = array<i32>} : memref<2x4096xf32, #tpu.memory_space<vmem>>, vector<1x128xf32>,
    %94 = vector.extract_strided_slice %63 {offsets = [15, 0], sizes = [1, 128], strides = [1, 1]} : vector<32x256xf32> to vector<1x128xf32>
    %c0_44 = arith.constant 0 : index
    %c1920 = arith.constant 1920 : index
    %95 = vector.load %arg14[%c0_44, %c1920] : memref<2x4096xf32, #tpu.memory_space<vmem>>, vector<1x128xf32>
    tpu.vector_store %arg14[%c0_44, %c1920], %94 {strides = array<i32>} : memref<2x4096xf32, #tpu.memory_space<vmem>>, vector<1x128xf32>,
    %96 = vector.extract_strided_slice %63 {offsets = [16, 0], sizes = [1, 128], strides = [1, 1]} : vector<32x256xf32> to vector<1x128xf32>
    %c0_45 = arith.constant 0 : index
    %c2048 = arith.constant 2048 : index
    %97 = vector.load %arg14[%c0_45, %c2048] : memref<2x4096xf32, #tpu.memory_space<vmem>>, vector<1x128xf32>
    tpu.vector_store %arg14[%c0_45, %c2048], %96 {strides = array<i32>} : memref<2x4096xf32, #tpu.memory_space<vmem>>, vector<1x128xf32>,
    %98 = vector.extract_strided_slice %63 {offsets = [17, 0], sizes = [1, 128], strides = [1, 1]} : vector<32x256xf32> to vector<1x128xf32>
    %c0_46 = arith.constant 0 : index
    %c2176 = arith.constant 2176 : index
    %99 = vector.load %arg14[%c0_46, %c2176] : memref<2x4096xf32, #tpu.memory_space<vmem>>, vector<1x128xf32>
    tpu.vector_store %arg14[%c0_46, %c2176], %98 {strides = array<i32>} : memref<2x4096xf32, #tpu.memory_space<vmem>>, vector<1x128xf32>,
    %100 = vector.extract_strided_slice %63 {offsets = [18, 0], sizes = [1, 128], strides = [1, 1]} : vector<32x256xf32> to vector<1x128xf32>
    %c0_47 = arith.constant 0 : index
    %c2304 = arith.constant 2304 : index
    %101 = vector.load %arg14[%c0_47, %c2304] : memref<2x4096xf32, #tpu.memory_space<vmem>>, vector<1x128xf32>
    tpu.vector_store %arg14[%c0_47, %c2304], %100 {strides = array<i32>} : memref<2x4096xf32, #tpu.memory_space<vmem>>, vector<1x128xf32>,
    %102 = vector.extract_strided_slice %63 {offsets = [19, 0], sizes = [1, 128], strides = [1, 1]} : vector<32x256xf32> to vector<1x128xf32>
    %c0_48 = arith.constant 0 : index
    %c2432 = arith.constant 2432 : index
    %103 = vector.load %arg14[%c0_48, %c2432] : memref<2x4096xf32, #tpu.memory_space<vmem>>, vector<1x128xf32>
    tpu.vector_store %arg14[%c0_48, %c2432], %102 {strides = array<i32>} : memref<2x4096xf32, #tpu.memory_space<vmem>>, vector<1x128xf32>,
    %104 = vector.extract_strided_slice %63 {offsets = [20, 0], sizes = [1, 128], strides = [1, 1]} : vector<32x256xf32> to vector<1x128xf32>
    %c0_49 = arith.constant 0 : index
    %c2560 = arith.constant 2560 : index
    %105 = vector.load %arg14[%c0_49, %c2560] : memref<2x4096xf32, #tpu.memory_space<vmem>>, vector<1x128xf32>
    tpu.vector_store %arg14[%c0_49, %c2560], %104 {strides = array<i32>} : memref<2x4096xf32, #tpu.memory_space<vmem>>, vector<1x128xf32>,
    %106 = vector.extract_strided_slice %63 {offsets = [21, 0], sizes = [1, 128], strides = [1, 1]} : vector<32x256xf32> to vector<1x128xf32>
    %c0_50 = arith.constant 0 : index
    %c2688 = arith.constant 2688 : index
    %107 = vector.load %arg14[%c0_50, %c2688] : memref<2x4096xf32, #tpu.memory_space<vmem>>, vector<1x128xf32>
    tpu.vector_store %arg14[%c0_50, %c2688], %106 {strides = array<i32>} : memref<2x4096xf32, #tpu.memory_space<vmem>>, vector<1x128xf32>,
    %108 = vector.extract_strided_slice %63 {offsets = [22, 0], sizes = [1, 128], strides = [1, 1]} : vector<32x256xf32> to vector<1x128xf32>
    %c0_51 = arith.constant 0 : index
    %c2816 = arith.constant 2816 : index
    %109 = vector.load %arg14[%c0_51, %c2816] : memref<2x4096xf32, #tpu.memory_space<vmem>>, vector<1x128xf32>
    tpu.vector_store %arg14[%c0_51, %c2816], %108 {strides = array<i32>} : memref<2x4096xf32, #tpu.memory_space<vmem>>, vector<1x128xf32>,
    %110 = vector.extract_strided_slice %63 {offsets = [23, 0], sizes = [1, 128], strides = [1, 1]} : vector<32x256xf32> to vector<1x128xf32>
    %c0_52 = arith.constant 0 : index
    %c2944 = arith.constant 2944 : index
    %111 = vector.load %arg14[%c0_52, %c2944] : memref<2x4096xf32, #tpu.memory_space<vmem>>, vector<1x128xf32>
    tpu.vector_store %arg14[%c0_52, %c2944], %110 {strides = array<i32>} : memref<2x4096xf32, #tpu.memory_space<vmem>>, vector<1x128xf32>,
    %112 = vector.extract_strided_slice %63 {offsets = [24, 0], sizes = [1, 128], strides = [1, 1]} : vector<32x256xf32> to vector<1x128xf32>
    %c0_53 = arith.constant 0 : index
    %c3072 = arith.constant 3072 : index
    %113 = vector.load %arg14[%c0_53, %c3072] : memref<2x4096xf32, #tpu.memory_space<vmem>>, vector<1x128xf32>
    tpu.vector_store %arg14[%c0_53, %c3072], %112 {strides = array<i32>} : memref<2x4096xf32, #tpu.memory_space<vmem>>, vector<1x128xf32>,
    %114 = vector.extract_strided_slice %63 {offsets = [25, 0], sizes = [1, 128], strides = [1, 1]} : vector<32x256xf32> to vector<1x128xf32>
    %c0_54 = arith.constant 0 : index
    %c3200 = arith.constant 3200 : index
    %115 = vector.load %arg14[%c0_54, %c3200] : memref<2x4096xf32, #tpu.memory_space<vmem>>, vector<1x128xf32>
    tpu.vector_store %arg14[%c0_54, %c3200], %114 {strides = array<i32>} : memref<2x4096xf32, #tpu.memory_space<vmem>>, vector<1x128xf32>,
    %116 = vector.extract_strided_slice %63 {offsets = [26, 0], sizes = [1, 128], strides = [1, 1]} : vector<32x256xf32> to vector<1x128xf32>
    %c0_55 = arith.constant 0 : index
    %c3328 = arith.constant 3328 : index
    %117 = vector.load %arg14[%c0_55, %c3328] : memref<2x4096xf32, #tpu.memory_space<vmem>>, vector<1x128xf32>
    tpu.vector_store %arg14[%c0_55, %c3328], %116 {strides = array<i32>} : memref<2x4096xf32, #tpu.memory_space<vmem>>, vector<1x128xf32>,
    %118 = vector.extract_strided_slice %63 {offsets = [27, 0], sizes = [1, 128], strides = [1, 1]} : vector<32x256xf32> to vector<1x128xf32>
    %c0_56 = arith.constant 0 : index
    %c3456 = arith.constant 3456 : index
    %119 = vector.load %arg14[%c0_56, %c3456] : memref<2x4096xf32, #tpu.memory_space<vmem>>, vector<1x128xf32>
    tpu.vector_store %arg14[%c0_56, %c3456], %118 {strides = array<i32>} : memref<2x4096xf32, #tpu.memory_space<vmem>>, vector<1x128xf32>,
    %120 = vector.extract_strided_slice %63 {offsets = [28, 0], sizes = [1, 128], strides = [1, 1]} : vector<32x256xf32> to vector<1x128xf32>
    %c0_57 = arith.constant 0 : index
    %c3584 = arith.constant 3584 : index
    %121 = vector.load %arg14[%c0_57, %c3584] : memref<2x4096xf32, #tpu.memory_space<vmem>>, vector<1x128xf32>
    tpu.vector_store %arg14[%c0_57, %c3584], %120 {strides = array<i32>} : memref<2x4096xf32, #tpu.memory_space<vmem>>, vector<1x128xf32>,
    %122 = vector.extract_strided_slice %63 {offsets = [29, 0], sizes = [1, 128], strides = [1, 1]} : vector<32x256xf32> to vector<1x128xf32>
    %c0_58 = arith.constant 0 : index
    %c3712 = arith.constant 3712 : index
    %123 = vector.load %arg14[%c0_58, %c3712] : memref<2x4096xf32, #tpu.memory_space<vmem>>, vector<1x128xf32>
    tpu.vector_store %arg14[%c0_58, %c3712], %122 {strides = array<i32>} : memref<2x4096xf32, #tpu.memory_space<vmem>>, vector<1x128xf32>,
    %124 = vector.extract_strided_slice %63 {offsets = [30, 0], sizes = [1, 128], strides = [1, 1]} : vector<32x256xf32> to vector<1x128xf32>
    %c0_59 = arith.constant 0 : index
    %c3840 = arith.constant 3840 : index
    %125 = vector.load %arg14[%c0_59, %c3840] : memref<2x4096xf32, #tpu.memory_space<vmem>>, vector<1x128xf32>
    tpu.vector_store %arg14[%c0_59, %c3840], %124 {strides = array<i32>} : memref<2x4096xf32, #tpu.memory_space<vmem>>, vector<1x128xf32>,
    %126 = vector.extract_strided_slice %63 {offsets = [31, 0], sizes = [1, 128], strides = [1, 1]} : vector<32x256xf32> to vector<1x128xf32>
    %c0_60 = arith.constant 0 : index
    %c3968 = arith.constant 3968 : index
    %127 = vector.load %arg14[%c0_60, %c3968] : memref<2x4096xf32, #tpu.memory_space<vmem>>, vector<1x128xf32>
    tpu.vector_store %arg14[%c0_60, %c3968], %126 {strides = array<i32>} : memref<2x4096xf32, #tpu.memory_space<vmem>>, vector<1x128xf32>,
    %128 = vector.extract_strided_slice %63 {offsets = [0, 128], sizes = [1, 128], strides = [1, 1]} : vector<32x256xf32> to vector<1x128xf32>
    %c1 = arith.constant 1 : index
    %c0_61 = arith.constant 0 : index
    %129 = vector.load %arg14[%c1, %c0_61] : memref<2x4096xf32, #tpu.memory_space<vmem>>, vector<1x128xf32>
    tpu.vector_store %arg14[%c1, %c0_61], %128 {strides = array<i32>} : memref<2x4096xf32, #tpu.memory_space<vmem>>, vector<1x128xf32>,
    %130 = vector.extract_strided_slice %63 {offsets = [1, 128], sizes = [1, 128], strides = [1, 1]} : vector<32x256xf32> to vector<1x128xf32>
    %c1_62 = arith.constant 1 : index
    %c128_63 = arith.constant 128 : index
    %131 = vector.load %arg14[%c1_62, %c128_63] : memref<2x4096xf32, #tpu.memory_space<vmem>>, vector<1x128xf32>
    tpu.vector_store %arg14[%c1_62, %c128_63], %130 {strides = array<i32>} : memref<2x4096xf32, #tpu.memory_space<vmem>>, vector<1x128xf32>,
    %132 = vector.extract_strided_slice %63 {offsets = [2, 128], sizes = [1, 128], strides = [1, 1]} : vector<32x256xf32> to vector<1x128xf32>
    %c1_64 = arith.constant 1 : index
    %c256_65 = arith.constant 256 : index
    %133 = vector.load %arg14[%c1_64, %c256_65] : memref<2x4096xf32, #tpu.memory_space<vmem>>, vector<1x128xf32>
    tpu.vector_store %arg14[%c1_64, %c256_65], %132 {strides = array<i32>} : memref<2x4096xf32, #tpu.memory_space<vmem>>, vector<1x128xf32>,
    %134 = vector.extract_strided_slice %63 {offsets = [3, 128], sizes = [1, 128], strides = [1, 1]} : vector<32x256xf32> to vector<1x128xf32>
    %c1_66 = arith.constant 1 : index
    %c384_67 = arith.constant 384 : index
    %135 = vector.load %arg14[%c1_66, %c384_67] : memref<2x4096xf32, #tpu.memory_space<vmem>>, vector<1x128xf32>
    tpu.vector_store %arg14[%c1_66, %c384_67], %134 {strides = array<i32>} : memref<2x4096xf32, #tpu.memory_space<vmem>>, vector<1x128xf32>,
    %136 = vector.extract_strided_slice %63 {offsets = [4, 128], sizes = [1, 128], strides = [1, 1]} : vector<32x256xf32> to vector<1x128xf32>
    %c1_68 = arith.constant 1 : index
    %c512_69 = arith.constant 512 : index
    %137 = vector.load %arg14[%c1_68, %c512_69] : memref<2x4096xf32, #tpu.memory_space<vmem>>, vector<1x128xf32>
    tpu.vector_store %arg14[%c1_68, %c512_69], %136 {strides = array<i32>} : memref<2x4096xf32, #tpu.memory_space<vmem>>, vector<1x128xf32>,
    %138 = vector.extract_strided_slice %63 {offsets = [5, 128], sizes = [1, 128], strides = [1, 1]} : vector<32x256xf32> to vector<1x128xf32>
    %c1_70 = arith.constant 1 : index
    %c640_71 = arith.constant 640 : index
    %139 = vector.load %arg14[%c1_70, %c640_71] : memref<2x4096xf32, #tpu.memory_space<vmem>>, vector<1x128xf32>
    tpu.vector_store %arg14[%c1_70, %c640_71], %138 {strides = array<i32>} : memref<2x4096xf32, #tpu.memory_space<vmem>>, vector<1x128xf32>,
    %140 = vector.extract_strided_slice %63 {offsets = [6, 128], sizes = [1, 128], strides = [1, 1]} : vector<32x256xf32> to vector<1x128xf32>
    %c1_72 = arith.constant 1 : index
    %c768_73 = arith.constant 768 : index
    %141 = vector.load %arg14[%c1_72, %c768_73] : memref<2x4096xf32, #tpu.memory_space<vmem>>, vector<1x128xf32>
    tpu.vector_store %arg14[%c1_72, %c768_73], %140 {strides = array<i32>} : memref<2x4096xf32, #tpu.memory_space<vmem>>, vector<1x128xf32>,
    %142 = vector.extract_strided_slice %63 {offsets = [7, 128], sizes = [1, 128], strides = [1, 1]} : vector<32x256xf32> to vector<1x128xf32>
    %c1_74 = arith.constant 1 : index
    %c896_75 = arith.constant 896 : index
    %143 = vector.load %arg14[%c1_74, %c896_75] : memref<2x4096xf32, #tpu.memory_space<vmem>>, vector<1x128xf32>
    tpu.vector_store %arg14[%c1_74, %c896_75], %142 {strides = array<i32>} : memref<2x4096xf32, #tpu.memory_space<vmem>>, vector<1x128xf32>,
    %144 = vector.extract_strided_slice %63 {offsets = [8, 128], sizes = [1, 128], strides = [1, 1]} : vector<32x256xf32> to vector<1x128xf32>
    %c1_76 = arith.constant 1 : index
    %c1024_77 = arith.constant 1024 : index
    %145 = vector.load %arg14[%c1_76, %c1024_77] : memref<2x4096xf32, #tpu.memory_space<vmem>>, vector<1x128xf32>
    tpu.vector_store %arg14[%c1_76, %c1024_77], %144 {strides = array<i32>} : memref<2x4096xf32, #tpu.memory_space<vmem>>, vector<1x128xf32>,
    %146 = vector.extract_strided_slice %63 {offsets = [9, 128], sizes = [1, 128], strides = [1, 1]} : vector<32x256xf32> to vector<1x128xf32>
    %c1_78 = arith.constant 1 : index
    %c1152_79 = arith.constant 1152 : index
    %147 = vector.load %arg14[%c1_78, %c1152_79] : memref<2x4096xf32, #tpu.memory_space<vmem>>, vector<1x128xf32>
    tpu.vector_store %arg14[%c1_78, %c1152_79], %146 {strides = array<i32>} : memref<2x4096xf32, #tpu.memory_space<vmem>>, vector<1x128xf32>,
    %148 = vector.extract_strided_slice %63 {offsets = [10, 128], sizes = [1, 128], strides = [1, 1]} : vector<32x256xf32> to vector<1x128xf32>
    %c1_80 = arith.constant 1 : index
    %c1280_81 = arith.constant 1280 : index
    %149 = vector.load %arg14[%c1_80, %c1280_81] : memref<2x4096xf32, #tpu.memory_space<vmem>>, vector<1x128xf32>
    tpu.vector_store %arg14[%c1_80, %c1280_81], %148 {strides = array<i32>} : memref<2x4096xf32, #tpu.memory_space<vmem>>, vector<1x128xf32>,
    %150 = vector.extract_strided_slice %63 {offsets = [11, 128], sizes = [1, 128], strides = [1, 1]} : vector<32x256xf32> to vector<1x128xf32>
    %c1_82 = arith.constant 1 : index
    %c1408_83 = arith.constant 1408 : index
    %151 = vector.load %arg14[%c1_82, %c1408_83] : memref<2x4096xf32, #tpu.memory_space<vmem>>, vector<1x128xf32>
    tpu.vector_store %arg14[%c1_82, %c1408_83], %150 {strides = array<i32>} : memref<2x4096xf32, #tpu.memory_space<vmem>>, vector<1x128xf32>,
    %152 = vector.extract_strided_slice %63 {offsets = [12, 128], sizes = [1, 128], strides = [1, 1]} : vector<32x256xf32> to vector<1x128xf32>
    %c1_84 = arith.constant 1 : index
    %c1536_85 = arith.constant 1536 : index
    %153 = vector.load %arg14[%c1_84, %c1536_85] : memref<2x4096xf32, #tpu.memory_space<vmem>>, vector<1x128xf32>
    tpu.vector_store %arg14[%c1_84, %c1536_85], %152 {strides = array<i32>} : memref<2x4096xf32, #tpu.memory_space<vmem>>, vector<1x128xf32>,
    %154 = vector.extract_strided_slice %63 {offsets = [13, 128], sizes = [1, 128], strides = [1, 1]} : vector<32x256xf32> to vector<1x128xf32>
    %c1_86 = arith.constant 1 : index
    %c1664_87 = arith.constant 1664 : index
    %155 = vector.load %arg14[%c1_86, %c1664_87] : memref<2x4096xf32, #tpu.memory_space<vmem>>, vector<1x128xf32>
    tpu.vector_store %arg14[%c1_86, %c1664_87], %154 {strides = array<i32>} : memref<2x4096xf32, #tpu.memory_space<vmem>>, vector<1x128xf32>,
    %156 = vector.extract_strided_slice %63 {offsets = [14, 128], sizes = [1, 128], strides = [1, 1]} : vector<32x256xf32> to vector<1x128xf32>
    %c1_88 = arith.constant 1 : index
    %c1792_89 = arith.constant 1792 : index
    %157 = vector.load %arg14[%c1_88, %c1792_89] : memref<2x4096xf32, #tpu.memory_space<vmem>>, vector<1x128xf32>
    tpu.vector_store %arg14[%c1_88, %c1792_89], %156 {strides = array<i32>} : memref<2x4096xf32, #tpu.memory_space<vmem>>, vector<1x128xf32>,
    %158 = vector.extract_strided_slice %63 {offsets = [15, 128], sizes = [1, 128], strides = [1, 1]} : vector<32x256xf32> to vector<1x128xf32>
    %c1_90 = arith.constant 1 : index
    %c1920_91 = arith.constant 1920 : index
    %159 = vector.load %arg14[%c1_90, %c1920_91] : memref<2x4096xf32, #tpu.memory_space<vmem>>, vector<1x128xf32>
    tpu.vector_store %arg14[%c1_90, %c1920_91], %158 {strides = array<i32>} : memref<2x4096xf32, #tpu.memory_space<vmem>>, vector<1x128xf32>,
    %160 = vector.extract_strided_slice %63 {offsets = [16, 128], sizes = [1, 128], strides = [1, 1]} : vector<32x256xf32> to vector<1x128xf32>
    %c1_92 = arith.constant 1 : index
    %c2048_93 = arith.constant 2048 : index
    %161 = vector.load %arg14[%c1_92, %c2048_93] : memref<2x4096xf32, #tpu.memory_space<vmem>>, vector<1x128xf32>
    tpu.vector_store %arg14[%c1_92, %c2048_93], %160 {strides = array<i32>} : memref<2x4096xf32, #tpu.memory_space<vmem>>, vector<1x128xf32>,
    %162 = vector.extract_strided_slice %63 {offsets = [17, 128], sizes = [1, 128], strides = [1, 1]} : vector<32x256xf32> to vector<1x128xf32>
    %c1_94 = arith.constant 1 : index
    %c2176_95 = arith.constant 2176 : index
    %163 = vector.load %arg14[%c1_94, %c2176_95] : memref<2x4096xf32, #tpu.memory_space<vmem>>, vector<1x128xf32>
    tpu.vector_store %arg14[%c1_94, %c2176_95], %162 {strides = array<i32>} : memref<2x4096xf32, #tpu.memory_space<vmem>>, vector<1x128xf32>,
    %164 = vector.extract_strided_slice %63 {offsets = [18, 128], sizes = [1, 128], strides = [1, 1]} : vector<32x256xf32> to vector<1x128xf32>
    %c1_96 = arith.constant 1 : index
    %c2304_97 = arith.constant 2304 : index
    %165 = vector.load %arg14[%c1_96, %c2304_97] : memref<2x4096xf32, #tpu.memory_space<vmem>>, vector<1x128xf32>
    tpu.vector_store %arg14[%c1_96, %c2304_97], %164 {strides = array<i32>} : memref<2x4096xf32, #tpu.memory_space<vmem>>, vector<1x128xf32>,
    %166 = vector.extract_strided_slice %63 {offsets = [19, 128], sizes = [1, 128], strides = [1, 1]} : vector<32x256xf32> to vector<1x128xf32>
    %c1_98 = arith.constant 1 : index
    %c2432_99 = arith.constant 2432 : index
    %167 = vector.load %arg14[%c1_98, %c2432_99] : memref<2x4096xf32, #tpu.memory_space<vmem>>, vector<1x128xf32>
    tpu.vector_store %arg14[%c1_98, %c2432_99], %166 {strides = array<i32>} : memref<2x4096xf32, #tpu.memory_space<vmem>>, vector<1x128xf32>,
    %168 = vector.extract_strided_slice %63 {offsets = [20, 128], sizes = [1, 128], strides = [1, 1]} : vector<32x256xf32> to vector<1x128xf32>
    %c1_100 = arith.constant 1 : index
    %c2560_101 = arith.constant 2560 : index
    %169 = vector.load %arg14[%c1_100, %c2560_101] : memref<2x4096xf32, #tpu.memory_space<vmem>>, vector<1x128xf32>
    tpu.vector_store %arg14[%c1_100, %c2560_101], %168 {strides = array<i32>} : memref<2x4096xf32, #tpu.memory_space<vmem>>, vector<1x128xf32>,
    %170 = vector.extract_strided_slice %63 {offsets = [21, 128], sizes = [1, 128], strides = [1, 1]} : vector<32x256xf32> to vector<1x128xf32>
    %c1_102 = arith.constant 1 : index
    %c2688_103 = arith.constant 2688 : index
    %171 = vector.load %arg14[%c1_102, %c2688_103] : memref<2x4096xf32, #tpu.memory_space<vmem>>, vector<1x128xf32>
    tpu.vector_store %arg14[%c1_102, %c2688_103], %170 {strides = array<i32>} : memref<2x4096xf32, #tpu.memory_space<vmem>>, vector<1x128xf32>,
    %172 = vector.extract_strided_slice %63 {offsets = [22, 128], sizes = [1, 128], strides = [1, 1]} : vector<32x256xf32> to vector<1x128xf32>
    %c1_104 = arith.constant 1 : index
    %c2816_105 = arith.constant 2816 : index
    %173 = vector.load %arg14[%c1_104, %c2816_105] : memref<2x4096xf32, #tpu.memory_space<vmem>>, vector<1x128xf32>
    tpu.vector_store %arg14[%c1_104, %c2816_105], %172 {strides = array<i32>} : memref<2x4096xf32, #tpu.memory_space<vmem>>, vector<1x128xf32>,
    %174 = vector.extract_strided_slice %63 {offsets = [23, 128], sizes = [1, 128], strides = [1, 1]} : vector<32x256xf32> to vector<1x128xf32>
    %c1_106 = arith.constant 1 : index
    %c2944_107 = arith.constant 2944 : index
    %175 = vector.load %arg14[%c1_106, %c2944_107] : memref<2x4096xf32, #tpu.memory_space<vmem>>, vector<1x128xf32>
    tpu.vector_store %arg14[%c1_106, %c2944_107], %174 {strides = array<i32>} : memref<2x4096xf32, #tpu.memory_space<vmem>>, vector<1x128xf32>,
    %176 = vector.extract_strided_slice %63 {offsets = [24, 128], sizes = [1, 128], strides = [1, 1]} : vector<32x256xf32> to vector<1x128xf32>
    %c1_108 = arith.constant 1 : index
    %c3072_109 = arith.constant 3072 : index
    %177 = vector.load %arg14[%c1_108, %c3072_109] : memref<2x4096xf32, #tpu.memory_space<vmem>>, vector<1x128xf32>
    tpu.vector_store %arg14[%c1_108, %c3072_109], %176 {strides = array<i32>} : memref<2x4096xf32, #tpu.memory_space<vmem>>, vector<1x128xf32>,
    %178 = vector.extract_strided_slice %63 {offsets = [25, 128], sizes = [1, 128], strides = [1, 1]} : vector<32x256xf32> to vector<1x128xf32>
    %c1_110 = arith.constant 1 : index
    %c3200_111 = arith.constant 3200 : index
    %179 = vector.load %arg14[%c1_110, %c3200_111] : memref<2x4096xf32, #tpu.memory_space<vmem>>, vector<1x128xf32>
    tpu.vector_store %arg14[%c1_110, %c3200_111], %178 {strides = array<i32>} : memref<2x4096xf32, #tpu.memory_space<vmem>>, vector<1x128xf32>,
    %180 = vector.extract_strided_slice %63 {offsets = [26, 128], sizes = [1, 128], strides = [1, 1]} : vector<32x256xf32> to vector<1x128xf32>
    %c1_112 = arith.constant 1 : index
    %c3328_113 = arith.constant 3328 : index
    %181 = vector.load %arg14[%c1_112, %c3328_113] : memref<2x4096xf32, #tpu.memory_space<vmem>>, vector<1x128xf32>
    tpu.vector_store %arg14[%c1_112, %c3328_113], %180 {strides = array<i32>} : memref<2x4096xf32, #tpu.memory_space<vmem>>, vector<1x128xf32>,
    %182 = vector.extract_strided_slice %63 {offsets = [27, 128], sizes = [1, 128], strides = [1, 1]} : vector<32x256xf32> to vector<1x128xf32>
    %c1_114 = arith.constant 1 : index
    %c3456_115 = arith.constant 3456 : index
    %183 = vector.load %arg14[%c1_114, %c3456_115] : memref<2x4096xf32, #tpu.memory_space<vmem>>, vector<1x128xf32>
    tpu.vector_store %arg14[%c1_114, %c3456_115], %182 {strides = array<i32>} : memref<2x4096xf32, #tpu.memory_space<vmem>>, vector<1x128xf32>,
    %184 = vector.extract_strided_slice %63 {offsets = [28, 128], sizes = [1, 128], strides = [1, 1]} : vector<32x256xf32> to vector<1x128xf32>
    %c1_116 = arith.constant 1 : index
    %c3584_117 = arith.constant 3584 : index
    %185 = vector.load %arg14[%c1_116, %c3584_117] : memref<2x4096xf32, #tpu.memory_space<vmem>>, vector<1x128xf32>
    tpu.vector_store %arg14[%c1_116, %c3584_117], %184 {strides = array<i32>} : memref<2x4096xf32, #tpu.memory_space<vmem>>, vector<1x128xf32>,
    %186 = vector.extract_strided_slice %63 {offsets = [29, 128], sizes = [1, 128], strides = [1, 1]} : vector<32x256xf32> to vector<1x128xf32>
    %c1_118 = arith.constant 1 : index
    %c3712_119 = arith.constant 3712 : index
    %187 = vector.load %arg14[%c1_118, %c3712_119] : memref<2x4096xf32, #tpu.memory_space<vmem>>, vector<1x128xf32>
    tpu.vector_store %arg14[%c1_118, %c3712_119], %186 {strides = array<i32>} : memref<2x4096xf32, #tpu.memory_space<vmem>>, vector<1x128xf32>,
    %188 = vector.extract_strided_slice %63 {offsets = [30, 128], sizes = [1, 128], strides = [1, 1]} : vector<32x256xf32> to vector<1x128xf32>
    %c1_120 = arith.constant 1 : index
    %c3840_121 = arith.constant 3840 : index
    %189 = vector.load %arg14[%c1_120, %c3840_121] : memref<2x4096xf32, #tpu.memory_space<vmem>>, vector<1x128xf32>
    tpu.vector_store %arg14[%c1_120, %c3840_121], %188 {strides = array<i32>} : memref<2x4096xf32, #tpu.memory_space<vmem>>, vector<1x128xf32>,
    %190 = vector.extract_strided_slice %63 {offsets = [31, 128], sizes = [1, 128], strides = [1, 1]} : vector<32x256xf32> to vector<1x128xf32>
    %c1_122 = arith.constant 1 : index
    %c3968_123 = arith.constant 3968 : index
    %191 = vector.load %arg14[%c1_122, %c3968_123] : memref<2x4096xf32, #tpu.memory_space<vmem>>, vector<1x128xf32>
    tpu.vector_store %arg14[%c1_122, %c3968_123], %190 {strides = array<i32>} : memref<2x4096xf32, #tpu.memory_space<vmem>>, vector<1x128xf32>,
    %c0_124 = arith.constant 0 : index
    %c0_125 = arith.constant 0 : index
    %192 = vector.load %arg14[%c0_124, %c0_125] : memref<2x4096xf32, #tpu.memory_space<vmem>>, vector<2x4096xf32>
    %193 = arith.truncf %192 : vector<2x4096xf32> to vector<2x4096xbf16>
    %c0_126 = arith.constant 0 : index
    %c0_127 = arith.constant 0 : index
    %194 = vector.load %arg9[%c0_126, %c0_127] : memref<4096x64xbf16, #tpu.memory_space<vmem>>, vector<4096x64xbf16>
    %cst_128 = arith.constant dense<0.000000e+00> : vector<2x64xf32>
    %195 = tpu.matmul %193, %194, %cst_128 {dimension_numbers = #tpu.dot_dimension_numbers<[1], [0], [0], [1], [0, 0, 1, 1], [], []>} : vector<2x4096xbf16>, vector<4096x64xbf16>, vector<2x64xf32> -> vector<2x64xf32>
    %c0_129 = arith.constant 0 : index
    %c0_130 = arith.constant 0 : index
    %196 = vector.load %arg10[%c0_129, %c0_130] : memref<1x64xf32, #tpu.memory_space<vmem>>, vector<1x64xf32>
    %197 = vector.broadcast %196 : vector<1x64xf32> to vector<2x64xf32>
    %198 = arith.addf %195, %197 : vector<2x64xf32>
    %cst_131 = arith.constant 0.000000e+00 : f32
    %199 = vector.broadcast %cst_131 : f32 to vector<2x64xf32>
    %200 = arith.cmpf ogt, %198, %199 : vector<2x64xf32>
    %cst_132 = arith.constant 0.00999999977 : f32
    %201 = vector.broadcast %cst_132 : f32 to vector<2x64xf32>
    %202 = arith.mulf %201, %198 : vector<2x64xf32>
    %203 = arith.select %200, %198, %202 : vector<2x64xi1>, vector<2x64xf32>
    %c0_133 = arith.constant 0 : index
    %c0_134 = arith.constant 0 : index
    %204 = vector.load %arg11[%c0_133, %c0_134] : memref<1x64xf32, #tpu.memory_space<vmem>>, vector<1x64xf32>
    %205 = vector.broadcast %204 : vector<1x64xf32> to vector<2x64xf32>
    %206 = arith.mulf %203, %205 : vector<2x64xf32>
    %cst_135 = arith.constant dense<0.000000e+00> : vector<2xf32>
    %207 = vector.multi_reduction <add>, %206, %cst_135 [1] : vector<2x64xf32> to vector<2xf32>
    %208 = vector.shape_cast %207 : vector<2xf32> to vector<2x1xf32>
    %c0_136 = arith.constant 0 : index
    %c0_137 = arith.constant 0 : index
    %209 = vector.load %arg12[%c0_136, %c0_137] : memref<1x1xf32, #tpu.memory_space<vmem>>, vector<1x1xf32>
    %210 = vector.broadcast %209 : vector<1x1xf32> to vector<2x1xf32>
    %211 = arith.addf %208, %210 : vector<2x1xf32>
    %c0_138 = arith.constant 0 : index
    %c0_139 = arith.constant 0 : index
    %212 = vector.load %arg13[%c0_138, %c0_139] : memref<2x1xf32, #tpu.memory_space<vmem>>, vector<2x1xf32>
    tpu.vector_store %arg13[%c0_138, %c0_139], %211 {strides = array<i32>} : memref<2x1xf32, #tpu.memory_space<vmem>>, vector<2x1xf32>,
    return
  }
}

</mosaic_0001>

<llo_original>
// kernel: fcglvnn_forward.1
$region0: #{fcglvnn_forward.1}
  #allocation0 [shape = 'u32[]', space=smem, size = 0x4, offset = 0x4, fixed_abs, tag = 'smem constant byte address 0x4 - core index']
  #allocation1 [shape = 'u32[144,128]{1,0:T(1,128)}', space=vmem, size = 0x12000, scoped, tag = 'internal scratch']
  #allocation2 [shape = 'f32[2,4096]{1,0:T(2,128)}', space=vmem, size = 0x8000, scoped, tag = 'scratch operand']
  #allocation3 [shape = 'f32[1,1]{1,0:T(1,128)S(1)}', space=vmem, size = 0x200, scoped, tag = 'scoped memory for fcglvnn_forward.1']
  %s0 = inlined_call_operand.vmem [shape: f32[1,256], index: 0, kind: input, shape index: {}]
  %s1 = inlined_call_operand.vmem [shape: f32[1,256], index: 1, kind: input, shape index: {}]
  %s2 = inlined_call_operand.vmem [shape: f32[1,256], index: 2, kind: input, shape index: {}]
  %s3 = inlined_call_operand.vmem [shape: f32[8,3], index: 3, kind: input, shape index: {}]
  %s4 = inlined_call_operand.vmem [shape: f32[8,1], index: 4, kind: input, shape index: {}]
  %s5 = inlined_call_operand.vmem [shape: f32[16,24], index: 5, kind: input, shape index: {}]
  %s6 = inlined_call_operand.vmem [shape: f32[16,1], index: 6, kind: input, shape index: {}]
  %s7 = inlined_call_operand.vmem [shape: f32[32,48], index: 7, kind: input, shape index: {}]
  %s8 = inlined_call_operand.vmem [shape: f32[32,1], index: 8, kind: input, shape index: {}]
  %s9 = inlined_call_operand.vmem [shape: bf16[4096,64], index: 9, kind: input, shape index: {}]
  %s10 = inlined_call_operand.vmem [shape: f32[1,64], index: 10, kind: input, shape index: {}]
  %s11 = inlined_call_operand.vmem [shape: f32[1,64], index: 11, kind: input, shape index: {}]
  %s12 = inlined_call_operand.<no memory space> [shape: f32[1,1], index: 12, kind: input, shape index: {}]
  %s13 = inlined_call_operand.vmem [shape: f32[2,1], index: 13, kind: output, shape index: {}]
  %s14 = sld [smem:[#allocation0]]
  $region62: #{fcglvnn_forward.1} parent=0
    _
  %s16 = ssub.s32 1, %s14
  %s17 = scalar_select 0, %s16, %s14
  %v18 = vstv %s12
  %19 = vst [vmem:[#allocation3] sm:$0x1] %v18
  // Predicated region
  $region2: #{fcglvnn_forward.1} parent=0 // pred_check
    _
  $region3: #{fcglvnn_forward.1} parent=0 // pred_check_branch
    %21 = sbr.rel (0) target = $region5
  $region4: #{fcglvnn_forward.1} parent=0 // pred_region
    _
  $region5: #{fcglvnn_forward.1} parent=0 // pred_fallthru
    _
  // Predicated region
  $region6: #{fcglvnn_forward.1} parent=0 // pred_check
    _
  $region7: #{fcglvnn_forward.1} parent=0 // pred_check_branch
    %23 = sbr.rel (0) target = $region9
  $region8: #{fcglvnn_forward.1} parent=0 // pred_region
    _
  $region9: #{fcglvnn_forward.1} parent=0 // pred_fallthru
    _
  // Predicated region
  $region10: #{fcglvnn_forward.1} parent=0 // pred_check
    _
  $region11: #{fcglvnn_forward.1} parent=0 // pred_check_branch
    %25 = sbr.rel (0) target = $region13
  $region12: #{fcglvnn_forward.1} parent=0 // pred_region
    _
  $region13: #{fcglvnn_forward.1} parent=0 // pred_fallthru
    _
  // Predicated region
  $region14: #{fcglvnn_forward.1} parent=0 // pred_check
    _
  $region15: #{fcglvnn_forward.1} parent=0 // pred_check_branch
    %27 = sbr.rel (0) target = $region17
  $region16: #{fcglvnn_forward.1} parent=0 // pred_region
    _
  $region17: #{fcglvnn_forward.1} parent=0 // pred_fallthru
    _
  // Predicated region
  $region18: #{fcglvnn_forward.1} parent=0 // pred_check
    _
  $region19: #{fcglvnn_forward.1} parent=0 // pred_check_branch
    %29 = sbr.rel (0) target = $region21
  $region20: #{fcglvnn_forward.1} parent=0 // pred_region
    _
  $region21: #{fcglvnn_forward.1} parent=0 // pred_fallthru
    _
  // Predicated region
  $region22: #{fcglvnn_forward.1} parent=0 // pred_check
    _
  $region23: #{fcglvnn_forward.1} parent=0 // pred_check_branch
    %31 = sbr.rel (0) target = $region25
  $region24: #{fcglvnn_forward.1} parent=0 // pred_region
    _
  $region25: #{fcglvnn_forward.1} parent=0 // pred_fallthru
    _
  // Predicated region
  $region26: #{fcglvnn_forward.1} parent=0 // pred_check
    _
  $region27: #{fcglvnn_forward.1} parent=0 // pred_check_branch
    %33 = sbr.rel (0) target = $region29
  $region28: #{fcglvnn_forward.1} parent=0 // pred_region
    _
  $region29: #{fcglvnn_forward.1} parent=0 // pred_fallthru
    _
  // Predicated region
  $region30: #{fcglvnn_forward.1} parent=0 // pred_check
    _
  $region31: #{fcglvnn_forward.1} parent=0 // pred_check_branch
    %35 = sbr.rel (0) target = $region33
  $region32: #{fcglvnn_forward.1} parent=0 // pred_region
    _
  $region33: #{fcglvnn_forward.1} parent=0 // pred_fallthru
    _
  // Predicated region
  $region34: #{fcglvnn_forward.1} parent=0 // pred_check
    _
  $region35: #{fcglvnn_forward.1} parent=0 // pred_check_branch
    %37 = sbr.rel (0) target = $region37
  $region36: #{fcglvnn_forward.1} parent=0 // pred_region
    _
  $region37: #{fcglvnn_forward.1} parent=0 // pred_fallthru
    _
  // Predicated region
  $region38: #{fcglvnn_forward.1} parent=0 // pred_check
    _
  $region39: #{fcglvnn_forward.1} parent=0 // pred_check_branch
    %39 = sbr.rel (0) target = $region41
  $region40: #{fcglvnn_forward.1} parent=0 // pred_region
    _
  $region41: #{fcglvnn_forward.1} parent=0 // pred_fallthru
    _
  // Predicated region
  $region42: #{fcglvnn_forward.1} parent=0 // pred_check
    _
  $region43: #{fcglvnn_forward.1} parent=0 // pred_check_branch
    %41 = sbr.rel (0) target = $region45
  $region44: #{fcglvnn_forward.1} parent=0 // pred_region
    _
  $region45: #{fcglvnn_forward.1} parent=0 // pred_fallthru
    _
  // Predicated region
  $region46: #{fcglvnn_forward.1} parent=0 // pred_check
    _
  $region47: #{fcglvnn_forward.1} parent=0 // pred_check_branch
    %43 = sbr.rel (0) target = $region49
  $region48: #{fcglvnn_forward.1} parent=0 // pred_region
    _
  $region49: #{fcglvnn_forward.1} parent=0 // pred_fallthru
    _
  // Predicated region
  $region50: #{fcglvnn_forward.1} parent=0 // pred_check
    _
  $region51: #{fcglvnn_forward.1} parent=0 // pred_check_branch
    %45 = sbr.rel (0) target = $region53
  $region52: #{fcglvnn_forward.1} parent=0 // pred_region
    _
  $region53: #{fcglvnn_forward.1} parent=0 // pred_fallthru
    _
  %v47 = vld [vmem:[%s1] sm:$0x3]
  %v48 = vld [vmem:[%s2] sm:$0x3]
  %v49 = vld [vmem:[%s0] sm:$0x3]
  %v51 = vlaneseq
  %v52 = vshrl.u32 %v51, 7
  %v53 = vsub.s32 0, %v52
  %v54 = vrot.slane %v49, %v53
  %v55 = vlaneseq
  %v56 = vshrl.u32 %v55, 7
  %v57 = vsub.s32 1, %v56
  %v58 = vrot.slane %v49, %v57
  %61 = vrot.lane.b32.xlu0 %v54, 1
  %v62 = vpop.permute.xlu0 %61
  %63 = vrot.lane.b32.xlu0 %v58, 1
  %v64 = vpop.permute.xlu0 %63
  %v65 = vlaneseq
  %v66 = vand.u32 %v65, 127
  %vm67 = vcmp.lt.s32.totalorder %v66, 1
  %v68 = vsel %vm67, %v62, %v64
  %v69 = vsel %vm67, %v64, %v62
  %v71 = vlaneseq
  %v72 = vshrl.u32 %v71, 7
  %v73 = vsub.s32 0, %v72
  %v74 = vrot.slane %v47, %v73
  %v75 = vlaneseq
  %v76 = vshrl.u32 %v75, 7
  %v77 = vsub.s32 1, %v76
  %v78 = vrot.slane %v47, %v77
  %v81 = vmul.f32 %v69, %v74
  %v82 = vmul.f32 %v68, %v78
  %83 = vrot.lane.b32.xlu0 %v54, 127
  %v84 = vpop.permute.xlu0 %83
  %85 = vrot.lane.b32.xlu0 %v58, 127
  %v86 = vpop.permute.xlu0 %85
  %vm87 = vcmp.lt.s32.totalorder %v66, 127
  %v88 = vsel %vm87, %v84, %v86
  %v89 = vsel %vm87, %v86, %v84
  %v91 = vlaneseq
  %v92 = vshrl.u32 %v91, 7
  %v93 = vsub.s32 0, %v92
  %v94 = vrot.slane %v48, %v93
  %v95 = vlaneseq
  %v96 = vshrl.u32 %v95, 7
  %v97 = vsub.s32 1, %v96
  %v98 = vrot.slane %v48, %v97
  %v101 = vmul.f32 %v88, %v94
  %v102 = vmul.f32 %v89, %v98
  %v103 = vld [vmem:[%s3] sm:$0xff]
  %105 = vset.pattern.permute.xlu0 0
  %106 = vperm.xlu0 %105, %v103
  %v107 = vpop.permute.xlu0 %106
  %v109 = vlaneseq
  %v110 = vshrl.u32 %v109, 7
  %v111 = vsub.s32 0, %v110
  %v112 = vrot.slane %v81, %v111
  %v113 = vlaneseq
  %v114 = vshrl.u32 %v113, 7
  %v115 = vsub.s32 0, %v114
  %v116 = vrot.slane %v82, %v115
  %v117 = vmul.f32 %v107, %v112
  %v118 = vmul.f32 %v107, %v116
  %119 = vset.pattern.permute.xlu0 1
  %120 = vperm.xlu0 %119, %v103
  %v121 = vpop.permute.xlu0 %120
  %v123 = vmul.f32 %v121, %v54
  %v124 = vmul.f32 %v121, %v58
  %v125 = vadd.f32 %v117, %v123
  %v126 = vadd.f32 %v118, %v124
  %127 = vset.pattern.permute.xlu0 2
  %128 = vperm.xlu0 %127, %v103
  %v129 = vpop.permute.xlu0 %128
  %v131 = vlaneseq
  %v132 = vshrl.u32 %v131, 7
  %v133 = vsub.s32 0, %v132
  %v134 = vrot.slane %v101, %v133
  %v135 = vlaneseq
  %v136 = vshrl.u32 %v135, 7
  %v137 = vsub.s32 0, %v136
  %v138 = vrot.slane %v102, %v137
  %v139 = vmul.f32 %v129, %v134
  %v140 = vmul.f32 %v129, %v138
  %v141 = vadd.f32 %v125, %v139
  %v142 = vadd.f32 %v126, %v140
  %v143 = vld [vmem:[%s4] sm:$0xff]
  %145 = vset.pattern.permute.xlu0 0
  %146 = vperm.xlu0 %145, %v143
  %v147 = vpop.permute.xlu0 %146
  %v149 = vadd.f32 %v141, %v147
  %v150 = vadd.f32 %v142, %v147
  %vm151 = vcmp.gt.f32.partialorder %v149, 0.0
  %vm152 = vcmp.gt.f32.partialorder %v150, 0.0
  %v153 = vmul.f32 %v149, 0.01
  %v154 = vmul.f32 %v150, 0.01
  %v155 = vsel %vm151, %v149, %v153
  %v156 = vsel %vm152, %v150, %v154
  %157 = vrot.lane.b32.xlu0 %v155, 1
  %v158 = vpop.permute.xlu0 %157
  %159 = vrot.lane.b32.xlu0 %v156, 1
  %v160 = vpop.permute.xlu0 %159
  %v161 = vsel %vm67, %v158, %v160
  %v162 = vsel %vm67, %v160, %v158
  %v163 = vmul.f32 %v162, %v74
  %v164 = vmul.f32 %v161, %v78
  %165 = vrot.lane.b32.xlu0 %v155, 127
  %v166 = vpop.permute.xlu0 %165
  %167 = vrot.lane.b32.xlu0 %v156, 127
  %v168 = vpop.permute.xlu0 %167
  %v169 = vsel %vm87, %v166, %v168
  %v170 = vsel %vm87, %v168, %v166
  %v171 = vmul.f32 %v169, %v94
  %v172 = vmul.f32 %v170, %v98
  %v173 = vld [vmem:[%s5] sm:$0xff]
  %v174 = vld [vmem:[%s5 + $0x8] sm:$0xff]
  %v175 = vld [vmem:[%s6] sm:$0xff]
  %v176 = vld [vmem:[%s6 + $0x8] sm:$0xff]
  %178 = vset.pattern.permute.xlu0 0
  %179 = vperm.xlu0 %178, %v175
  %v180 = vpop.permute.xlu0 %179
  %183 = vset.pattern.permute.xlu0 0
  %184 = vperm.xlu0 %183, %v176
  %v185 = vpop.permute.xlu0 %184
  %vm187 = vcmask 195584
  %v189 = vsel %vm187, %v173, 0
  %v192 = vsel %vm187, %v174, 0
  %194 = vmatprep.subr.mxu0 %v164
  %195 = vmatpush1.msra.mxu0 %v163
  %196 = vmatprep.subr.mxu0 %v156
  %197 = vmatpush1.msra.mxu0 %v155
  %198 = vmatprep.subr.mxu0 %v172
  %199 = vmatpush1.msra.mxu0 %v171
  %200 = vmatprep.subr.mxu0 0.0
  %201 = vmatpush1.msra.mxu0 0.0
  %202 = vmatprep.subr.mxu0 0.0
  %203 = vmatpush1.msra.mxu0 0.0
  %204 = vmatprep.subr.mxu0 0.0
  %205 = vmatpush1.msra.mxu0 0.0
  %206 = vmatprep.subr.mxu0 0.0
  %207 = vmatpush1.msra.mxu0 0.0
  %208 = vmatprep.subr.mxu0 0.0
  %209 = vmatpush1.msra.mxu0 0.0
  %210 = vmatprep.subr.mxu0 0.0
  %211 = vmatpush1.msra.mxu0 0.0
  %212 = vmatprep.subr.mxu0 0.0
  %213 = vmatpush1.msra.mxu0 0.0
  %214 = vmatprep.subr.mxu0 0.0
  %215 = vmatpush1.msra.mxu0 0.0
  %216 = vmatprep.subr.mxu0 0.0
  %217 = vmatpush1.msra.mxu0 0.0
  %218 = vmatprep.subr.mxu0 0.0
  %219 = vmatpush1.msra.mxu0 0.0
  %220 = vmatprep.subr.mxu0 0.0
  %221 = vmatpush1.msra.mxu0 0.0
  %222 = vmatprep.subr.mxu0 0.0
  %223 = vmatpush1.msra.mxu0 0.0
  %224 = vmatprep.subr.mxu0 0.0
  %225 = vmatpush1.msra.mxu0 0.0
  %226 = vmatprep.subr.mxu0 0.0
  %227 = vmatpush1.msra.mxu0 0.0
  %228 = vmatprep.subr.mxu0 0.0
  %229 = vmatpush1.msra.mxu0 0.0
  %230 = vmatprep.subr.mxu0 0.0
  %231 = vmatpush1.msra.mxu0 0.0
  %232 = vmatprep.subr.mxu0 0.0
  %233 = vmatpush1.msra.mxu0 0.0
  %234 = vmatprep.subr.mxu0 0.0
  %235 = vmatpush1.msra.mxu0 0.0
  %236 = vmatprep.subr.mxu0 0.0
  %237 = vmatpush1.msra.mxu0 0.0
  %238 = vmatprep.subr.mxu0 0.0
  %239 = vmatpush1.msra.mxu0 0.0
  %240 = vmatprep.subr.mxu0 0.0
  %241 = vmatpush1.msra.mxu0 0.0
  %242 = vmatprep.subr.mxu0 0.0
  %243 = vmatpush1.msra.mxu0 0.0
  %244 = vmatprep.subr.mxu0 0.0
  %245 = vmatpush1.msra.mxu0 0.0
  %246 = vmatprep.subr.mxu0 0.0
  %247 = vmatpush1.msra.mxu0 0.0
  %248 = vmatprep.subr.mxu0 0.0
  %249 = vmatpush1.msra.mxu0 0.0
  %250 = vmatprep.subr.mxu0 0.0
  %251 = vmatpush1.msra.mxu0 0.0
  %252 = vmatprep.subr.mxu0 0.0
  %253 = vmatpush1.msra.mxu0 0.0
  %254 = vmatprep.subr.mxu0 0.0
  %255 = vmatpush1.msra.mxu0 0.0
  %256 = vmatprep.subr.mxu0 0.0
  %257 = vmatpush1.msra.mxu0 0.0
  %258 = vmatprep.mubr.f32.mxu0 0.0
  %259 = vmatmul.mubr.f32.gmra.mrb[0].mxu0 %v189
  %v260 = vpop.f32.mrb[0].mxu0
  %v261 = vadd.f32 %v180, %v260
  %v262 = vpop.f32.mrb[0].mxu0
  %v263 = vadd.f32 %v180, %v262
  %264 = vmatprep.mubr.f32.mxu0 0.0
  %265 = vmatmul.mubr.f32.gmra.mrb[0].mxu0 %v192
  %v266 = vpop.f32.mrb[0].mxu0
  %v267 = vadd.f32 %v185, %v266
  %v268 = vpop.f32.mrb[0].mxu0
  %v269 = vadd.f32 %v185, %v268
  %270 = vdwg.mxu0
  %vm271 = vcmp.gt.f32.partialorder %v261, 0.0
  %vm272 = vcmp.gt.f32.partialorder %v263, 0.0
  %vm273 = vcmp.gt.f32.partialorder %v267, 0.0
  %vm274 = vcmp.gt.f32.partialorder %v269, 0.0
  %v275 = vmul.f32 %v261, 0.01
  %v276 = vmul.f32 %v263, 0.01
  %v277 = vmul.f32 %v267, 0.01
  %v278 = vmul.f32 %v269, 0.01
  %v279 = vsel %vm271, %v261, %v275
  %v280 = vsel %vm272, %v263, %v276
  %v281 = vsel %vm273, %v267, %v277
  %v282 = vsel %vm274, %v269, %v278
  %283 = vrot.lane.b32.xlu0 %v279, 1
  %v284 = vpop.permute.xlu0 %283
  %285 = vrot.lane.b32.xlu0 %v281, 1
  %v286 = vpop.permute.xlu0 %285
  %287 = vrot.lane.b32.xlu0 %v280, 1
  %v288 = vpop.permute.xlu0 %287
  %289 = vrot.lane.b32.xlu0 %v282, 1
  %v290 = vpop.permute.xlu0 %289
  %v291 = vsel %vm67, %v284, %v288
  %v292 = vsel %vm67, %v286, %v290
  %v293 = vsel %vm67, %v288, %v284
  %v294 = vsel %vm67, %v290, %v286
  %v295 = vmul.f32 %v293, %v74
  %v296 = vmul.f32 %v291, %v78
  %v297 = vmul.f32 %v294, %v74
  %v298 = vmul.f32 %v292, %v78
  %299 = vrot.lane.b32.xlu0 %v279, 127
  %v300 = vpop.permute.xlu0 %299
  %301 = vrot.lane.b32.xlu0 %v281, 127
  %v302 = vpop.permute.xlu0 %301
  %303 = vrot.lane.b32.xlu0 %v280, 127
  %v304 = vpop.permute.xlu0 %303
  %305 = vrot.lane.b32.xlu0 %v282, 127
  %v306 = vpop.permute.xlu0 %305
  %v307 = vsel %vm87, %v300, %v304
  %v308 = vsel %vm87, %v302, %v306
  %v309 = vsel %vm87, %v304, %v300
  %v310 = vsel %vm87, %v306, %v302
  %v311 = vmul.f32 %v307, %v94
  %v312 = vmul.f32 %v309, %v98
  %v313 = vmul.f32 %v308, %v94
  %v314 = vmul.f32 %v310, %v98
  %v315 = vld [vmem:[%s7] sm:$0xff]
  %v316 = vld [vmem:[%s7 + $0x8] sm:$0xff]
  %v317 = vld [vmem:[%s7 + $0x10] sm:$0xff]
  %v318 = vld [vmem:[%s7 + $0x18] sm:$0xff]
  %v319 = vld [vmem:[%s8] sm:$0xff]
  %v320 = vld [vmem:[%s8 + $0x8] sm:$0xff]
  %v321 = vld [vmem:[%s8 + $0x10] sm:$0xff]
  %v322 = vld [vmem:[%s8 + $0x18] sm:$0xff]
  %324 = vset.pattern.permute.xlu0 0
  %325 = vperm.xlu0 %324, %v319
  %v326 = vpop.permute.xlu0 %325
  %329 = vset.pattern.permute.xlu0 0
  %330 = vperm.xlu0 %329, %v320
  %v331 = vpop.permute.xlu0 %330
  %334 = vset.pattern.permute.xlu0 0
  %335 = vperm.xlu0 %334, %v321
  %v336 = vpop.permute.xlu0 %335
  %339 = vset.pattern.permute.xlu0 0
  %340 = vperm.xlu0 %339, %v322
  %v341 = vpop.permute.xlu0 %340
  %vm343 = vcmask 392192
  %v345 = vsel %vm343, %v315, 0
  %v348 = vsel %vm343, %v316, 0
  %v351 = vsel %vm343, %v317, 0
  %v354 = vsel %vm343, %v318, 0
  %356 = vmatprep.subr.mxu0 %v296
  %357 = vmatpush1.msra.mxu0 %v295
  %358 = vmatprep.subr.mxu0 %v298
  %359 = vmatpush1.msra.mxu0 %v297
  %360 = vmatprep.subr.mxu0 %v280
  %361 = vmatpush1.msra.mxu0 %v279
  %362 = vmatprep.subr.mxu0 %v282
  %363 = vmatpush1.msra.mxu0 %v281
  %364 = vmatprep.subr.mxu0 %v312
  %365 = vmatpush1.msra.mxu0 %v311
  %366 = vmatprep.subr.mxu0 %v314
  %367 = vmatpush1.msra.mxu0 %v313
  %368 = vmatprep.subr.mxu0 0.0
  %369 = vmatpush1.msra.mxu0 0.0
  %370 = vmatprep.subr.mxu0 0.0
  %371 = vmatpush1.msra.mxu0 0.0
  %372 = vmatprep.subr.mxu0 0.0
  %373 = vmatpush1.msra.mxu0 0.0
  %374 = vmatprep.subr.mxu0 0.0
  %375 = vmatpush1.msra.mxu0 0.0
  %376 = vmatprep.subr.mxu0 0.0
  %377 = vmatpush1.msra.mxu0 0.0
  %378 = vmatprep.subr.mxu0 0.0
  %379 = vmatpush1.msra.mxu0 0.0
  %380 = vmatprep.subr.mxu0 0.0
  %381 = vmatpush1.msra.mxu0 0.0
  %382 = vmatprep.subr.mxu0 0.0
  %383 = vmatpush1.msra.mxu0 0.0
  %384 = vmatprep.subr.mxu0 0.0
  %385 = vmatpush1.msra.mxu0 0.0
  %386 = vmatprep.subr.mxu0 0.0
  %387 = vmatpush1.msra.mxu0 0.0
  %388 = vmatprep.subr.mxu0 0.0
  %389 = vmatpush1.msra.mxu0 0.0
  %390 = vmatprep.subr.mxu0 0.0
  %391 = vmatpush1.msra.mxu0 0.0
  %392 = vmatprep.subr.mxu0 0.0
  %393 = vmatpush1.msra.mxu0 0.0
  %394 = vmatprep.subr.mxu0 0.0
  %395 = vmatpush1.msra.mxu0 0.0
  %396 = vmatprep.subr.mxu0 0.0
  %397 = vmatpush1.msra.mxu0 0.0
  %398 = vmatprep.subr.mxu0 0.0
  %399 = vmatpush1.msra.mxu0 0.0
  %400 = vmatprep.subr.mxu0 0.0
  %401 = vmatpush1.msra.mxu0 0.0
  %402 = vmatprep.subr.mxu0 0.0
  %403 = vmatpush1.msra.mxu0 0.0
  %404 = vmatprep.subr.mxu0 0.0
  %405 = vmatpush1.msra.mxu0 0.0
  %406 = vmatprep.subr.mxu0 0.0
  %407 = vmatpush1.msra.mxu0 0.0
  %408 = vmatprep.subr.mxu0 0.0
  %409 = vmatpush1.msra.mxu0 0.0
  %410 = vmatprep.subr.mxu0 0.0
  %411 = vmatpush1.msra.mxu0 0.0
  %412 = vmatprep.subr.mxu0 0.0
  %413 = vmatpush1.msra.mxu0 0.0
  %414 = vmatprep.subr.mxu0 0.0
  %415 = vmatpush1.msra.mxu0 0.0
  %416 = vmatprep.subr.mxu0 0.0
  %417 = vmatpush1.msra.mxu0 0.0
  %418 = vmatprep.subr.mxu0 0.0
  %419 = vmatpush1.msra.mxu0 0.0
  %420 = vmatprep.mubr.f32.mxu0 0.0
  %421 = vmatmul.mubr.f32.gmra.mrb[0].mxu0 %v345
  %v422 = vpop.f32.mrb[0].mxu0
  %v423 = vadd.f32 %v326, %v422
  %v424 = vpop.f32.mrb[0].mxu0
  %v425 = vadd.f32 %v326, %v424
  %426 = vmatprep.mubr.f32.mxu0 0.0
  %427 = vmatmul.mubr.f32.gmra.mrb[0].mxu0 %v348
  %v428 = vpop.f32.mrb[0].mxu0
  %v429 = vadd.f32 %v331, %v428
  %v430 = vpop.f32.mrb[0].mxu0
  %v431 = vadd.f32 %v331, %v430
  %432 = vmatprep.mubr.f32.mxu0 0.0
  %433 = vmatmul.mubr.f32.gmra.mrb[0].mxu0 %v351
  %v434 = vpop.f32.mrb[0].mxu0
  %v435 = vadd.f32 %v336, %v434
  %v436 = vpop.f32.mrb[0].mxu0
  %v437 = vadd.f32 %v336, %v436
  %438 = vmatprep.mubr.f32.mxu0 0.0
  %439 = vmatmul.mubr.f32.gmra.mrb[0].mxu0 %v354
  %v440 = vpop.f32.mrb[0].mxu0
  %v441 = vadd.f32 %v341, %v440
  %v442 = vpop.f32.mrb[0].mxu0
  %v443 = vadd.f32 %v341, %v442
  %444 = vdwg.mxu0
  %vm445 = vcmp.gt.f32.partialorder %v423, 0.0
  %vm446 = vcmp.gt.f32.partialorder %v425, 0.0
  %vm447 = vcmp.gt.f32.partialorder %v429, 0.0
  %vm448 = vcmp.gt.f32.partialorder %v431, 0.0
  %vm449 = vcmp.gt.f32.partialorder %v435, 0.0
  %vm450 = vcmp.gt.f32.partialorder %v437, 0.0
  %vm451 = vcmp.gt.f32.partialorder %v441, 0.0
  %vm452 = vcmp.gt.f32.partialorder %v443, 0.0
  %v453 = vmul.f32 %v423, 0.01
  %v454 = vmul.f32 %v425, 0.01
  %v455 = vmul.f32 %v429, 0.01
  %v456 = vmul.f32 %v431, 0.01
  %v457 = vmul.f32 %v435, 0.01
  %v458 = vmul.f32 %v437, 0.01
  %v459 = vmul.f32 %v441, 0.01
  %v460 = vmul.f32 %v443, 0.01
  %v461 = vsel %vm445, %v423, %v453
  %v462 = vsel %vm446, %v425, %v454
  %v463 = vsel %vm447, %v429, %v455
  %v464 = vsel %vm448, %v431, %v456
  %v465 = vsel %vm449, %v435, %v457
  %v466 = vsel %vm450, %v437, %v458
  %v467 = vsel %vm451, %v441, %v459
  %v468 = vsel %vm452, %v443, %v460
  %469 = vst [vmem:[#allocation2] sm:$0x1] %v461
  %v472 = vunpack.c.l.s4 1983009808
  %v473 = vunpack.c.0.s8 %v472
  %v474 = vlaneseq
  %v475 = vshrl.u32 %v474, 7
  %v476 = vsub.s32 %v473, %v475
  %v477 = vrot.slane %v461, %v476
  %v478 = vrot.slane %v477, 7
  %v479 = vrot.slane %v478, 2
  %481 = vst [vmem:[#allocation2 + $0x2] sm:$0x1] %v479
  %v482 = vcombine.high %v477, %v477
  %484 = vst [vmem:[#allocation2 + $0x4] sm:$0x1] %v482
  %v485 = vrot.slane %v482, 7
  %v486 = vrot.slane %v485, 2
  %488 = vst [vmem:[#allocation2 + $0x6] sm:$0x1] %v486
  %v489 = vcombine.high %v461, %v461
  %v491 = vunpack.c.l.s4 1983009808
  %v492 = vunpack.c.0.s8 %v491
  %v493 = vlaneseq
  %v494 = vshrl.u32 %v493, 7
  %v495 = vsub.s32 %v492, %v494
  %v496 = vrot.slane %v489, %v495
  %498 = vst [vmem:[#allocation2 + $0x8] sm:$0x1] %v496
  %v499 = vrot.slane %v496, 7
  %v500 = vrot.slane %v499, 2
  %502 = vst [vmem:[#allocation2 + $0xa] sm:$0x1] %v500
  %v503 = vcombine.high %v496, %v496
  %505 = vst [vmem:[#allocation2 + $0xc] sm:$0x1] %v503
  %v506 = vrot.slane %v503, 7
  %v507 = vrot.slane %v506, 2
  %509 = vst [vmem:[#allocation2 + $0xe] sm:$0x1] %v507
  %510 = vst [vmem:[#allocation2 + $0x10] sm:$0x1] %v463
  %v513 = vunpack.c.l.s4 1983009808
  %v514 = vunpack.c.0.s8 %v513
  %v515 = vlaneseq
  %v516 = vshrl.u32 %v515, 7
  %v517 = vsub.s32 %v514, %v516
  %v518 = vrot.slane %v463, %v517
  %v519 = vrot.slane %v518, 7
  %v520 = vrot.slane %v519, 2
  %522 = vst [vmem:[#allocation2 + $0x12] sm:$0x1] %v520
  %v523 = vcombine.high %v518, %v518
  %525 = vst [vmem:[#allocation2 + $0x14] sm:$0x1] %v523
  %v526 = vrot.slane %v523, 7
  %v527 = vrot.slane %v526, 2
  %529 = vst [vmem:[#allocation2 + $0x16] sm:$0x1] %v527
  %v530 = vcombine.high %v463, %v463
  %v532 = vunpack.c.l.s4 1983009808
  %v533 = vunpack.c.0.s8 %v532
  %v534 = vlaneseq
  %v535 = vshrl.u32 %v534, 7
  %v536 = vsub.s32 %v533, %v535
  %v537 = vrot.slane %v530, %v536
  %539 = vst [vmem:[#allocation2 + $0x18] sm:$0x1] %v537
  %v540 = vrot.slane %v537, 7
  %v541 = vrot.slane %v540, 2
  %543 = vst [vmem:[#allocation2 + $0x1a] sm:$0x1] %v541
  %v544 = vcombine.high %v537, %v537
  %546 = vst [vmem:[#allocation2 + $0x1c] sm:$0x1] %v544
  %v547 = vrot.slane %v544, 7
  %v548 = vrot.slane %v547, 2
  %550 = vst [vmem:[#allocation2 + $0x1e] sm:$0x1] %v548
  %551 = vst [vmem:[#allocation2 + $0x20] sm:$0x1] %v465
  %v554 = vunpack.c.l.s4 1983009808
  %v555 = vunpack.c.0.s8 %v554
  %v556 = vlaneseq
  %v557 = vshrl.u32 %v556, 7
  %v558 = vsub.s32 %v555, %v557
  %v559 = vrot.slane %v465, %v558
  %v560 = vrot.slane %v559, 7
  %v561 = vrot.slane %v560, 2
  %563 = vst [vmem:[#allocation2 + $0x22] sm:$0x1] %v561
  %v564 = vcombine.high %v559, %v559
  %566 = vst [vmem:[#allocation2 + $0x24] sm:$0x1] %v564
  %v567 = vrot.slane %v564, 7
  %v568 = vrot.slane %v567, 2
  %570 = vst [vmem:[#allocation2 + $0x26] sm:$0x1] %v568
  %v571 = vcombine.high %v465, %v465
  %v573 = vunpack.c.l.s4 1983009808
  %v574 = vunpack.c.0.s8 %v573
  %v575 = vlaneseq
  %v576 = vshrl.u32 %v575, 7
  %v577 = vsub.s32 %v574, %v576
  %v578 = vrot.slane %v571, %v577
  %580 = vst [vmem:[#allocation2 + $0x28] sm:$0x1] %v578
  %v581 = vrot.slane %v578, 7
  %v582 = vrot.slane %v581, 2
  %584 = vst [vmem:[#allocation2 + $0x2a] sm:$0x1] %v582
  %v585 = vcombine.high %v578, %v578
  %587 = vst [vmem:[#allocation2 + $0x2c] sm:$0x1] %v585
  %v588 = vrot.slane %v585, 7
  %v589 = vrot.slane %v588, 2
  %591 = vst [vmem:[#allocation2 + $0x2e] sm:$0x1] %v589
  %592 = vst [vmem:[#allocation2 + $0x30] sm:$0x1] %v467
  %v595 = vunpack.c.l.s4 1983009808
  %v596 = vunpack.c.0.s8 %v595
  %v597 = vlaneseq
  %v598 = vshrl.u32 %v597, 7
  %v599 = vsub.s32 %v596, %v598
  %v600 = vrot.slane %v467, %v599
  %v601 = vrot.slane %v600, 7
  %v602 = vrot.slane %v601, 2
  %604 = vst [vmem:[#allocation2 + $0x32] sm:$0x1] %v602
  %v605 = vcombine.high %v600, %v600
  %607 = vst [vmem:[#allocation2 + $0x34] sm:$0x1] %v605
  %v608 = vrot.slane %v605, 7
  %v609 = vrot.slane %v608, 2
  %611 = vst [vmem:[#allocation2 + $0x36] sm:$0x1] %v609
  %v612 = vcombine.high %v467, %v467
  %v614 = vunpack.c.l.s4 1983009808
  %v615 = vunpack.c.0.s8 %v614
  %v616 = vlaneseq
  %v617 = vshrl.u32 %v616, 7
  %v618 = vsub.s32 %v615, %v617
  %v619 = vrot.slane %v612, %v618
  %621 = vst [vmem:[#allocation2 + $0x38] sm:$0x1] %v619
  %v622 = vrot.slane %v619, 7
  %v623 = vrot.slane %v622, 2
  %625 = vst [vmem:[#allocation2 + $0x3a] sm:$0x1] %v623
  %v626 = vcombine.high %v619, %v619
  %628 = vst [vmem:[#allocation2 + $0x3c] sm:$0x1] %v626
  %v629 = vrot.slane %v626, 7
  %v630 = vrot.slane %v629, 2
  %632 = vst [vmem:[#allocation2 + $0x3e] sm:$0x1] %v630
  %633 = vst [vmem:[#allocation2 + $0x1] sm:$0x1] %v462
  %v636 = vunpack.c.l.s4 1983009808
  %v637 = vunpack.c.0.s8 %v636
  %v638 = vlaneseq
  %v639 = vshrl.u32 %v638, 7
  %v640 = vsub.s32 %v637, %v639
  %v641 = vrot.slane %v462, %v640
  %v642 = vrot.slane %v641, 7
  %v643 = vrot.slane %v642, 2
  %645 = vst [vmem:[#allocation2 + $0x3] sm:$0x1] %v643
  %v646 = vcombine.high %v641, %v641
  %648 = vst [vmem:[#allocation2 + $0x5] sm:$0x1] %v646
  %v649 = vrot.slane %v646, 7
  %v650 = vrot.slane %v649, 2
  %652 = vst [vmem:[#allocation2 + $0x7] sm:$0x1] %v650
  %v653 = vcombine.high %v462, %v462
  %v655 = vunpack.c.l.s4 1983009808
  %v656 = vunpack.c.0.s8 %v655
  %v657 = vlaneseq
  %v658 = vshrl.u32 %v657, 7
  %v659 = vsub.s32 %v656, %v658
  %v660 = vrot.slane %v653, %v659
  %662 = vst [vmem:[#allocation2 + $0x9] sm:$0x1] %v660
  %v663 = vrot.slane %v660, 7
  %v664 = vrot.slane %v663, 2
  %666 = vst [vmem:[#allocation2 + $0xb] sm:$0x1] %v664
  %v667 = vcombine.high %v660, %v660
  %669 = vst [vmem:[#allocation2 + $0xd] sm:$0x1] %v667
  %v670 = vrot.slane %v667, 7
  %v671 = vrot.slane %v670, 2
  %673 = vst [vmem:[#allocation2 + $0xf] sm:$0x1] %v671
  %674 = vst [vmem:[#allocation2 + $0x11] sm:$0x1] %v464
  %v677 = vunpack.c.l.s4 1983009808
  %v678 = vunpack.c.0.s8 %v677
  %v679 = vlaneseq
  %v680 = vshrl.u32 %v679, 7
  %v681 = vsub.s32 %v678, %v680
  %v682 = vrot.slane %v464, %v681
  %v683 = vrot.slane %v682, 7
  %v684 = vrot.slane %v683, 2
  %686 = vst [vmem:[#allocation2 + $0x13] sm:$0x1] %v684
  %v687 = vcombine.high %v682, %v682
  %689 = vst [vmem:[#allocation2 + $0x15] sm:$0x1] %v687
  %v690 = vrot.slane %v687, 7
  %v691 = vrot.slane %v690, 2
  %693 = vst [vmem:[#allocation2 + $0x17] sm:$0x1] %v691
  %v694 = vcombine.high %v464, %v464
  %v696 = vunpack.c.l.s4 1983009808
  %v697 = vunpack.c.0.s8 %v696
  %v698 = vlaneseq
  %v699 = vshrl.u32 %v698, 7
  %v700 = vsub.s32 %v697, %v699
  %v701 = vrot.slane %v694, %v700
  %703 = vst [vmem:[#allocation2 + $0x19] sm:$0x1] %v701
  %v704 = vrot.slane %v701, 7
  %v705 = vrot.slane %v704, 2
  %707 = vst [vmem:[#allocation2 + $0x1b] sm:$0x1] %v705
  %v708 = vcombine.high %v701, %v701
  %710 = vst [vmem:[#allocation2 + $0x1d] sm:$0x1] %v708
  %v711 = vrot.slane %v708, 7
  %v712 = vrot.slane %v711, 2
  %714 = vst [vmem:[#allocation2 + $0x1f] sm:$0x1] %v712
  %715 = vst [vmem:[#allocation2 + $0x21] sm:$0x1] %v466
  %v718 = vunpack.c.l.s4 1983009808
  %v719 = vunpack.c.0.s8 %v718
  %v720 = vlaneseq
  %v721 = vshrl.u32 %v720, 7
  %v722 = vsub.s32 %v719, %v721
  %v723 = vrot.slane %v466, %v722
  %v724 = vrot.slane %v723, 7
  %v725 = vrot.slane %v724, 2
  %727 = vst [vmem:[#allocation2 + $0x23] sm:$0x1] %v725
  %v728 = vcombine.high %v723, %v723
  %730 = vst [vmem:[#allocation2 + $0x25] sm:$0x1] %v728
  %v731 = vrot.slane %v728, 7
  %v732 = vrot.slane %v731, 2
  %734 = vst [vmem:[#allocation2 + $0x27] sm:$0x1] %v732
  %v735 = vcombine.high %v466, %v466
  %v737 = vunpack.c.l.s4 1983009808
  %v738 = vunpack.c.0.s8 %v737
  %v739 = vlaneseq
  %v740 = vshrl.u32 %v739, 7
  %v741 = vsub.s32 %v738, %v740
  %v742 = vrot.slane %v735, %v741
  %744 = vst [vmem:[#allocation2 + $0x29] sm:$0x1] %v742
  %v745 = vrot.slane %v742, 7
  %v746 = vrot.slane %v745, 2
  %748 = vst [vmem:[#allocation2 + $0x2b] sm:$0x1] %v746
  %v749 = vcombine.high %v742, %v742
  %751 = vst [vmem:[#allocation2 + $0x2d] sm:$0x1] %v749
  %v752 = vrot.slane %v749, 7
  %v753 = vrot.slane %v752, 2
  %755 = vst [vmem:[#allocation2 + $0x2f] sm:$0x1] %v753
  %756 = vst [vmem:[#allocation2 + $0x31] sm:$0x1] %v468
  %v759 = vunpack.c.l.s4 1983009808
  %v760 = vunpack.c.0.s8 %v759
  %v761 = vlaneseq
  %v762 = vshrl.u32 %v761, 7
  %v763 = vsub.s32 %v760, %v762
  %v764 = vrot.slane %v468, %v763
  %v765 = vrot.slane %v764, 7
  %v766 = vrot.slane %v765, 2
  %768 = vst [vmem:[#allocation2 + $0x33] sm:$0x1] %v766
  %v769 = vcombine.high %v764, %v764
  %771 = vst [vmem:[#allocation2 + $0x35] sm:$0x1] %v769
  %v772 = vrot.slane %v769, 7
  %v773 = vrot.slane %v772, 2
  %775 = vst [vmem:[#allocation2 + $0x37] sm:$0x1] %v773
  %v776 = vcombine.high %v468, %v468
  %v778 = vunpack.c.l.s4 1983009808
  %v779 = vunpack.c.0.s8 %v778
  %v780 = vlaneseq
  %v781 = vshrl.u32 %v780, 7
  %v782 = vsub.s32 %v779, %v781
  %v783 = vrot.slane %v776, %v782
  %785 = vst [vmem:[#allocation2 + $0x39] sm:$0x1] %v783
  %v786 = vrot.slane %v783, 7
  %v787 = vrot.slane %v786, 2
  %789 = vst [vmem:[#allocation2 + $0x3b] sm:$0x1] %v787
  %v790 = vcombine.high %v783, %v783
  %792 = vst [vmem:[#allocation2 + $0x3d] sm:$0x1] %v790
  %v793 = vrot.slane %v790, 7
  %v794 = vrot.slane %v793, 2
  %796 = vst [vmem:[#allocation2 + $0x3f] sm:$0x1] %v794
  %v797 = vld [vmem:[#allocation2] sm:$0xff]
  %v798 = vld [vmem:[#allocation2 + $0x8] sm:$0xff]
  %v799 = vld [vmem:[#allocation2 + $0x10] sm:$0xff]
  %v800 = vld [vmem:[#allocation2 + $0x18] sm:$0xff]
  %v801 = vld [vmem:[#allocation2 + $0x20] sm:$0xff]
  %v802 = vld [vmem:[#allocation2 + $0x28] sm:$0xff]
  %v803 = vld [vmem:[#allocation2 + $0x30] sm:$0xff]
  %v804 = vld [vmem:[#allocation2 + $0x38] sm:$0xff]
  %v813 = vcombine.high %v797, %v797
  %v815 = vunpack.c.l.s4 1983009808
  %v816 = vunpack.c.0.s8 %v815
  %v817 = vlaneseq
  %v818 = vshrl.u32 %v817, 7
  %v819 = vsub.s32 %v816, %v818
  %v820 = vrot.slane %v797, %v819
  %v822 = vunpack.c.l.s4 1983009808
  %v823 = vunpack.c.0.s8 %v822
  %v824 = vlaneseq
  %v825 = vshrl.u32 %v824, 7
  %v826 = vsub.s32 %v823, %v825
  %v827 = vrot.slane %v813, %v826
  %v828 = vcombine.high %v820, %v820
  %v829 = vcombine.high %v827, %v827
  %v830 = vcombine.high %v798, %v798
  %v832 = vunpack.c.l.s4 1983009808
  %v833 = vunpack.c.0.s8 %v832
  %v834 = vlaneseq
  %v835 = vshrl.u32 %v834, 7
  %v836 = vsub.s32 %v833, %v835
  %v837 = vrot.slane %v798, %v836
  %v839 = vunpack.c.l.s4 1983009808
  %v840 = vunpack.c.0.s8 %v839
  %v841 = vlaneseq
  %v842 = vshrl.u32 %v841, 7
  %v843 = vsub.s32 %v840, %v842
  %v844 = vrot.slane %v830, %v843
  %v845 = vcombine.high %v837, %v837
  %v846 = vcombine.high %v844, %v844
  %v847 = vcombine.high %v799, %v799
  %v849 = vunpack.c.l.s4 1983009808
  %v850 = vunpack.c.0.s8 %v849
  %v851 = vlaneseq
  %v852 = vshrl.u32 %v851, 7
  %v853 = vsub.s32 %v850, %v852
  %v854 = vrot.slane %v799, %v853
  %v856 = vunpack.c.l.s4 1983009808
  %v857 = vunpack.c.0.s8 %v856
  %v858 = vlaneseq
  %v859 = vshrl.u32 %v858, 7
  %v860 = vsub.s32 %v857, %v859
  %v861 = vrot.slane %v847, %v860
  %v862 = vcombine.high %v854, %v854
  %v863 = vcombine.high %v861, %v861
  %v864 = vcombine.high %v800, %v800
  %v866 = vunpack.c.l.s4 1983009808
  %v867 = vunpack.c.0.s8 %v866
  %v868 = vlaneseq
  %v869 = vshrl.u32 %v868, 7
  %v870 = vsub.s32 %v867, %v869
  %v871 = vrot.slane %v800, %v870
  %v873 = vunpack.c.l.s4 1983009808
  %v874 = vunpack.c.0.s8 %v873
  %v875 = vlaneseq
  %v876 = vshrl.u32 %v875, 7
  %v877 = vsub.s32 %v874, %v876
  %v878 = vrot.slane %v864, %v877
  %v879 = vcombine.high %v871, %v871
  %v880 = vcombine.high %v878, %v878
  %v881 = vcombine.high %v801, %v801
  %v883 = vunpack.c.l.s4 1983009808
  %v884 = vunpack.c.0.s8 %v883
  %v885 = vlaneseq
  %v886 = vshrl.u32 %v885, 7
  %v887 = vsub.s32 %v884, %v886
  %v888 = vrot.slane %v801, %v887
  %v890 = vunpack.c.l.s4 1983009808
  %v891 = vunpack.c.0.s8 %v890
  %v892 = vlaneseq
  %v893 = vshrl.u32 %v892, 7
  %v894 = vsub.s32 %v891, %v893
  %v895 = vrot.slane %v881, %v894
  %v896 = vcombine.high %v888, %v888
  %v897 = vcombine.high %v895, %v895
  %v898 = vcombine.high %v802, %v802
  %v900 = vunpack.c.l.s4 1983009808
  %v901 = vunpack.c.0.s8 %v900
  %v902 = vlaneseq
  %v903 = vshrl.u32 %v902, 7
  %v904 = vsub.s32 %v901, %v903
  %v905 = vrot.slane %v802, %v904
  %v907 = vunpack.c.l.s4 1983009808
  %v908 = vunpack.c.0.s8 %v907
  %v909 = vlaneseq
  %v910 = vshrl.u32 %v909, 7
  %v911 = vsub.s32 %v908, %v910
  %v912 = vrot.slane %v898, %v911
  %v913 = vcombine.high %v905, %v905
  %v914 = vcombine.high %v912, %v912
  %v915 = vcombine.high %v803, %v803
  %v917 = vunpack.c.l.s4 1983009808
  %v918 = vunpack.c.0.s8 %v917
  %v919 = vlaneseq
  %v920 = vshrl.u32 %v919, 7
  %v921 = vsub.s32 %v918, %v920
  %v922 = vrot.slane %v803, %v921
  %v924 = vunpack.c.l.s4 1983009808
  %v925 = vunpack.c.0.s8 %v924
  %v926 = vlaneseq
  %v927 = vshrl.u32 %v926, 7
  %v928 = vsub.s32 %v925, %v927
  %v929 = vrot.slane %v915, %v928
  %v930 = vcombine.high %v922, %v922
  %v931 = vcombine.high %v929, %v929
  %v932 = vcombine.high %v804, %v804
  %v934 = vunpack.c.l.s4 1983009808
  %v935 = vunpack.c.0.s8 %v934
  %v936 = vlaneseq
  %v937 = vshrl.u32 %v936, 7
  %v938 = vsub.s32 %v935, %v937
  %v939 = vrot.slane %v804, %v938
  %v941 = vunpack.c.l.s4 1983009808
  %v942 = vunpack.c.0.s8 %v941
  %v943 = vlaneseq
  %v944 = vshrl.u32 %v943, 7
  %v945 = vsub.s32 %v942, %v944
  %v946 = vrot.slane %v932, %v945
  %v947 = vcombine.high %v939, %v939
  %v948 = vcombine.high %v946, %v946
  %v981 = vpack.c.bf16 %v820, %v820
  %v982 = vpack.c.bf16 %v828, %v828
  %v983 = vpack.c.bf16 %v827, %v827
  %v984 = vpack.c.bf16 %v829, %v829
  %v985 = vpack.c.bf16 %v837, %v837
  %v986 = vpack.c.bf16 %v845, %v845
  %v987 = vpack.c.bf16 %v844, %v844
  %v988 = vpack.c.bf16 %v846, %v846
  %v989 = vpack.c.bf16 %v854, %v854
  %v990 = vpack.c.bf16 %v862, %v862
  %v991 = vpack.c.bf16 %v861, %v861
  %v992 = vpack.c.bf16 %v863, %v863
  %v993 = vpack.c.bf16 %v871, %v871
  %v994 = vpack.c.bf16 %v879, %v879
  %v995 = vpack.c.bf16 %v878, %v878
  %v996 = vpack.c.bf16 %v880, %v880
  %v997 = vpack.c.bf16 %v888, %v888
  %v998 = vpack.c.bf16 %v896, %v896
  %v999 = vpack.c.bf16 %v895, %v895
  %v1000 = vpack.c.bf16 %v897, %v897
  %v1001 = vpack.c.bf16 %v905, %v905
  %v1002 = vpack.c.bf16 %v913, %v913
  %v1003 = vpack.c.bf16 %v912, %v912
  %v1004 = vpack.c.bf16 %v914, %v914
  %v1005 = vpack.c.bf16 %v922, %v922
  %v1006 = vpack.c.bf16 %v930, %v930
  %v1007 = vpack.c.bf16 %v929, %v929
  %v1008 = vpack.c.bf16 %v931, %v931
  %v1009 = vpack.c.bf16 %v939, %v939
  %v1010 = vpack.c.bf16 %v947, %v947
  %v1011 = vpack.c.bf16 %v946, %v946
  %v1012 = vpack.c.bf16 %v948, %v948
  %v1013 = vld [vmem:[%s9] sm:$0xf]
  %v1014 = vld [vmem:[%s9 + $0x4] sm:$0xf]
  %v1015 = vld [vmem:[%s9 + $0x8] sm:$0xf]
  %v1016 = vld [vmem:[%s9 + $0xc] sm:$0xf]
  %v1017 = vld [vmem:[%s9 + $0x10] sm:$0xf]
  %v1018 = vld [vmem:[%s9 + $0x14] sm:$0xf]
  %v1019 = vld [vmem:[%s9 + $0x18] sm:$0xf]
  %v1020 = vld [vmem:[%s9 + $0x1c] sm:$0xf]
  %v1021 = vld [vmem:[%s9 + $0x20] sm:$0xf]
  %v1022 = vld [vmem:[%s9 + $0x24] sm:$0xf]
  %v1023 = vld [vmem:[%s9 + $0x28] sm:$0xf]
  %v1024 = vld [vmem:[%s9 + $0x2c] sm:$0xf]
  %v1025 = vld [vmem:[%s9 + $0x30] sm:$0xf]
  %v1026 = vld [vmem:[%s9 + $0x34] sm:$0xf]
  %v1027 = vld [vmem:[%s9 + $0x38] sm:$0xf]
  %v1028 = vld [vmem:[%s9 + $0x3c] sm:$0xf]
  %v1029 = vld [vmem:[%s9 + $0x40] sm:$0xf]
  %v1030 = vld [vmem:[%s9 + $0x44] sm:$0xf]
  %v1031 = vld [vmem:[%s9 + $0x48] sm:$0xf]
  %v1032 = vld [vmem:[%s9 + $0x4c] sm:$0xf]
  %v1033 = vld [vmem:[%s9 + $0x50] sm:$0xf]
  %v1034 = vld [vmem:[%s9 + $0x54] sm:$0xf]
  %v1035 = vld [vmem:[%s9 + $0x58] sm:$0xf]
  %v1036 = vld [vmem:[%s9 + $0x5c] sm:$0xf]
  %v1037 = vld [vmem:[%s9 + $0x60] sm:$0xf]
  %v1038 = vld [vmem:[%s9 + $0x64] sm:$0xf]
  %v1039 = vld [vmem:[%s9 + $0x68] sm:$0xf]
  %v1040 = vld [vmem:[%s9 + $0x6c] sm:$0xf]
  %v1041 = vld [vmem:[%s9 + $0x70] sm:$0xf]
  %v1042 = vld [vmem:[%s9 + $0x74] sm:$0xf]
  %v1043 = vld [vmem:[%s9 + $0x78] sm:$0xf]
  %v1044 = vld [vmem:[%s9 + $0x7c] sm:$0xf]
  %v1045 = vld [vmem:[%s9 + $0x80] sm:$0xf]
  %v1046 = vld [vmem:[%s9 + $0x84] sm:$0xf]
  %v1047 = vld [vmem:[%s9 + $0x88] sm:$0xf]
  %v1048 = vld [vmem:[%s9 + $0x8c] sm:$0xf]
  %v1049 = vld [vmem:[%s9 + $0x90] sm:$0xf]
  %v1050 = vld [vmem:[%s9 + $0x94] sm:$0xf]
  %v1051 = vld [vmem:[%s9 + $0x98] sm:$0xf]
  %v1052 = vld [vmem:[%s9 + $0x9c] sm:$0xf]
  %v1053 = vld [vmem:[%s9 + $0xa0] sm:$0xf]
  %v1054 = vld [vmem:[%s9 + $0xa4] sm:$0xf]
  %v1055 = vld [vmem:[%s9 + $0xa8] sm:$0xf]
  %v1056 = vld [vmem:[%s9 + $0xac] sm:$0xf]
  %v1057 = vld [vmem:[%s9 + $0xb0] sm:$0xf]
  %v1058 = vld [vmem:[%s9 + $0xb4] sm:$0xf]
  %v1059 = vld [vmem:[%s9 + $0xb8] sm:$0xf]
  %v1060 = vld [vmem:[%s9 + $0xbc] sm:$0xf]
  %v1061 = vld [vmem:[%s9 + $0xc0] sm:$0xf]
  %v1062 = vld [vmem:[%s9 + $0xc4] sm:$0xf]
  %v1063 = vld [vmem:[%s9 + $0xc8] sm:$0xf]
  %v1064 = vld [vmem:[%s9 + $0xcc] sm:$0xf]
  %v1065 = vld [vmem:[%s9 + $0xd0] sm:$0xf]
  %v1066 = vld [vmem:[%s9 + $0xd4] sm:$0xf]
  %v1067 = vld [vmem:[%s9 + $0xd8] sm:$0xf]
  %v1068 = vld [vmem:[%s9 + $0xdc] sm:$0xf]
  %v1069 = vld [vmem:[%s9 + $0xe0] sm:$0xf]
  %v1070 = vld [vmem:[%s9 + $0xe4] sm:$0xf]
  %v1071 = vld [vmem:[%s9 + $0xe8] sm:$0xf]
  %v1072 = vld [vmem:[%s9 + $0xec] sm:$0xf]
  %v1073 = vld [vmem:[%s9 + $0xf0] sm:$0xf]
  %v1074 = vld [vmem:[%s9 + $0xf4] sm:$0xf]
  %v1075 = vld [vmem:[%s9 + $0xf8] sm:$0xf]
  %v1076 = vld [vmem:[%s9 + $0xfc] sm:$0xf]
  %v1077 = vld [vmem:[%s9 + $0x100] sm:$0xf]
  %v1078 = vld [vmem:[%s9 + $0x104] sm:$0xf]
  %v1079 = vld [vmem:[%s9 + $0x108] sm:$0xf]
  %v1080 = vld [vmem:[%s9 + $0x10c] sm:$0xf]
  %v1081 = vld [vmem:[%s9 + $0x110] sm:$0xf]
  %v1082 = vld [vmem:[%s9 + $0x114] sm:$0xf]
  %v1083 = vld [vmem:[%s9 + $0x118] sm:$0xf]
  %v1084 = vld [vmem:[%s9 + $0x11c] sm:$0xf]
  %v1085 = vld [vmem:[%s9 + $0x120] sm:$0xf]
  %v1086 = vld [vmem:[%s9 + $0x124] sm:$0xf]
  %v1087 = vld [vmem:[%s9 + $0x128] sm:$0xf]
  %v1088 = vld [vmem:[%s9 + $0x12c] sm:$0xf]
  %v1089 = vld [vmem:[%s9 + $0x130] sm:$0xf]
  %v1090 = vld [vmem:[%s9 + $0x134] sm:$0xf]
  %v1091 = vld [vmem:[%s9 + $0x138] sm:$0xf]
  %v1092 = vld [vmem:[%s9 + $0x13c] sm:$0xf]
  %v1093 = vld [vmem:[%s9 + $0x140] sm:$0xf]
  %v1094 = vld [vmem:[%s9 + $0x144] sm:$0xf]
  %v1095 = vld [vmem:[%s9 + $0x148] sm:$0xf]
  %v1096 = vld [vmem:[%s9 + $0x14c] sm:$0xf]
  %v1097 = vld [vmem:[%s9 + $0x150] sm:$0xf]
  %v1098 = vld [vmem:[%s9 + $0x154] sm:$0xf]
  %v1099 = vld [vmem:[%s9 + $0x158] sm:$0xf]
  %v1100 = vld [vmem:[%s9 + $0x15c] sm:$0xf]
  %v1101 = vld [vmem:[%s9 + $0x160] sm:$0xf]
  %v1102 = vld [vmem:[%s9 + $0x164] sm:$0xf]
  %v1103 = vld [vmem:[%s9 + $0x168] sm:$0xf]
  %v1104 = vld [vmem:[%s9 + $0x16c] sm:$0xf]
  %v1105 = vld [vmem:[%s9 + $0x170] sm:$0xf]
  %v1106 = vld [vmem:[%s9 + $0x174] sm:$0xf]
  %v1107 = vld [vmem:[%s9 + $0x178] sm:$0xf]
  %v1108 = vld [vmem:[%s9 + $0x17c] sm:$0xf]
  %v1109 = vld [vmem:[%s9 + $0x180] sm:$0xf]
  %v1110 = vld [vmem:[%s9 + $0x184] sm:$0xf]
  %v1111 = vld [vmem:[%s9 + $0x188] sm:$0xf]
  %v1112 = vld [vmem:[%s9 + $0x18c] sm:$0xf]
  %v1113 = vld [vmem:[%s9 + $0x190] sm:$0xf]
  %v1114 = vld [vmem:[%s9 + $0x194] sm:$0xf]
  %v1115 = vld [vmem:[%s9 + $0x198] sm:$0xf]
  %v1116 = vld [vmem:[%s9 + $0x19c] sm:$0xf]
  %v1117 = vld [vmem:[%s9 + $0x1a0] sm:$0xf]
  %v1118 = vld [vmem:[%s9 + $0x1a4] sm:$0xf]
  %v1119 = vld [vmem:[%s9 + $0x1a8] sm:$0xf]
  %v1120 = vld [vmem:[%s9 + $0x1ac] sm:$0xf]
  %v1121 = vld [vmem:[%s9 + $0x1b0] sm:$0xf]
  %v1122 = vld [vmem:[%s9 + $0x1b4] sm:$0xf]
  %v1123 = vld [vmem:[%s9 + $0x1b8] sm:$0xf]
  %v1124 = vld [vmem:[%s9 + $0x1bc] sm:$0xf]
  %v1125 = vld [vmem:[%s9 + $0x1c0] sm:$0xf]
  %v1126 = vld [vmem:[%s9 + $0x1c4] sm:$0xf]
  %v1127 = vld [vmem:[%s9 + $0x1c8] sm:$0xf]
  %v1128 = vld [vmem:[%s9 + $0x1cc] sm:$0xf]
  %v1129 = vld [vmem:[%s9 + $0x1d0] sm:$0xf]
  %v1130 = vld [vmem:[%s9 + $0x1d4] sm:$0xf]
  %v1131 = vld [vmem:[%s9 + $0x1d8] sm:$0xf]
  %v1132 = vld [vmem:[%s9 + $0x1dc] sm:$0xf]
  %v1133 = vld [vmem:[%s9 + $0x1e0] sm:$0xf]
  %v1134 = vld [vmem:[%s9 + $0x1e4] sm:$0xf]
  %v1135 = vld [vmem:[%s9 + $0x1e8] sm:$0xf]
  %v1136 = vld [vmem:[%s9 + $0x1ec] sm:$0xf]
  %v1137 = vld [vmem:[%s9 + $0x1f0] sm:$0xf]
  %v1138 = vld [vmem:[%s9 + $0x1f4] sm:$0xf]
  %v1139 = vld [vmem:[%s9 + $0x1f8] sm:$0xf]
  %v1140 = vld [vmem:[%s9 + $0x1fc] sm:$0xf]
  %v1141 = vld [vmem:[%s9 + $0x200] sm:$0xf]
  %v1142 = vld [vmem:[%s9 + $0x204] sm:$0xf]
  %v1143 = vld [vmem:[%s9 + $0x208] sm:$0xf]
  %v1144 = vld [vmem:[%s9 + $0x20c] sm:$0xf]
  %v1145 = vld [vmem:[%s9 + $0x210] sm:$0xf]
  %v1146 = vld [vmem:[%s9 + $0x214] sm:$0xf]
  %v1147 = vld [vmem:[%s9 + $0x218] sm:$0xf]
  %v1148 = vld [vmem:[%s9 + $0x21c] sm:$0xf]
  %v1149 = vld [vmem:[%s9 + $0x220] sm:$0xf]
  %v1150 = vld [vmem:[%s9 + $0x224] sm:$0xf]
  %v1151 = vld [vmem:[%s9 + $0x228] sm:$0xf]
  %v1152 = vld [vmem:[%s9 + $0x22c] sm:$0xf]
  %v1153 = vld [vmem:[%s9 + $0x230] sm:$0xf]
  %v1154 = vld [vmem:[%s9 + $0x234] sm:$0xf]
  %v1155 = vld [vmem:[%s9 + $0x238] sm:$0xf]
  %v1156 = vld [vmem:[%s9 + $0x23c] sm:$0xf]
  %v1157 = vld [vmem:[%s9 + $0x240] sm:$0xf]
  %v1158 = vld [vmem:[%s9 + $0x244] sm:$0xf]
  %v1159 = vld [vmem:[%s9 + $0x248] sm:$0xf]
  %v1160 = vld [vmem:[%s9 + $0x24c] sm:$0xf]
  %v1161 = vld [vmem:[%s9 + $0x250] sm:$0xf]
  %v1162 = vld [vmem:[%s9 + $0x254] sm:$0xf]
  %v1163 = vld [vmem:[%s9 + $0x258] sm:$0xf]
  %v1164 = vld [vmem:[%s9 + $0x25c] sm:$0xf]
  %v1165 = vld [vmem:[%s9 + $0x260] sm:$0xf]
  %v1166 = vld [vmem:[%s9 + $0x264] sm:$0xf]
  %v1167 = vld [vmem:[%s9 + $0x268] sm:$0xf]
  %v1168 = vld [vmem:[%s9 + $0x26c] sm:$0xf]
  %v1169 = vld [vmem:[%s9 + $0x270] sm:$0xf]
  %v1170 = vld [vmem:[%s9 + $0x274] sm:$0xf]
  %v1171 = vld [vmem:[%s9 + $0x278] sm:$0xf]
  %v1172 = vld [vmem:[%s9 + $0x27c] sm:$0xf]
  %v1173 = vld [vmem:[%s9 + $0x280] sm:$0xf]
  %v1174 = vld [vmem:[%s9 + $0x284] sm:$0xf]
  %v1175 = vld [vmem:[%s9 + $0x288] sm:$0xf]
  %v1176 = vld [vmem:[%s9 + $0x28c] sm:$0xf]
  %v1177 = vld [vmem:[%s9 + $0x290] sm:$0xf]
  %v1178 = vld [vmem:[%s9 + $0x294] sm:$0xf]
  %v1179 = vld [vmem:[%s9 + $0x298] sm:$0xf]
  %v1180 = vld [vmem:[%s9 + $0x29c] sm:$0xf]
  %v1181 = vld [vmem:[%s9 + $0x2a0] sm:$0xf]
  %v1182 = vld [vmem:[%s9 + $0x2a4] sm:$0xf]
  %v1183 = vld [vmem:[%s9 + $0x2a8] sm:$0xf]
  %v1184 = vld [vmem:[%s9 + $0x2ac] sm:$0xf]
  %v1185 = vld [vmem:[%s9 + $0x2b0] sm:$0xf]
  %v1186 = vld [vmem:[%s9 + $0x2b4] sm:$0xf]
  %v1187 = vld [vmem:[%s9 + $0x2b8] sm:$0xf]
  %v1188 = vld [vmem:[%s9 + $0x2bc] sm:$0xf]
  %v1189 = vld [vmem:[%s9 + $0x2c0] sm:$0xf]
  %v1190 = vld [vmem:[%s9 + $0x2c4] sm:$0xf]
  %v1191 = vld [vmem:[%s9 + $0x2c8] sm:$0xf]
  %v1192 = vld [vmem:[%s9 + $0x2cc] sm:$0xf]
  %v1193 = vld [vmem:[%s9 + $0x2d0] sm:$0xf]
  %v1194 = vld [vmem:[%s9 + $0x2d4] sm:$0xf]
  %v1195 = vld [vmem:[%s9 + $0x2d8] sm:$0xf]
  %v1196 = vld [vmem:[%s9 + $0x2dc] sm:$0xf]
  %v1197 = vld [vmem:[%s9 + $0x2e0] sm:$0xf]
  %v1198 = vld [vmem:[%s9 + $0x2e4] sm:$0xf]
  %v1199 = vld [vmem:[%s9 + $0x2e8] sm:$0xf]
  %v1200 = vld [vmem:[%s9 + $0x2ec] sm:$0xf]
  %v1201 = vld [vmem:[%s9 + $0x2f0] sm:$0xf]
  %v1202 = vld [vmem:[%s9 + $0x2f4] sm:$0xf]
  %v1203 = vld [vmem:[%s9 + $0x2f8] sm:$0xf]
  %v1204 = vld [vmem:[%s9 + $0x2fc] sm:$0xf]
  %v1205 = vld [vmem:[%s9 + $0x300] sm:$0xf]
  %v1206 = vld [vmem:[%s9 + $0x304] sm:$0xf]
  %v1207 = vld [vmem:[%s9 + $0x308] sm:$0xf]
  %v1208 = vld [vmem:[%s9 + $0x30c] sm:$0xf]
  %v1209 = vld [vmem:[%s9 + $0x310] sm:$0xf]
  %v1210 = vld [vmem:[%s9 + $0x314] sm:$0xf]
  %v1211 = vld [vmem:[%s9 + $0x318] sm:$0xf]
  %v1212 = vld [vmem:[%s9 + $0x31c] sm:$0xf]
  %v1213 = vld [vmem:[%s9 + $0x320] sm:$0xf]
  %v1214 = vld [vmem:[%s9 + $0x324] sm:$0xf]
  %v1215 = vld [vmem:[%s9 + $0x328] sm:$0xf]
  %v1216 = vld [vmem:[%s9 + $0x32c] sm:$0xf]
  %v1217 = vld [vmem:[%s9 + $0x330] sm:$0xf]
  %v1218 = vld [vmem:[%s9 + $0x334] sm:$0xf]
  %v1219 = vld [vmem:[%s9 + $0x338] sm:$0xf]
  %v1220 = vld [vmem:[%s9 + $0x33c] sm:$0xf]
  %v1221 = vld [vmem:[%s9 + $0x340] sm:$0xf]
  %v1222 = vld [vmem:[%s9 + $0x344] sm:$0xf]
  %v1223 = vld [vmem:[%s9 + $0x348] sm:$0xf]
  %v1224 = vld [vmem:[%s9 + $0x34c] sm:$0xf]
  %v1225 = vld [vmem:[%s9 + $0x350] sm:$0xf]
  %v1226 = vld [vmem:[%s9 + $0x354] sm:$0xf]
  %v1227 = vld [vmem:[%s9 + $0x358] sm:$0xf]
  %v1228 = vld [vmem:[%s9 + $0x35c] sm:$0xf]
  %v1229 = vld [vmem:[%s9 + $0x360] sm:$0xf]
  %v1230 = vld [vmem:[%s9 + $0x364] sm:$0xf]
  %v1231 = vld [vmem:[%s9 + $0x368] sm:$0xf]
  %v1232 = vld [vmem:[%s9 + $0x36c] sm:$0xf]
  %v1233 = vld [vmem:[%s9 + $0x370] sm:$0xf]
  %v1234 = vld [vmem:[%s9 + $0x374] sm:$0xf]
  %v1235 = vld [vmem:[%s9 + $0x378] sm:$0xf]
  %v1236 = vld [vmem:[%s9 + $0x37c] sm:$0xf]
  %v1237 = vld [vmem:[%s9 + $0x380] sm:$0xf]
  %v1238 = vld [vmem:[%s9 + $0x384] sm:$0xf]
  %v1239 = vld [vmem:[%s9 + $0x388] sm:$0xf]
  %v1240 = vld [vmem:[%s9 + $0x38c] sm:$0xf]
  %v1241 = vld [vmem:[%s9 + $0x390] sm:$0xf]
  %v1242 = vld [vmem:[%s9 + $0x394] sm:$0xf]
  %v1243 = vld [vmem:[%s9 + $0x398] sm:$0xf]
  %v1244 = vld [vmem:[%s9 + $0x39c] sm:$0xf]
  %v1245 = vld [vmem:[%s9 + $0x3a0] sm:$0xf]
  %v1246 = vld [vmem:[%s9 + $0x3a4] sm:$0xf]
  %v1247 = vld [vmem:[%s9 + $0x3a8] sm:$0xf]
  %v1248 = vld [vmem:[%s9 + $0x3ac] sm:$0xf]
  %v1249 = vld [vmem:[%s9 + $0x3b0] sm:$0xf]
  %v1250 = vld [vmem:[%s9 + $0x3b4] sm:$0xf]
  %v1251 = vld [vmem:[%s9 + $0x3b8] sm:$0xf]
  %v1252 = vld [vmem:[%s9 + $0x3bc] sm:$0xf]
  %v1253 = vld [vmem:[%s9 + $0x3c0] sm:$0xf]
  %v1254 = vld [vmem:[%s9 + $0x3c4] sm:$0xf]
  %v1255 = vld [vmem:[%s9 + $0x3c8] sm:$0xf]
  %v1256 = vld [vmem:[%s9 + $0x3cc] sm:$0xf]
  %v1257 = vld [vmem:[%s9 + $0x3d0] sm:$0xf]
  %v1258 = vld [vmem:[%s9 + $0x3d4] sm:$0xf]
  %v1259 = vld [vmem:[%s9 + $0x3d8] sm:$0xf]
  %v1260 = vld [vmem:[%s9 + $0x3dc] sm:$0xf]
  %v1261 = vld [vmem:[%s9 + $0x3e0] sm:$0xf]
  %v1262 = vld [vmem:[%s9 + $0x3e4] sm:$0xf]
  %v1263 = vld [vmem:[%s9 + $0x3e8] sm:$0xf]
  %v1264 = vld [vmem:[%s9 + $0x3ec] sm:$0xf]
  %v1265 = vld [vmem:[%s9 + $0x3f0] sm:$0xf]
  %v1266 = vld [vmem:[%s9 + $0x3f4] sm:$0xf]
  %v1267 = vld [vmem:[%s9 + $0x3f8] sm:$0xf]
  %v1268 = vld [vmem:[%s9 + $0x3fc] sm:$0xf]
  %v1269 = vld [vmem:[%s9 + $0x400] sm:$0xf]
  %v1270 = vld [vmem:[%s9 + $0x404] sm:$0xf]
  %v1271 = vld [vmem:[%s9 + $0x408] sm:$0xf]
  %v1272 = vld [vmem:[%s9 + $0x40c] sm:$0xf]
  %v1273 = vld [vmem:[%s9 + $0x410] sm:$0xf]
  %v1274 = vld [vmem:[%s9 + $0x414] sm:$0xf]
  %v1275 = vld [vmem:[%s9 + $0x418] sm:$0xf]
  %v1276 = vld [vmem:[%s9 + $0x41c] sm:$0xf]
  %v1277 = vld [vmem:[%s9 + $0x420] sm:$0xf]
  %v1278 = vld [vmem:[%s9 + $0x424] sm:$0xf]
  %v1279 = vld [vmem:[%s9 + $0x428] sm:$0xf]
  %v1280 = vld [vmem:[%s9 + $0x42c] sm:$0xf]
  %v1281 = vld [vmem:[%s9 + $0x430] sm:$0xf]
  %v1282 = vld [vmem:[%s9 + $0x434] sm:$0xf]
  %v1283 = vld [vmem:[%s9 + $0x438] sm:$0xf]
  %v1284 = vld [vmem:[%s9 + $0x43c] sm:$0xf]
  %v1285 = vld [vmem:[%s9 + $0x440] sm:$0xf]
  %v1286 = vld [vmem:[%s9 + $0x444] sm:$0xf]
  %v1287 = vld [vmem:[%s9 + $0x448] sm:$0xf]
  %v1288 = vld [vmem:[%s9 + $0x44c] sm:$0xf]
  %v1289 = vld [vmem:[%s9 + $0x450] sm:$0xf]
  %v1290 = vld [vmem:[%s9 + $0x454] sm:$0xf]
  %v1291 = vld [vmem:[%s9 + $0x458] sm:$0xf]
  %v1292 = vld [vmem:[%s9 + $0x45c] sm:$0xf]
  %v1293 = vld [vmem:[%s9 + $0x460] sm:$0xf]
  %v1294 = vld [vmem:[%s9 + $0x464] sm:$0xf]
  %v1295 = vld [vmem:[%s9 + $0x468] sm:$0xf]
  %v1296 = vld [vmem:[%s9 + $0x46c] sm:$0xf]
  %v1297 = vld [vmem:[%s9 + $0x470] sm:$0xf]
  %v1298 = vld [vmem:[%s9 + $0x474] sm:$0xf]
  %v1299 = vld [vmem:[%s9 + $0x478] sm:$0xf]
  %v1300 = vld [vmem:[%s9 + $0x47c] sm:$0xf]
  %v1301 = vld [vmem:[%s9 + $0x480] sm:$0xf]
  %v1302 = vld [vmem:[%s9 + $0x484] sm:$0xf]
  %v1303 = vld [vmem:[%s9 + $0x488] sm:$0xf]
  %v1304 = vld [vmem:[%s9 + $0x48c] sm:$0xf]
  %v1305 = vld [vmem:[%s9 + $0x490] sm:$0xf]
  %v1306 = vld [vmem:[%s9 + $0x494] sm:$0xf]
  %v1307 = vld [vmem:[%s9 + $0x498] sm:$0xf]
  %v1308 = vld [vmem:[%s9 + $0x49c] sm:$0xf]
  %v1309 = vld [vmem:[%s9 + $0x4a0] sm:$0xf]
  %v1310 = vld [vmem:[%s9 + $0x4a4] sm:$0xf]
  %v1311 = vld [vmem:[%s9 + $0x4a8] sm:$0xf]
  %v1312 = vld [vmem:[%s9 + $0x4ac] sm:$0xf]
  %v1313 = vld [vmem:[%s9 + $0x4b0] sm:$0xf]
  %v1314 = vld [vmem:[%s9 + $0x4b4] sm:$0xf]
  %v1315 = vld [vmem:[%s9 + $0x4b8] sm:$0xf]
  %v1316 = vld [vmem:[%s9 + $0x4bc] sm:$0xf]
  %v1317 = vld [vmem:[%s9 + $0x4c0] sm:$0xf]
  %v1318 = vld [vmem:[%s9 + $0x4c4] sm:$0xf]
  %v1319 = vld [vmem:[%s9 + $0x4c8] sm:$0xf]
  %v1320 = vld [vmem:[%s9 + $0x4cc] sm:$0xf]
  %v1321 = vld [vmem:[%s9 + $0x4d0] sm:$0xf]
  %v1322 = vld [vmem:[%s9 + $0x4d4] sm:$0xf]
  %v1323 = vld [vmem:[%s9 + $0x4d8] sm:$0xf]
  %v1324 = vld [vmem:[%s9 + $0x4dc] sm:$0xf]
  %v1325 = vld [vmem:[%s9 + $0x4e0] sm:$0xf]
  %v1326 = vld [vmem:[%s9 + $0x4e4] sm:$0xf]
  %v1327 = vld [vmem:[%s9 + $0x4e8] sm:$0xf]
  %v1328 = vld [vmem:[%s9 + $0x4ec] sm:$0xf]
  %v1329 = vld [vmem:[%s9 + $0x4f0] sm:$0xf]
  %v1330 = vld [vmem:[%s9 + $0x4f4] sm:$0xf]
  %v1331 = vld [vmem:[%s9 + $0x4f8] sm:$0xf]
  %v1332 = vld [vmem:[%s9 + $0x4fc] sm:$0xf]
  %v1333 = vld [vmem:[%s9 + $0x500] sm:$0xf]
  %v1334 = vld [vmem:[%s9 + $0x504] sm:$0xf]
  %v1335 = vld [vmem:[%s9 + $0x508] sm:$0xf]
  %v1336 = vld [vmem:[%s9 + $0x50c] sm:$0xf]
  %v1337 = vld [vmem:[%s9 + $0x510] sm:$0xf]
  %v1338 = vld [vmem:[%s9 + $0x514] sm:$0xf]
  %v1339 = vld [vmem:[%s9 + $0x518] sm:$0xf]
  %v1340 = vld [vmem:[%s9 + $0x51c] sm:$0xf]
  %v1341 = vld [vmem:[%s9 + $0x520] sm:$0xf]
  %v1342 = vld [vmem:[%s9 + $0x524] sm:$0xf]
  %v1343 = vld [vmem:[%s9 + $0x528] sm:$0xf]
  %v1344 = vld [vmem:[%s9 + $0x52c] sm:$0xf]
  %v1345 = vld [vmem:[%s9 + $0x530] sm:$0xf]
  %v1346 = vld [vmem:[%s9 + $0x534] sm:$0xf]
  %v1347 = vld [vmem:[%s9 + $0x538] sm:$0xf]
  %v1348 = vld [vmem:[%s9 + $0x53c] sm:$0xf]
  %v1349 = vld [vmem:[%s9 + $0x540] sm:$0xf]
  %v1350 = vld [vmem:[%s9 + $0x544] sm:$0xf]
  %v1351 = vld [vmem:[%s9 + $0x548] sm:$0xf]
  %v1352 = vld [vmem:[%s9 + $0x54c] sm:$0xf]
  %v1353 = vld [vmem:[%s9 + $0x550] sm:$0xf]
  %v1354 = vld [vmem:[%s9 + $0x554] sm:$0xf]
  %v1355 = vld [vmem:[%s9 + $0x558] sm:$0xf]
  %v1356 = vld [vmem:[%s9 + $0x55c] sm:$0xf]
  %v1357 = vld [vmem:[%s9 + $0x560] sm:$0xf]
  %v1358 = vld [vmem:[%s9 + $0x564] sm:$0xf]
  %v1359 = vld [vmem:[%s9 + $0x568] sm:$0xf]
  %v1360 = vld [vmem:[%s9 + $0x56c] sm:$0xf]
  %v1361 = vld [vmem:[%s9 + $0x570] sm:$0xf]
  %v1362 = vld [vmem:[%s9 + $0x574] sm:$0xf]
  %v1363 = vld [vmem:[%s9 + $0x578] sm:$0xf]
  %v1364 = vld [vmem:[%s9 + $0x57c] sm:$0xf]
  %v1365 = vld [vmem:[%s9 + $0x580] sm:$0xf]
  %v1366 = vld [vmem:[%s9 + $0x584] sm:$0xf]
  %v1367 = vld [vmem:[%s9 + $0x588] sm:$0xf]
  %v1368 = vld [vmem:[%s9 + $0x58c] sm:$0xf]
  %v1369 = vld [vmem:[%s9 + $0x590] sm:$0xf]
  %v1370 = vld [vmem:[%s9 + $0x594] sm:$0xf]
  %v1371 = vld [vmem:[%s9 + $0x598] sm:$0xf]
  %v1372 = vld [vmem:[%s9 + $0x59c] sm:$0xf]
  %v1373 = vld [vmem:[%s9 + $0x5a0] sm:$0xf]
  %v1374 = vld [vmem:[%s9 + $0x5a4] sm:$0xf]
  %v1375 = vld [vmem:[%s9 + $0x5a8] sm:$0xf]
  %v1376 = vld [vmem:[%s9 + $0x5ac] sm:$0xf]
  %v1377 = vld [vmem:[%s9 + $0x5b0] sm:$0xf]
  %v1378 = vld [vmem:[%s9 + $0x5b4] sm:$0xf]
  %v1379 = vld [vmem:[%s9 + $0x5b8] sm:$0xf]
  %v1380 = vld [vmem:[%s9 + $0x5bc] sm:$0xf]
  %v1381 = vld [vmem:[%s9 + $0x5c0] sm:$0xf]
  %v1382 = vld [vmem:[%s9 + $0x5c4] sm:$0xf]
  %v1383 = vld [vmem:[%s9 + $0x5c8] sm:$0xf]
  %v1384 = vld [vmem:[%s9 + $0x5cc] sm:$0xf]
  %v1385 = vld [vmem:[%s9 + $0x5d0] sm:$0xf]
  %v1386 = vld [vmem:[%s9 + $0x5d4] sm:$0xf]
  %v1387 = vld [vmem:[%s9 + $0x5d8] sm:$0xf]
  %v1388 = vld [vmem:[%s9 + $0x5dc] sm:$0xf]
  %v1389 = vld [vmem:[%s9 + $0x5e0] sm:$0xf]
  %v1390 = vld [vmem:[%s9 + $0x5e4] sm:$0xf]
  %v1391 = vld [vmem:[%s9 + $0x5e8] sm:$0xf]
  %v1392 = vld [vmem:[%s9 + $0x5ec] sm:$0xf]
  %v1393 = vld [vmem:[%s9 + $0x5f0] sm:$0xf]
  %v1394 = vld [vmem:[%s9 + $0x5f4] sm:$0xf]
  %v1395 = vld [vmem:[%s9 + $0x5f8] sm:$0xf]
  %v1396 = vld [vmem:[%s9 + $0x5fc] sm:$0xf]
  %v1397 = vld [vmem:[%s9 + $0x600] sm:$0xf]
  %v1398 = vld [vmem:[%s9 + $0x604] sm:$0xf]
  %v1399 = vld [vmem:[%s9 + $0x608] sm:$0xf]
  %v1400 = vld [vmem:[%s9 + $0x60c] sm:$0xf]
  %v1401 = vld [vmem:[%s9 + $0x610] sm:$0xf]
  %v1402 = vld [vmem:[%s9 + $0x614] sm:$0xf]
  %v1403 = vld [vmem:[%s9 + $0x618] sm:$0xf]
  %v1404 = vld [vmem:[%s9 + $0x61c] sm:$0xf]
  %v1405 = vld [vmem:[%s9 + $0x620] sm:$0xf]
  %v1406 = vld [vmem:[%s9 + $0x624] sm:$0xf]
  %v1407 = vld [vmem:[%s9 + $0x628] sm:$0xf]
  %v1408 = vld [vmem:[%s9 + $0x62c] sm:$0xf]
  %v1409 = vld [vmem:[%s9 + $0x630] sm:$0xf]
  %v1410 = vld [vmem:[%s9 + $0x634] sm:$0xf]
  %v1411 = vld [vmem:[%s9 + $0x638] sm:$0xf]
  %v1412 = vld [vmem:[%s9 + $0x63c] sm:$0xf]
  %v1413 = vld [vmem:[%s9 + $0x640] sm:$0xf]
  %v1414 = vld [vmem:[%s9 + $0x644] sm:$0xf]
  %v1415 = vld [vmem:[%s9 + $0x648] sm:$0xf]
  %v1416 = vld [vmem:[%s9 + $0x64c] sm:$0xf]
  %v1417 = vld [vmem:[%s9 + $0x650] sm:$0xf]
  %v1418 = vld [vmem:[%s9 + $0x654] sm:$0xf]
  %v1419 = vld [vmem:[%s9 + $0x658] sm:$0xf]
  %v1420 = vld [vmem:[%s9 + $0x65c] sm:$0xf]
  %v1421 = vld [vmem:[%s9 + $0x660] sm:$0xf]
  %v1422 = vld [vmem:[%s9 + $0x664] sm:$0xf]
  %v1423 = vld [vmem:[%s9 + $0x668] sm:$0xf]
  %v1424 = vld [vmem:[%s9 + $0x66c] sm:$0xf]
  %v1425 = vld [vmem:[%s9 + $0x670] sm:$0xf]
  %v1426 = vld [vmem:[%s9 + $0x674] sm:$0xf]
  %v1427 = vld [vmem:[%s9 + $0x678] sm:$0xf]
  %v1428 = vld [vmem:[%s9 + $0x67c] sm:$0xf]
  %v1429 = vld [vmem:[%s9 + $0x680] sm:$0xf]
  %v1430 = vld [vmem:[%s9 + $0x684] sm:$0xf]
  %v1431 = vld [vmem:[%s9 + $0x688] sm:$0xf]
  %v1432 = vld [vmem:[%s9 + $0x68c] sm:$0xf]
  %v1433 = vld [vmem:[%s9 + $0x690] sm:$0xf]
  %v1434 = vld [vmem:[%s9 + $0x694] sm:$0xf]
  %v1435 = vld [vmem:[%s9 + $0x698] sm:$0xf]
  %v1436 = vld [vmem:[%s9 + $0x69c] sm:$0xf]
  %v1437 = vld [vmem:[%s9 + $0x6a0] sm:$0xf]
  %v1438 = vld [vmem:[%s9 + $0x6a4] sm:$0xf]
  %v1439 = vld [vmem:[%s9 + $0x6a8] sm:$0xf]
  %v1440 = vld [vmem:[%s9 + $0x6ac] sm:$0xf]
  %v1441 = vld [vmem:[%s9 + $0x6b0] sm:$0xf]
  %v1442 = vld [vmem:[%s9 + $0x6b4] sm:$0xf]
  %v1443 = vld [vmem:[%s9 + $0x6b8] sm:$0xf]
  %v1444 = vld [vmem:[%s9 + $0x6bc] sm:$0xf]
  %v1445 = vld [vmem:[%s9 + $0x6c0] sm:$0xf]
  %v1446 = vld [vmem:[%s9 + $0x6c4] sm:$0xf]
  %v1447 = vld [vmem:[%s9 + $0x6c8] sm:$0xf]
  %v1448 = vld [vmem:[%s9 + $0x6cc] sm:$0xf]
  %v1449 = vld [vmem:[%s9 + $0x6d0] sm:$0xf]
  %v1450 = vld [vmem:[%s9 + $0x6d4] sm:$0xf]
  %v1451 = vld [vmem:[%s9 + $0x6d8] sm:$0xf]
  %v1452 = vld [vmem:[%s9 + $0x6dc] sm:$0xf]
  %v1453 = vld [vmem:[%s9 + $0x6e0] sm:$0xf]
  %v1454 = vld [vmem:[%s9 + $0x6e4] sm:$0xf]
  %v1455 = vld [vmem:[%s9 + $0x6e8] sm:$0xf]
  %v1456 = vld [vmem:[%s9 + $0x6ec] sm:$0xf]
  %v1457 = vld [vmem:[%s9 + $0x6f0] sm:$0xf]
  %v1458 = vld [vmem:[%s9 + $0x6f4] sm:$0xf]
  %v1459 = vld [vmem:[%s9 + $0x6f8] sm:$0xf]
  %v1460 = vld [vmem:[%s9 + $0x6fc] sm:$0xf]
  %v1461 = vld [vmem:[%s9 + $0x700] sm:$0xf]
  %v1462 = vld [vmem:[%s9 + $0x704] sm:$0xf]
  %v1463 = vld [vmem:[%s9 + $0x708] sm:$0xf]
  %v1464 = vld [vmem:[%s9 + $0x70c] sm:$0xf]
  %v1465 = vld [vmem:[%s9 + $0x710] sm:$0xf]
  %v1466 = vld [vmem:[%s9 + $0x714] sm:$0xf]
  %v1467 = vld [vmem:[%s9 + $0x718] sm:$0xf]
  %v1468 = vld [vmem:[%s9 + $0x71c] sm:$0xf]
  %v1469 = vld [vmem:[%s9 + $0x720] sm:$0xf]
  %v1470 = vld [vmem:[%s9 + $0x724] sm:$0xf]
  %v1471 = vld [vmem:[%s9 + $0x728] sm:$0xf]
  %v1472 = vld [vmem:[%s9 + $0x72c] sm:$0xf]
  %v1473 = vld [vmem:[%s9 + $0x730] sm:$0xf]
  %v1474 = vld [vmem:[%s9 + $0x734] sm:$0xf]
  %v1475 = vld [vmem:[%s9 + $0x738] sm:$0xf]
  %v1476 = vld [vmem:[%s9 + $0x73c] sm:$0xf]
  %v1477 = vld [vmem:[%s9 + $0x740] sm:$0xf]
  %v1478 = vld [vmem:[%s9 + $0x744] sm:$0xf]
  %v1479 = vld [vmem:[%s9 + $0x748] sm:$0xf]
  %v1480 = vld [vmem:[%s9 + $0x74c] sm:$0xf]
  %v1481 = vld [vmem:[%s9 + $0x750] sm:$0xf]
  %v1482 = vld [vmem:[%s9 + $0x754] sm:$0xf]
  %v1483 = vld [vmem:[%s9 + $0x758] sm:$0xf]
  %v1484 = vld [vmem:[%s9 + $0x75c] sm:$0xf]
  %v1485 = vld [vmem:[%s9 + $0x760] sm:$0xf]
  %v1486 = vld [vmem:[%s9 + $0x764] sm:$0xf]
  %v1487 = vld [vmem:[%s9 + $0x768] sm:$0xf]
  %v1488 = vld [vmem:[%s9 + $0x76c] sm:$0xf]
  %v1489 = vld [vmem:[%s9 + $0x770] sm:$0xf]
  %v1490 = vld [vmem:[%s9 + $0x774] sm:$0xf]
  %v1491 = vld [vmem:[%s9 + $0x778] sm:$0xf]
  %v1492 = vld [vmem:[%s9 + $0x77c] sm:$0xf]
  %v1493 = vld [vmem:[%s9 + $0x780] sm:$0xf]
  %v1494 = vld [vmem:[%s9 + $0x784] sm:$0xf]
  %v1495 = vld [vmem:[%s9 + $0x788] sm:$0xf]
  %v1496 = vld [vmem:[%s9 + $0x78c] sm:$0xf]
  %v1497 = vld [vmem:[%s9 + $0x790] sm:$0xf]
  %v1498 = vld [vmem:[%s9 + $0x794] sm:$0xf]
  %v1499 = vld [vmem:[%s9 + $0x798] sm:$0xf]
  %v1500 = vld [vmem:[%s9 + $0x79c] sm:$0xf]
  %v1501 = vld [vmem:[%s9 + $0x7a0] sm:$0xf]
  %v1502 = vld [vmem:[%s9 + $0x7a4] sm:$0xf]
  %v1503 = vld [vmem:[%s9 + $0x7a8] sm:$0xf]
  %v1504 = vld [vmem:[%s9 + $0x7ac] sm:$0xf]
  %v1505 = vld [vmem:[%s9 + $0x7b0] sm:$0xf]
  %v1506 = vld [vmem:[%s9 + $0x7b4] sm:$0xf]
  %v1507 = vld [vmem:[%s9 + $0x7b8] sm:$0xf]
  %v1508 = vld [vmem:[%s9 + $0x7bc] sm:$0xf]
  %v1509 = vld [vmem:[%s9 + $0x7c0] sm:$0xf]
  %v1510 = vld [vmem:[%s9 + $0x7c4] sm:$0xf]
  %v1511 = vld [vmem:[%s9 + $0x7c8] sm:$0xf]
  %v1512 = vld [vmem:[%s9 + $0x7cc] sm:$0xf]
  %v1513 = vld [vmem:[%s9 + $0x7d0] sm:$0xf]
  %v1514 = vld [vmem:[%s9 + $0x7d4] sm:$0xf]
  %v1515 = vld [vmem:[%s9 + $0x7d8] sm:$0xf]
  %v1516 = vld [vmem:[%s9 + $0x7dc] sm:$0xf]
  %v1517 = vld [vmem:[%s9 + $0x7e0] sm:$0xf]
  %v1518 = vld [vmem:[%s9 + $0x7e4] sm:$0xf]
  %v1519 = vld [vmem:[%s9 + $0x7e8] sm:$0xf]
  %v1520 = vld [vmem:[%s9 + $0x7ec] sm:$0xf]
  %v1521 = vld [vmem:[%s9 + $0x7f0] sm:$0xf]
  %v1522 = vld [vmem:[%s9 + $0x7f4] sm:$0xf]
  %v1523 = vld [vmem:[%s9 + $0x7f8] sm:$0xf]
  %v1524 = vld [vmem:[%s9 + $0x7fc] sm:$0xf]
  %v1525 = vld [vmem:[%s10] sm:$0x1]
  %v1527 = vlaneseq
  %v1528 = vshrl.u32 %v1527, 7
  %v1529 = vsub.s32 0, %v1528
  %v1530 = vrot.slane %v1525, %v1529
  %v2044 = vunpack.c.l.b16 %v1013
  %v2045 = vunpack.c.l.b16 %v1014
  %v2046 = vunpack.c.l.b16 %v1015
  %v2047 = vunpack.c.l.b16 %v1016
  %v2048 = vunpack.c.l.b16 %v1017
  %v2049 = vunpack.c.l.b16 %v1018
  %v2050 = vunpack.c.l.b16 %v1019
  %v2051 = vunpack.c.l.b16 %v1020
  %v2052 = vunpack.c.l.b16 %v1021
  %v2053 = vunpack.c.l.b16 %v1022
  %v2054 = vunpack.c.l.b16 %v1023
  %v2055 = vunpack.c.l.b16 %v1024
  %v2056 = vunpack.c.l.b16 %v1025
  %v2057 = vunpack.c.l.b16 %v1026
  %v2058 = vunpack.c.l.b16 %v1027
  %v2059 = vunpack.c.l.b16 %v1028
  %v2060 = vunpack.c.l.b16 %v1029
  %v2061 = vunpack.c.l.b16 %v1030
  %v2062 = vunpack.c.l.b16 %v1031
  %v2063 = vunpack.c.l.b16 %v1032
  %v2064 = vunpack.c.l.b16 %v1033
  %v2065 = vunpack.c.l.b16 %v1034
  %v2066 = vunpack.c.l.b16 %v1035
  %v2067 = vunpack.c.l.b16 %v1036
  %v2068 = vunpack.c.l.b16 %v1037
  %v2069 = vunpack.c.l.b16 %v1038
  %v2070 = vunpack.c.l.b16 %v1039
  %v2071 = vunpack.c.l.b16 %v1040
  %v2072 = vunpack.c.l.b16 %v1041
  %v2073 = vunpack.c.l.b16 %v1042
  %v2074 = vunpack.c.l.b16 %v1043
  %v2075 = vunpack.c.l.b16 %v1044
  %v2076 = vunpack.c.l.b16 %v1045
  %v2077 = vunpack.c.l.b16 %v1046
  %v2078 = vunpack.c.l.b16 %v1047
  %v2079 = vunpack.c.l.b16 %v1048
  %v2080 = vunpack.c.l.b16 %v1049
  %v2081 = vunpack.c.l.b16 %v1050
  %v2082 = vunpack.c.l.b16 %v1051
  %v2083 = vunpack.c.l.b16 %v1052
  %v2084 = vunpack.c.l.b16 %v1053
  %v2085 = vunpack.c.l.b16 %v1054
  %v2086 = vunpack.c.l.b16 %v1055
  %v2087 = vunpack.c.l.b16 %v1056
  %v2088 = vunpack.c.l.b16 %v1057
  %v2089 = vunpack.c.l.b16 %v1058
  %v2090 = vunpack.c.l.b16 %v1059
  %v2091 = vunpack.c.l.b16 %v1060
  %v2092 = vunpack.c.l.b16 %v1061
  %v2093 = vunpack.c.l.b16 %v1062
  %v2094 = vunpack.c.l.b16 %v1063
  %v2095 = vunpack.c.l.b16 %v1064
  %v2096 = vunpack.c.l.b16 %v1065
  %v2097 = vunpack.c.l.b16 %v1066
  %v2098 = vunpack.c.l.b16 %v1067
  %v2099 = vunpack.c.l.b16 %v1068
  %v2100 = vunpack.c.l.b16 %v1069
  %v2101 = vunpack.c.l.b16 %v1070
  %v2102 = vunpack.c.l.b16 %v1071
  %v2103 = vunpack.c.l.b16 %v1072
  %v2104 = vunpack.c.l.b16 %v1073
  %v2105 = vunpack.c.l.b16 %v1074
  %v2106 = vunpack.c.l.b16 %v1075
  %v2107 = vunpack.c.l.b16 %v1076
  %v2108 = vunpack.c.l.b16 %v1077
  %v2109 = vunpack.c.l.b16 %v1078
  %v2110 = vunpack.c.l.b16 %v1079
  %v2111 = vunpack.c.l.b16 %v1080
  %v2112 = vunpack.c.l.b16 %v1081
  %v2113 = vunpack.c.l.b16 %v1082
  %v2114 = vunpack.c.l.b16 %v1083
  %v2115 = vunpack.c.l.b16 %v1084
  %v2116 = vunpack.c.l.b16 %v1085
  %v2117 = vunpack.c.l.b16 %v1086
  %v2118 = vunpack.c.l.b16 %v1087
  %v2119 = vunpack.c.l.b16 %v1088
  %v2120 = vunpack.c.l.b16 %v1089
  %v2121 = vunpack.c.l.b16 %v1090
  %v2122 = vunpack.c.l.b16 %v1091
  %v2123 = vunpack.c.l.b16 %v1092
  %v2124 = vunpack.c.l.b16 %v1093
  %v2125 = vunpack.c.l.b16 %v1094
  %v2126 = vunpack.c.l.b16 %v1095
  %v2127 = vunpack.c.l.b16 %v1096
  %v2128 = vunpack.c.l.b16 %v1097
  %v2129 = vunpack.c.l.b16 %v1098
  %v2130 = vunpack.c.l.b16 %v1099
  %v2131 = vunpack.c.l.b16 %v1100
  %v2132 = vunpack.c.l.b16 %v1101
  %v2133 = vunpack.c.l.b16 %v1102
  %v2134 = vunpack.c.l.b16 %v1103
  %v2135 = vunpack.c.l.b16 %v1104
  %v2136 = vunpack.c.l.b16 %v1105
  %v2137 = vunpack.c.l.b16 %v1106
  %v2138 = vunpack.c.l.b16 %v1107
  %v2139 = vunpack.c.l.b16 %v1108
  %v2140 = vunpack.c.l.b16 %v1109
  %v2141 = vunpack.c.l.b16 %v1110
  %v2142 = vunpack.c.l.b16 %v1111
  %v2143 = vunpack.c.l.b16 %v1112
  %v2144 = vunpack.c.l.b16 %v1113
  %v2145 = vunpack.c.l.b16 %v1114
  %v2146 = vunpack.c.l.b16 %v1115
  %v2147 = vunpack.c.l.b16 %v1116
  %v2148 = vunpack.c.l.b16 %v1117
  %v2149 = vunpack.c.l.b16 %v1118
  %v2150 = vunpack.c.l.b16 %v1119
  %v2151 = vunpack.c.l.b16 %v1120
  %v2152 = vunpack.c.l.b16 %v1121
  %v2153 = vunpack.c.l.b16 %v1122
  %v2154 = vunpack.c.l.b16 %v1123
  %v2155 = vunpack.c.l.b16 %v1124
  %v2156 = vunpack.c.l.b16 %v1125
  %v2157 = vunpack.c.l.b16 %v1126
  %v2158 = vunpack.c.l.b16 %v1127
  %v2159 = vunpack.c.l.b16 %v1128
  %v2160 = vunpack.c.l.b16 %v1129
  %v2161 = vunpack.c.l.b16 %v1130
  %v2162 = vunpack.c.l.b16 %v1131
  %v2163 = vunpack.c.l.b16 %v1132
  %v2164 = vunpack.c.l.b16 %v1133
  %v2165 = vunpack.c.l.b16 %v1134
  %v2166 = vunpack.c.l.b16 %v1135
  %v2167 = vunpack.c.l.b16 %v1136
  %v2168 = vunpack.c.l.b16 %v1137
  %v2169 = vunpack.c.l.b16 %v1138
  %v2170 = vunpack.c.l.b16 %v1139
  %v2171 = vunpack.c.l.b16 %v1140
  %v2172 = vunpack.c.l.b16 %v1141
  %v2173 = vunpack.c.l.b16 %v1142
  %v2174 = vunpack.c.l.b16 %v1143
  %v2175 = vunpack.c.l.b16 %v1144
  %v2176 = vunpack.c.l.b16 %v1145
  %v2177 = vunpack.c.l.b16 %v1146
  %v2178 = vunpack.c.l.b16 %v1147
  %v2179 = vunpack.c.l.b16 %v1148
  %v2180 = vunpack.c.l.b16 %v1149
  %v2181 = vunpack.c.l.b16 %v1150
  %v2182 = vunpack.c.l.b16 %v1151
  %v2183 = vunpack.c.l.b16 %v1152
  %v2184 = vunpack.c.l.b16 %v1153
  %v2185 = vunpack.c.l.b16 %v1154
  %v2186 = vunpack.c.l.b16 %v1155
  %v2187 = vunpack.c.l.b16 %v1156
  %v2188 = vunpack.c.l.b16 %v1157
  %v2189 = vunpack.c.l.b16 %v1158
  %v2190 = vunpack.c.l.b16 %v1159
  %v2191 = vunpack.c.l.b16 %v1160
  %v2192 = vunpack.c.l.b16 %v1161
  %v2193 = vunpack.c.l.b16 %v1162
  %v2194 = vunpack.c.l.b16 %v1163
  %v2195 = vunpack.c.l.b16 %v1164
  %v2196 = vunpack.c.l.b16 %v1165
  %v2197 = vunpack.c.l.b16 %v1166
  %v2198 = vunpack.c.l.b16 %v1167
  %v2199 = vunpack.c.l.b16 %v1168
  %v2200 = vunpack.c.l.b16 %v1169
  %v2201 = vunpack.c.l.b16 %v1170
  %v2202 = vunpack.c.l.b16 %v1171
  %v2203 = vunpack.c.l.b16 %v1172
  %v2204 = vunpack.c.l.b16 %v1173
  %v2205 = vunpack.c.l.b16 %v1174
  %v2206 = vunpack.c.l.b16 %v1175
  %v2207 = vunpack.c.l.b16 %v1176
  %v2208 = vunpack.c.l.b16 %v1177
  %v2209 = vunpack.c.l.b16 %v1178
  %v2210 = vunpack.c.l.b16 %v1179
  %v2211 = vunpack.c.l.b16 %v1180
  %v2212 = vunpack.c.l.b16 %v1181
  %v2213 = vunpack.c.l.b16 %v1182
  %v2214 = vunpack.c.l.b16 %v1183
  %v2215 = vunpack.c.l.b16 %v1184
  %v2216 = vunpack.c.l.b16 %v1185
  %v2217 = vunpack.c.l.b16 %v1186
  %v2218 = vunpack.c.l.b16 %v1187
  %v2219 = vunpack.c.l.b16 %v1188
  %v2220 = vunpack.c.l.b16 %v1189
  %v2221 = vunpack.c.l.b16 %v1190
  %v2222 = vunpack.c.l.b16 %v1191
  %v2223 = vunpack.c.l.b16 %v1192
  %v2224 = vunpack.c.l.b16 %v1193
  %v2225 = vunpack.c.l.b16 %v1194
  %v2226 = vunpack.c.l.b16 %v1195
  %v2227 = vunpack.c.l.b16 %v1196
  %v2228 = vunpack.c.l.b16 %v1197
  %v2229 = vunpack.c.l.b16 %v1198
  %v2230 = vunpack.c.l.b16 %v1199
  %v2231 = vunpack.c.l.b16 %v1200
  %v2232 = vunpack.c.l.b16 %v1201
  %v2233 = vunpack.c.l.b16 %v1202
  %v2234 = vunpack.c.l.b16 %v1203
  %v2235 = vunpack.c.l.b16 %v1204
  %v2236 = vunpack.c.l.b16 %v1205
  %v2237 = vunpack.c.l.b16 %v1206
  %v2238 = vunpack.c.l.b16 %v1207
  %v2239 = vunpack.c.l.b16 %v1208
  %v2240 = vunpack.c.l.b16 %v1209
  %v2241 = vunpack.c.l.b16 %v1210
  %v2242 = vunpack.c.l.b16 %v1211
  %v2243 = vunpack.c.l.b16 %v1212
  %v2244 = vunpack.c.l.b16 %v1213
  %v2245 = vunpack.c.l.b16 %v1214
  %v2246 = vunpack.c.l.b16 %v1215
  %v2247 = vunpack.c.l.b16 %v1216
  %v2248 = vunpack.c.l.b16 %v1217
  %v2249 = vunpack.c.l.b16 %v1218
  %v2250 = vunpack.c.l.b16 %v1219
  %v2251 = vunpack.c.l.b16 %v1220
  %v2252 = vunpack.c.l.b16 %v1221
  %v2253 = vunpack.c.l.b16 %v1222
  %v2254 = vunpack.c.l.b16 %v1223
  %v2255 = vunpack.c.l.b16 %v1224
  %v2256 = vunpack.c.l.b16 %v1225
  %v2257 = vunpack.c.l.b16 %v1226
  %v2258 = vunpack.c.l.b16 %v1227
  %v2259 = vunpack.c.l.b16 %v1228
  %v2260 = vunpack.c.l.b16 %v1229
  %v2261 = vunpack.c.l.b16 %v1230
  %v2262 = vunpack.c.l.b16 %v1231
  %v2263 = vunpack.c.l.b16 %v1232
  %v2264 = vunpack.c.l.b16 %v1233
  %v2265 = vunpack.c.l.b16 %v1234
  %v2266 = vunpack.c.l.b16 %v1235
  %v2267 = vunpack.c.l.b16 %v1236
  %v2268 = vunpack.c.l.b16 %v1237
  %v2269 = vunpack.c.l.b16 %v1238
  %v2270 = vunpack.c.l.b16 %v1239
  %v2271 = vunpack.c.l.b16 %v1240
  %v2272 = vunpack.c.l.b16 %v1241
  %v2273 = vunpack.c.l.b16 %v1242
  %v2274 = vunpack.c.l.b16 %v1243
  %v2275 = vunpack.c.l.b16 %v1244
  %v2276 = vunpack.c.l.b16 %v1245
  %v2277 = vunpack.c.l.b16 %v1246
  %v2278 = vunpack.c.l.b16 %v1247
  %v2279 = vunpack.c.l.b16 %v1248
  %v2280 = vunpack.c.l.b16 %v1249
  %v2281 = vunpack.c.l.b16 %v1250
  %v2282 = vunpack.c.l.b16 %v1251
  %v2283 = vunpack.c.l.b16 %v1252
  %v2284 = vunpack.c.l.b16 %v1253
  %v2285 = vunpack.c.l.b16 %v1254
  %v2286 = vunpack.c.l.b16 %v1255
  %v2287 = vunpack.c.l.b16 %v1256
  %v2288 = vunpack.c.l.b16 %v1257
  %v2289 = vunpack.c.l.b16 %v1258
  %v2290 = vunpack.c.l.b16 %v1259
  %v2291 = vunpack.c.l.b16 %v1260
  %v2292 = vunpack.c.l.b16 %v1261
  %v2293 = vunpack.c.l.b16 %v1262
  %v2294 = vunpack.c.l.b16 %v1263
  %v2295 = vunpack.c.l.b16 %v1264
  %v2296 = vunpack.c.l.b16 %v1265
  %v2297 = vunpack.c.l.b16 %v1266
  %v2298 = vunpack.c.l.b16 %v1267
  %v2299 = vunpack.c.l.b16 %v1268
  %v2300 = vunpack.c.l.b16 %v1269
  %v2301 = vunpack.c.l.b16 %v1270
  %v2302 = vunpack.c.l.b16 %v1271
  %v2303 = vunpack.c.l.b16 %v1272
  %v2304 = vunpack.c.l.b16 %v1273
  %v2305 = vunpack.c.l.b16 %v1274
  %v2306 = vunpack.c.l.b16 %v1275
  %v2307 = vunpack.c.l.b16 %v1276
  %v2308 = vunpack.c.l.b16 %v1277
  %v2309 = vunpack.c.l.b16 %v1278
  %v2310 = vunpack.c.l.b16 %v1279
  %v2311 = vunpack.c.l.b16 %v1280
  %v2312 = vunpack.c.l.b16 %v1281
  %v2313 = vunpack.c.l.b16 %v1282
  %v2314 = vunpack.c.l.b16 %v1283
  %v2315 = vunpack.c.l.b16 %v1284
  %v2316 = vunpack.c.l.b16 %v1285
  %v2317 = vunpack.c.l.b16 %v1286
  %v2318 = vunpack.c.l.b16 %v1287
  %v2319 = vunpack.c.l.b16 %v1288
  %v2320 = vunpack.c.l.b16 %v1289
  %v2321 = vunpack.c.l.b16 %v1290
  %v2322 = vunpack.c.l.b16 %v1291
  %v2323 = vunpack.c.l.b16 %v1292
  %v2324 = vunpack.c.l.b16 %v1293
  %v2325 = vunpack.c.l.b16 %v1294
  %v2326 = vunpack.c.l.b16 %v1295
  %v2327 = vunpack.c.l.b16 %v1296
  %v2328 = vunpack.c.l.b16 %v1297
  %v2329 = vunpack.c.l.b16 %v1298
  %v2330 = vunpack.c.l.b16 %v1299
  %v2331 = vunpack.c.l.b16 %v1300
  %v2332 = vunpack.c.l.b16 %v1301
  %v2333 = vunpack.c.l.b16 %v1302
  %v2334 = vunpack.c.l.b16 %v1303
  %v2335 = vunpack.c.l.b16 %v1304
  %v2336 = vunpack.c.l.b16 %v1305
  %v2337 = vunpack.c.l.b16 %v1306
  %v2338 = vunpack.c.l.b16 %v1307
  %v2339 = vunpack.c.l.b16 %v1308
  %v2340 = vunpack.c.l.b16 %v1309
  %v2341 = vunpack.c.l.b16 %v1310
  %v2342 = vunpack.c.l.b16 %v1311
  %v2343 = vunpack.c.l.b16 %v1312
  %v2344 = vunpack.c.l.b16 %v1313
  %v2345 = vunpack.c.l.b16 %v1314
  %v2346 = vunpack.c.l.b16 %v1315
  %v2347 = vunpack.c.l.b16 %v1316
  %v2348 = vunpack.c.l.b16 %v1317
  %v2349 = vunpack.c.l.b16 %v1318
  %v2350 = vunpack.c.l.b16 %v1319
  %v2351 = vunpack.c.l.b16 %v1320
  %v2352 = vunpack.c.l.b16 %v1321
  %v2353 = vunpack.c.l.b16 %v1322
  %v2354 = vunpack.c.l.b16 %v1323
  %v2355 = vunpack.c.l.b16 %v1324
  %v2356 = vunpack.c.l.b16 %v1325
  %v2357 = vunpack.c.l.b16 %v1326
  %v2358 = vunpack.c.l.b16 %v1327
  %v2359 = vunpack.c.l.b16 %v1328
  %v2360 = vunpack.c.l.b16 %v1329
  %v2361 = vunpack.c.l.b16 %v1330
  %v2362 = vunpack.c.l.b16 %v1331
  %v2363 = vunpack.c.l.b16 %v1332
  %v2364 = vunpack.c.l.b16 %v1333
  %v2365 = vunpack.c.l.b16 %v1334
  %v2366 = vunpack.c.l.b16 %v1335
  %v2367 = vunpack.c.l.b16 %v1336
  %v2368 = vunpack.c.l.b16 %v1337
  %v2369 = vunpack.c.l.b16 %v1338
  %v2370 = vunpack.c.l.b16 %v1339
  %v2371 = vunpack.c.l.b16 %v1340
  %v2372 = vunpack.c.l.b16 %v1341
  %v2373 = vunpack.c.l.b16 %v1342
  %v2374 = vunpack.c.l.b16 %v1343
  %v2375 = vunpack.c.l.b16 %v1344
  %v2376 = vunpack.c.l.b16 %v1345
  %v2377 = vunpack.c.l.b16 %v1346
  %v2378 = vunpack.c.l.b16 %v1347
  %v2379 = vunpack.c.l.b16 %v1348
  %v2380 = vunpack.c.l.b16 %v1349
  %v2381 = vunpack.c.l.b16 %v1350
  %v2382 = vunpack.c.l.b16 %v1351
  %v2383 = vunpack.c.l.b16 %v1352
  %v2384 = vunpack.c.l.b16 %v1353
  %v2385 = vunpack.c.l.b16 %v1354
  %v2386 = vunpack.c.l.b16 %v1355
  %v2387 = vunpack.c.l.b16 %v1356
  %v2388 = vunpack.c.l.b16 %v1357
  %v2389 = vunpack.c.l.b16 %v1358
  %v2390 = vunpack.c.l.b16 %v1359
  %v2391 = vunpack.c.l.b16 %v1360
  %v2392 = vunpack.c.l.b16 %v1361
  %v2393 = vunpack.c.l.b16 %v1362
  %v2394 = vunpack.c.l.b16 %v1363
  %v2395 = vunpack.c.l.b16 %v1364
  %v2396 = vunpack.c.l.b16 %v1365
  %v2397 = vunpack.c.l.b16 %v1366
  %v2398 = vunpack.c.l.b16 %v1367
  %v2399 = vunpack.c.l.b16 %v1368
  %v2400 = vunpack.c.l.b16 %v1369
  %v2401 = vunpack.c.l.b16 %v1370
  %v2402 = vunpack.c.l.b16 %v1371
  %v2403 = vunpack.c.l.b16 %v1372
  %v2404 = vunpack.c.l.b16 %v1373
  %v2405 = vunpack.c.l.b16 %v1374
  %v2406 = vunpack.c.l.b16 %v1375
  %v2407 = vunpack.c.l.b16 %v1376
  %v2408 = vunpack.c.l.b16 %v1377
  %v2409 = vunpack.c.l.b16 %v1378
  %v2410 = vunpack.c.l.b16 %v1379
  %v2411 = vunpack.c.l.b16 %v1380
  %v2412 = vunpack.c.l.b16 %v1381
  %v2413 = vunpack.c.l.b16 %v1382
  %v2414 = vunpack.c.l.b16 %v1383
  %v2415 = vunpack.c.l.b16 %v1384
  %v2416 = vunpack.c.l.b16 %v1385
  %v2417 = vunpack.c.l.b16 %v1386
  %v2418 = vunpack.c.l.b16 %v1387
  %v2419 = vunpack.c.l.b16 %v1388
  %v2420 = vunpack.c.l.b16 %v1389
  %v2421 = vunpack.c.l.b16 %v1390
  %v2422 = vunpack.c.l.b16 %v1391
  %v2423 = vunpack.c.l.b16 %v1392
  %v2424 = vunpack.c.l.b16 %v1393
  %v2425 = vunpack.c.l.b16 %v1394
  %v2426 = vunpack.c.l.b16 %v1395
  %v2427 = vunpack.c.l.b16 %v1396
  %v2428 = vunpack.c.l.b16 %v1397
  %v2429 = vunpack.c.l.b16 %v1398
  %v2430 = vunpack.c.l.b16 %v1399
  %v2431 = vunpack.c.l.b16 %v1400
  %v2432 = vunpack.c.l.b16 %v1401
  %v2433 = vunpack.c.l.b16 %v1402
  %v2434 = vunpack.c.l.b16 %v1403
  %v2435 = vunpack.c.l.b16 %v1404
  %v2436 = vunpack.c.l.b16 %v1405
  %v2437 = vunpack.c.l.b16 %v1406
  %v2438 = vunpack.c.l.b16 %v1407
  %v2439 = vunpack.c.l.b16 %v1408
  %v2440 = vunpack.c.l.b16 %v1409
  %v2441 = vunpack.c.l.b16 %v1410
  %v2442 = vunpack.c.l.b16 %v1411
  %v2443 = vunpack.c.l.b16 %v1412
  %v2444 = vunpack.c.l.b16 %v1413
  %v2445 = vunpack.c.l.b16 %v1414
  %v2446 = vunpack.c.l.b16 %v1415
  %v2447 = vunpack.c.l.b16 %v1416
  %v2448 = vunpack.c.l.b16 %v1417
  %v2449 = vunpack.c.l.b16 %v1418
  %v2450 = vunpack.c.l.b16 %v1419
  %v2451 = vunpack.c.l.b16 %v1420
  %v2452 = vunpack.c.l.b16 %v1421
  %v2453 = vunpack.c.l.b16 %v1422
  %v2454 = vunpack.c.l.b16 %v1423
  %v2455 = vunpack.c.l.b16 %v1424
  %v2456 = vunpack.c.l.b16 %v1425
  %v2457 = vunpack.c.l.b16 %v1426
  %v2458 = vunpack.c.l.b16 %v1427
  %v2459 = vunpack.c.l.b16 %v1428
  %v2460 = vunpack.c.l.b16 %v1429
  %v2461 = vunpack.c.l.b16 %v1430
  %v2462 = vunpack.c.l.b16 %v1431
  %v2463 = vunpack.c.l.b16 %v1432
  %v2464 = vunpack.c.l.b16 %v1433
  %v2465 = vunpack.c.l.b16 %v1434
  %v2466 = vunpack.c.l.b16 %v1435
  %v2467 = vunpack.c.l.b16 %v1436
  %v2468 = vunpack.c.l.b16 %v1437
  %v2469 = vunpack.c.l.b16 %v1438
  %v2470 = vunpack.c.l.b16 %v1439
  %v2471 = vunpack.c.l.b16 %v1440
  %v2472 = vunpack.c.l.b16 %v1441
  %v2473 = vunpack.c.l.b16 %v1442
  %v2474 = vunpack.c.l.b16 %v1443
  %v2475 = vunpack.c.l.b16 %v1444
  %v2476 = vunpack.c.l.b16 %v1445
  %v2477 = vunpack.c.l.b16 %v1446
  %v2478 = vunpack.c.l.b16 %v1447
  %v2479 = vunpack.c.l.b16 %v1448
  %v2480 = vunpack.c.l.b16 %v1449
  %v2481 = vunpack.c.l.b16 %v1450
  %v2482 = vunpack.c.l.b16 %v1451
  %v2483 = vunpack.c.l.b16 %v1452
  %v2484 = vunpack.c.l.b16 %v1453
  %v2485 = vunpack.c.l.b16 %v1454
  %v2486 = vunpack.c.l.b16 %v1455
  %v2487 = vunpack.c.l.b16 %v1456
  %v2488 = vunpack.c.l.b16 %v1457
  %v2489 = vunpack.c.l.b16 %v1458
  %v2490 = vunpack.c.l.b16 %v1459
  %v2491 = vunpack.c.l.b16 %v1460
  %v2492 = vunpack.c.l.b16 %v1461
  %v2493 = vunpack.c.l.b16 %v1462
  %v2494 = vunpack.c.l.b16 %v1463
  %v2495 = vunpack.c.l.b16 %v1464
  %v2496 = vunpack.c.l.b16 %v1465
  %v2497 = vunpack.c.l.b16 %v1466
  %v2498 = vunpack.c.l.b16 %v1467
  %v2499 = vunpack.c.l.b16 %v1468
  %v2500 = vunpack.c.l.b16 %v1469
  %v2501 = vunpack.c.l.b16 %v1470
  %v2502 = vunpack.c.l.b16 %v1471
  %v2503 = vunpack.c.l.b16 %v1472
  %v2504 = vunpack.c.l.b16 %v1473
  %v2505 = vunpack.c.l.b16 %v1474
  %v2506 = vunpack.c.l.b16 %v1475
  %v2507 = vunpack.c.l.b16 %v1476
  %v2508 = vunpack.c.l.b16 %v1477
  %v2509 = vunpack.c.l.b16 %v1478
  %v2510 = vunpack.c.l.b16 %v1479
  %v2511 = vunpack.c.l.b16 %v1480
  %v2512 = vunpack.c.l.b16 %v1481
  %v2513 = vunpack.c.l.b16 %v1482
  %v2514 = vunpack.c.l.b16 %v1483
  %v2515 = vunpack.c.l.b16 %v1484
  %v2516 = vunpack.c.l.b16 %v1485
  %v2517 = vunpack.c.l.b16 %v1486
  %v2518 = vunpack.c.l.b16 %v1487
  %v2519 = vunpack.c.l.b16 %v1488
  %v2520 = vunpack.c.l.b16 %v1489
  %v2521 = vunpack.c.l.b16 %v1490
  %v2522 = vunpack.c.l.b16 %v1491
  %v2523 = vunpack.c.l.b16 %v1492
  %v2524 = vunpack.c.l.b16 %v1493
  %v2525 = vunpack.c.l.b16 %v1494
  %v2526 = vunpack.c.l.b16 %v1495
  %v2527 = vunpack.c.l.b16 %v1496
  %v2528 = vunpack.c.l.b16 %v1497
  %v2529 = vunpack.c.l.b16 %v1498
  %v2530 = vunpack.c.l.b16 %v1499
  %v2531 = vunpack.c.l.b16 %v1500
  %v2532 = vunpack.c.l.b16 %v1501
  %v2533 = vunpack.c.l.b16 %v1502
  %v2534 = vunpack.c.l.b16 %v1503
  %v2535 = vunpack.c.l.b16 %v1504
  %v2536 = vunpack.c.l.b16 %v1505
  %v2537 = vunpack.c.l.b16 %v1506
  %v2538 = vunpack.c.l.b16 %v1507
  %v2539 = vunpack.c.l.b16 %v1508
  %v2540 = vunpack.c.l.b16 %v1509
  %v2541 = vunpack.c.l.b16 %v1510
  %v2542 = vunpack.c.l.b16 %v1511
  %v2543 = vunpack.c.l.b16 %v1512
  %v2544 = vunpack.c.l.b16 %v1513
  %v2545 = vunpack.c.l.b16 %v1514
  %v2546 = vunpack.c.l.b16 %v1515
  %v2547 = vunpack.c.l.b16 %v1516
  %v2548 = vunpack.c.l.b16 %v1517
  %v2549 = vunpack.c.l.b16 %v1518
  %v2550 = vunpack.c.l.b16 %v1519
  %v2551 = vunpack.c.l.b16 %v1520
  %v2552 = vunpack.c.l.b16 %v1521
  %v2553 = vunpack.c.l.b16 %v1522
  %v2554 = vunpack.c.l.b16 %v1523
  %v2555 = vunpack.c.l.b16 %v1524
  %v2556 = vpack.c.b16 %v2045, %v2044
  %v2557 = vpack.c.b16 %v2047, %v2046
  %v2558 = vpack.c.b16 %v2049, %v2048
  %v2559 = vpack.c.b16 %v2051, %v2050
  %v2560 = vpack.c.b16 %v2053, %v2052
  %v2561 = vpack.c.b16 %v2055, %v2054
  %v2562 = vpack.c.b16 %v2057, %v2056
  %v2563 = vpack.c.b16 %v2059, %v2058
  %v2564 = vpack.c.b16 %v2061, %v2060
  %v2565 = vpack.c.b16 %v2063, %v2062
  %v2566 = vpack.c.b16 %v2065, %v2064
  %v2567 = vpack.c.b16 %v2067, %v2066
  %v2568 = vpack.c.b16 %v2069, %v2068
  %v2569 = vpack.c.b16 %v2071, %v2070
  %v2570 = vpack.c.b16 %v2073, %v2072
  %v2571 = vpack.c.b16 %v2075, %v2074
  %v2572 = vpack.c.b16 %v2077, %v2076
  %v2573 = vpack.c.b16 %v2079, %v2078
  %v2574 = vpack.c.b16 %v2081, %v2080
  %v2575 = vpack.c.b16 %v2083, %v2082
  %v2576 = vpack.c.b16 %v2085, %v2084
  %v2577 = vpack.c.b16 %v2087, %v2086
  %v2578 = vpack.c.b16 %v2089, %v2088
  %v2579 = vpack.c.b16 %v2091, %v2090
  %v2580 = vpack.c.b16 %v2093, %v2092
  %v2581 = vpack.c.b16 %v2095, %v2094
  %v2582 = vpack.c.b16 %v2097, %v2096
  %v2583 = vpack.c.b16 %v2099, %v2098
  %v2584 = vpack.c.b16 %v2101, %v2100
  %v2585 = vpack.c.b16 %v2103, %v2102
  %v2586 = vpack.c.b16 %v2105, %v2104
  %v2587 = vpack.c.b16 %v2107, %v2106
  %v2588 = vpack.c.b16 %v2109, %v2108
  %v2589 = vpack.c.b16 %v2111, %v2110
  %v2590 = vpack.c.b16 %v2113, %v2112
  %v2591 = vpack.c.b16 %v2115, %v2114
  %v2592 = vpack.c.b16 %v2117, %v2116
  %v2593 = vpack.c.b16 %v2119, %v2118
  %v2594 = vpack.c.b16 %v2121, %v2120
  %v2595 = vpack.c.b16 %v2123, %v2122
  %v2596 = vpack.c.b16 %v2125, %v2124
  %v2597 = vpack.c.b16 %v2127, %v2126
  %v2598 = vpack.c.b16 %v2129, %v2128
  %v2599 = vpack.c.b16 %v2131, %v2130
  %v2600 = vpack.c.b16 %v2133, %v2132
  %v2601 = vpack.c.b16 %v2135, %v2134
  %v2602 = vpack.c.b16 %v2137, %v2136
  %v2603 = vpack.c.b16 %v2139, %v2138
  %v2604 = vpack.c.b16 %v2141, %v2140
  %v2605 = vpack.c.b16 %v2143, %v2142
  %v2606 = vpack.c.b16 %v2145, %v2144
  %v2607 = vpack.c.b16 %v2147, %v2146
  %v2608 = vpack.c.b16 %v2149, %v2148
  %v2609 = vpack.c.b16 %v2151, %v2150
  %v2610 = vpack.c.b16 %v2153, %v2152
  %v2611 = vpack.c.b16 %v2155, %v2154
  %v2612 = vpack.c.b16 %v2157, %v2156
  %v2613 = vpack.c.b16 %v2159, %v2158
  %v2614 = vpack.c.b16 %v2161, %v2160
  %v2615 = vpack.c.b16 %v2163, %v2162
  %v2616 = vpack.c.b16 %v2165, %v2164
  %v2617 = vpack.c.b16 %v2167, %v2166
  %v2618 = vpack.c.b16 %v2169, %v2168
  %v2619 = vpack.c.b16 %v2171, %v2170
  %v2620 = vpack.c.b16 %v2173, %v2172
  %v2621 = vpack.c.b16 %v2175, %v2174
  %v2622 = vpack.c.b16 %v2177, %v2176
  %v2623 = vpack.c.b16 %v2179, %v2178
  %v2624 = vpack.c.b16 %v2181, %v2180
  %v2625 = vpack.c.b16 %v2183, %v2182
  %v2626 = vpack.c.b16 %v2185, %v2184
  %v2627 = vpack.c.b16 %v2187, %v2186
  %v2628 = vpack.c.b16 %v2189, %v2188
  %v2629 = vpack.c.b16 %v2191, %v2190
  %v2630 = vpack.c.b16 %v2193, %v2192
  %v2631 = vpack.c.b16 %v2195, %v2194
  %v2632 = vpack.c.b16 %v2197, %v2196
  %v2633 = vpack.c.b16 %v2199, %v2198
  %v2634 = vpack.c.b16 %v2201, %v2200
  %v2635 = vpack.c.b16 %v2203, %v2202
  %v2636 = vpack.c.b16 %v2205, %v2204
  %v2637 = vpack.c.b16 %v2207, %v2206
  %v2638 = vpack.c.b16 %v2209, %v2208
  %v2639 = vpack.c.b16 %v2211, %v2210
  %v2640 = vpack.c.b16 %v2213, %v2212
  %v2641 = vpack.c.b16 %v2215, %v2214
  %v2642 = vpack.c.b16 %v2217, %v2216
  %v2643 = vpack.c.b16 %v2219, %v2218
  %v2644 = vpack.c.b16 %v2221, %v2220
  %v2645 = vpack.c.b16 %v2223, %v2222
  %v2646 = vpack.c.b16 %v2225, %v2224
  %v2647 = vpack.c.b16 %v2227, %v2226
  %v2648 = vpack.c.b16 %v2229, %v2228
  %v2649 = vpack.c.b16 %v2231, %v2230
  %v2650 = vpack.c.b16 %v2233, %v2232
  %v2651 = vpack.c.b16 %v2235, %v2234
  %v2652 = vpack.c.b16 %v2237, %v2236
  %v2653 = vpack.c.b16 %v2239, %v2238
  %v2654 = vpack.c.b16 %v2241, %v2240
  %v2655 = vpack.c.b16 %v2243, %v2242
  %v2656 = vpack.c.b16 %v2245, %v2244
  %v2657 = vpack.c.b16 %v2247, %v2246
  %v2658 = vpack.c.b16 %v2249, %v2248
  %v2659 = vpack.c.b16 %v2251, %v2250
  %v2660 = vpack.c.b16 %v2253, %v2252
  %v2661 = vpack.c.b16 %v2255, %v2254
  %v2662 = vpack.c.b16 %v2257, %v2256
  %v2663 = vpack.c.b16 %v2259, %v2258
  %v2664 = vpack.c.b16 %v2261, %v2260
  %v2665 = vpack.c.b16 %v2263, %v2262
  %v2666 = vpack.c.b16 %v2265, %v2264
  %v2667 = vpack.c.b16 %v2267, %v2266
  %v2668 = vpack.c.b16 %v2269, %v2268
  %v2669 = vpack.c.b16 %v2271, %v2270
  %v2670 = vpack.c.b16 %v2273, %v2272
  %v2671 = vpack.c.b16 %v2275, %v2274
  %v2672 = vpack.c.b16 %v2277, %v2276
  %v2673 = vpack.c.b16 %v2279, %v2278
  %v2674 = vpack.c.b16 %v2281, %v2280
  %v2675 = vpack.c.b16 %v2283, %v2282
  %v2676 = vpack.c.b16 %v2285, %v2284
  %v2677 = vpack.c.b16 %v2287, %v2286
  %v2678 = vpack.c.b16 %v2289, %v2288
  %v2679 = vpack.c.b16 %v2291, %v2290
  %v2680 = vpack.c.b16 %v2293, %v2292
  %v2681 = vpack.c.b16 %v2295, %v2294
  %v2682 = vpack.c.b16 %v2297, %v2296
  %v2683 = vpack.c.b16 %v2299, %v2298
  %v2684 = vpack.c.b16 %v2301, %v2300
  %v2685 = vpack.c.b16 %v2303, %v2302
  %v2686 = vpack.c.b16 %v2305, %v2304
  %v2687 = vpack.c.b16 %v2307, %v2306
  %v2688 = vpack.c.b16 %v2309, %v2308
  %v2689 = vpack.c.b16 %v2311, %v2310
  %v2690 = vpack.c.b16 %v2313, %v2312
  %v2691 = vpack.c.b16 %v2315, %v2314
  %v2692 = vpack.c.b16 %v2317, %v2316
  %v2693 = vpack.c.b16 %v2319, %v2318
  %v2694 = vpack.c.b16 %v2321, %v2320
  %v2695 = vpack.c.b16 %v2323, %v2322
  %v2696 = vpack.c.b16 %v2325, %v2324
  %v2697 = vpack.c.b16 %v2327, %v2326
  %v2698 = vpack.c.b16 %v2329, %v2328
  %v2699 = vpack.c.b16 %v2331, %v2330
  %v2700 = vpack.c.b16 %v2333, %v2332
  %v2701 = vpack.c.b16 %v2335, %v2334
  %v2702 = vpack.c.b16 %v2337, %v2336
  %v2703 = vpack.c.b16 %v2339, %v2338
  %v2704 = vpack.c.b16 %v2341, %v2340
  %v2705 = vpack.c.b16 %v2343, %v2342
  %v2706 = vpack.c.b16 %v2345, %v2344
  %v2707 = vpack.c.b16 %v2347, %v2346
  %v2708 = vpack.c.b16 %v2349, %v2348
  %v2709 = vpack.c.b16 %v2351, %v2350
  %v2710 = vpack.c.b16 %v2353, %v2352
  %v2711 = vpack.c.b16 %v2355, %v2354
  %v2712 = vpack.c.b16 %v2357, %v2356
  %v2713 = vpack.c.b16 %v2359, %v2358
  %v2714 = vpack.c.b16 %v2361, %v2360
  %v2715 = vpack.c.b16 %v2363, %v2362
  %v2716 = vpack.c.b16 %v2365, %v2364
  %v2717 = vpack.c.b16 %v2367, %v2366
  %v2718 = vpack.c.b16 %v2369, %v2368
  %v2719 = vpack.c.b16 %v2371, %v2370
  %v2720 = vpack.c.b16 %v2373, %v2372
  %v2721 = vpack.c.b16 %v2375, %v2374
  %v2722 = vpack.c.b16 %v2377, %v2376
  %v2723 = vpack.c.b16 %v2379, %v2378
  %v2724 = vpack.c.b16 %v2381, %v2380
  %v2725 = vpack.c.b16 %v2383, %v2382
  %v2726 = vpack.c.b16 %v2385, %v2384
  %v2727 = vpack.c.b16 %v2387, %v2386
  %v2728 = vpack.c.b16 %v2389, %v2388
  %v2729 = vpack.c.b16 %v2391, %v2390
  %v2730 = vpack.c.b16 %v2393, %v2392
  %v2731 = vpack.c.b16 %v2395, %v2394
  %v2732 = vpack.c.b16 %v2397, %v2396
  %v2733 = vpack.c.b16 %v2399, %v2398
  %v2734 = vpack.c.b16 %v2401, %v2400
  %v2735 = vpack.c.b16 %v2403, %v2402
  %v2736 = vpack.c.b16 %v2405, %v2404
  %v2737 = vpack.c.b16 %v2407, %v2406
  %v2738 = vpack.c.b16 %v2409, %v2408
  %v2739 = vpack.c.b16 %v2411, %v2410
  %v2740 = vpack.c.b16 %v2413, %v2412
  %v2741 = vpack.c.b16 %v2415, %v2414
  %v2742 = vpack.c.b16 %v2417, %v2416
  %v2743 = vpack.c.b16 %v2419, %v2418
  %v2744 = vpack.c.b16 %v2421, %v2420
  %v2745 = vpack.c.b16 %v2423, %v2422
  %v2746 = vpack.c.b16 %v2425, %v2424
  %v2747 = vpack.c.b16 %v2427, %v2426
  %v2748 = vpack.c.b16 %v2429, %v2428
  %v2749 = vpack.c.b16 %v2431, %v2430
  %v2750 = vpack.c.b16 %v2433, %v2432
  %v2751 = vpack.c.b16 %v2435, %v2434
  %v2752 = vpack.c.b16 %v2437, %v2436
  %v2753 = vpack.c.b16 %v2439, %v2438
  %v2754 = vpack.c.b16 %v2441, %v2440
  %v2755 = vpack.c.b16 %v2443, %v2442
  %v2756 = vpack.c.b16 %v2445, %v2444
  %v2757 = vpack.c.b16 %v2447, %v2446
  %v2758 = vpack.c.b16 %v2449, %v2448
  %v2759 = vpack.c.b16 %v2451, %v2450
  %v2760 = vpack.c.b16 %v2453, %v2452
  %v2761 = vpack.c.b16 %v2455, %v2454
  %v2762 = vpack.c.b16 %v2457, %v2456
  %v2763 = vpack.c.b16 %v2459, %v2458
  %v2764 = vpack.c.b16 %v2461, %v2460
  %v2765 = vpack.c.b16 %v2463, %v2462
  %v2766 = vpack.c.b16 %v2465, %v2464
  %v2767 = vpack.c.b16 %v2467, %v2466
  %v2768 = vpack.c.b16 %v2469, %v2468
  %v2769 = vpack.c.b16 %v2471, %v2470
  %v2770 = vpack.c.b16 %v2473, %v2472
  %v2771 = vpack.c.b16 %v2475, %v2474
  %v2772 = vpack.c.b16 %v2477, %v2476
  %v2773 = vpack.c.b16 %v2479, %v2478
  %v2774 = vpack.c.b16 %v2481, %v2480
  %v2775 = vpack.c.b16 %v2483, %v2482
  %v2776 = vpack.c.b16 %v2485, %v2484
  %v2777 = vpack.c.b16 %v2487, %v2486
  %v2778 = vpack.c.b16 %v2489, %v2488
  %v2779 = vpack.c.b16 %v2491, %v2490
  %v2780 = vpack.c.b16 %v2493, %v2492
  %v2781 = vpack.c.b16 %v2495, %v2494
  %v2782 = vpack.c.b16 %v2497, %v2496
  %v2783 = vpack.c.b16 %v2499, %v2498
  %v2784 = vpack.c.b16 %v2501, %v2500
  %v2785 = vpack.c.b16 %v2503, %v2502
  %v2786 = vpack.c.b16 %v2505, %v2504
  %v2787 = vpack.c.b16 %v2507, %v2506
  %v2788 = vpack.c.b16 %v2509, %v2508
  %v2789 = vpack.c.b16 %v2511, %v2510
  %v2790 = vpack.c.b16 %v2513, %v2512
  %v2791 = vpack.c.b16 %v2515, %v2514
  %v2792 = vpack.c.b16 %v2517, %v2516
  %v2793 = vpack.c.b16 %v2519, %v2518
  %v2794 = vpack.c.b16 %v2521, %v2520
  %v2795 = vpack.c.b16 %v2523, %v2522
  %v2796 = vpack.c.b16 %v2525, %v2524
  %v2797 = vpack.c.b16 %v2527, %v2526
  %v2798 = vpack.c.b16 %v2529, %v2528
  %v2799 = vpack.c.b16 %v2531, %v2530
  %v2800 = vpack.c.b16 %v2533, %v2532
  %v2801 = vpack.c.b16 %v2535, %v2534
  %v2802 = vpack.c.b16 %v2537, %v2536
  %v2803 = vpack.c.b16 %v2539, %v2538
  %v2804 = vpack.c.b16 %v2541, %v2540
  %v2805 = vpack.c.b16 %v2543, %v2542
  %v2806 = vpack.c.b16 %v2545, %v2544
  %v2807 = vpack.c.b16 %v2547, %v2546
  %v2808 = vpack.c.b16 %v2549, %v2548
  %v2809 = vpack.c.b16 %v2551, %v2550
  %v2810 = vpack.c.b16 %v2553, %v2552
  %v2811 = vpack.c.b16 %v2555, %v2554
  %3068 = vmatprep.subr.bf16.mxu0 0
  %3069 = vmatpush1.bf16.msra.mxu0 %v2556
  %3070 = vmatprep.subr.bf16.mxu0 0
  %3071 = vmatpush1.bf16.msra.mxu0 %v2557
  %3072 = vmatprep.subr.bf16.mxu0 0
  %3073 = vmatpush1.bf16.msra.mxu0 %v2558
  %3074 = vmatprep.subr.bf16.mxu0 0
  %3075 = vmatpush1.bf16.msra.mxu0 %v2559
  %3076 = vmatprep.subr.bf16.mxu0 0
  %3077 = vmatpush1.bf16.msra.mxu0 %v2560
  %3078 = vmatprep.subr.bf16.mxu0 0
  %3079 = vmatpush1.bf16.msra.mxu0 %v2561
  %3080 = vmatprep.subr.bf16.mxu0 0
  %3081 = vmatpush1.bf16.msra.mxu0 %v2562
  %3082 = vmatprep.subr.bf16.mxu0 0
  %3083 = vmatpush1.bf16.msra.mxu0 %v2563
  %3084 = vmatprep.subr.bf16.mxu0 0
  %3085 = vmatpush1.bf16.msra.mxu0 %v2564
  %3086 = vmatprep.subr.bf16.mxu0 0
  %3087 = vmatpush1.bf16.msra.mxu0 %v2565
  %3088 = vmatprep.subr.bf16.mxu0 0
  %3089 = vmatpush1.bf16.msra.mxu0 %v2566
  %3090 = vmatprep.subr.bf16.mxu0 0
  %3091 = vmatpush1.bf16.msra.mxu0 %v2567
  %3092 = vmatprep.subr.bf16.mxu0 0
  %3093 = vmatpush1.bf16.msra.mxu0 %v2568
  %3094 = vmatprep.subr.bf16.mxu0 0
  %3095 = vmatpush1.bf16.msra.mxu0 %v2569
  %3096 = vmatprep.subr.bf16.mxu0 0
  %3097 = vmatpush1.bf16.msra.mxu0 %v2570
  %3098 = vmatprep.subr.bf16.mxu0 0
  %3099 = vmatpush1.bf16.msra.mxu0 %v2571
  %3100 = vmatprep.mubr.bf16.mxu0 %v982
  %3101 = vmatmul.mubr.bf16.gmra.mrb[0].mxu0 %v981
  %v3102 = vpop.f32.mrb[0].mxu0
  %v3103 = vadd.f32 %v1530, %v3102
  %v3104 = vpop.f32.mrb[0].mxu0
  %v3105 = vpop.f32.mrb[0].mxu0
  %v3106 = vpop.f32.mrb[0].mxu0
  %3107 = vdwg.mxu0
  %3108 = vmatprep.subr.bf16.mxu0 0
  %3109 = vmatpush1.bf16.msra.mxu0 %v2572
  %3110 = vmatprep.subr.bf16.mxu0 0
  %3111 = vmatpush1.bf16.msra.mxu0 %v2573
  %3112 = vmatprep.subr.bf16.mxu0 0
  %3113 = vmatpush1.bf16.msra.mxu0 %v2574
  %3114 = vmatprep.subr.bf16.mxu0 0
  %3115 = vmatpush1.bf16.msra.mxu0 %v2575
  %3116 = vmatprep.subr.bf16.mxu0 0
  %3117 = vmatpush1.bf16.msra.mxu0 %v2576
  %3118 = vmatprep.subr.bf16.mxu0 0
  %3119 = vmatpush1.bf16.msra.mxu0 %v2577
  %3120 = vmatprep.subr.bf16.mxu0 0
  %3121 = vmatpush1.bf16.msra.mxu0 %v2578
  %3122 = vmatprep.subr.bf16.mxu0 0
  %3123 = vmatpush1.bf16.msra.mxu0 %v2579
  %3124 = vmatprep.subr.bf16.mxu0 0
  %3125 = vmatpush1.bf16.msra.mxu0 %v2580
  %3126 = vmatprep.subr.bf16.mxu0 0
  %3127 = vmatpush1.bf16.msra.mxu0 %v2581
  %3128 = vmatprep.subr.bf16.mxu0 0
  %3129 = vmatpush1.bf16.msra.mxu0 %v2582
  %3130 = vmatprep.subr.bf16.mxu0 0
  %3131 = vmatpush1.bf16.msra.mxu0 %v2583
  %3132 = vmatprep.subr.bf16.mxu0 0
  %3133 = vmatpush1.bf16.msra.mxu0 %v2584
  %3134 = vmatprep.subr.bf16.mxu0 0
  %3135 = vmatpush1.bf16.msra.mxu0 %v2585
  %3136 = vmatprep.subr.bf16.mxu0 0
  %3137 = vmatpush1.bf16.msra.mxu0 %v2586
  %3138 = vmatprep.subr.bf16.mxu0 0
  %3139 = vmatpush1.bf16.msra.mxu0 %v2587
  %3140 = vmatprep.mubr.bf16.mxu0 %v984
  %3141 = vmatmul.mubr.bf16.gmra.mrb[0].mxu0 %v983
  %v3142 = vpop.f32.mrb[0].mxu0
  %v3143 = vadd.f32 %v3103, %v3142
  %v3144 = vpop.f32.mrb[0].mxu0
  %v3145 = vpop.f32.mrb[0].mxu0
  %v3146 = vpop.f32.mrb[0].mxu0
  %3147 = vdwg.mxu0
  %3148 = vmatprep.subr.bf16.mxu0 0
  %3149 = vmatpush1.bf16.msra.mxu0 %v2588
  %3150 = vmatprep.subr.bf16.mxu0 0
  %3151 = vmatpush1.bf16.msra.mxu0 %v2589
  %3152 = vmatprep.subr.bf16.mxu0 0
  %3153 = vmatpush1.bf16.msra.mxu0 %v2590
  %3154 = vmatprep.subr.bf16.mxu0 0
  %3155 = vmatpush1.bf16.msra.mxu0 %v2591
  %3156 = vmatprep.subr.bf16.mxu0 0
  %3157 = vmatpush1.bf16.msra.mxu0 %v2592
  %3158 = vmatprep.subr.bf16.mxu0 0
  %3159 = vmatpush1.bf16.msra.mxu0 %v2593
  %3160 = vmatprep.subr.bf16.mxu0 0
  %3161 = vmatpush1.bf16.msra.mxu0 %v2594
  %3162 = vmatprep.subr.bf16.mxu0 0
  %3163 = vmatpush1.bf16.msra.mxu0 %v2595
  %3164 = vmatprep.subr.bf16.mxu0 0
  %3165 = vmatpush1.bf16.msra.mxu0 %v2596
  %3166 = vmatprep.subr.bf16.mxu0 0
  %3167 = vmatpush1.bf16.msra.mxu0 %v2597
  %3168 = vmatprep.subr.bf16.mxu0 0
  %3169 = vmatpush1.bf16.msra.mxu0 %v2598
  %3170 = vmatprep.subr.bf16.mxu0 0
  %3171 = vmatpush1.bf16.msra.mxu0 %v2599
  %3172 = vmatprep.subr.bf16.mxu0 0
  %3173 = vmatpush1.bf16.msra.mxu0 %v2600
  %3174 = vmatprep.subr.bf16.mxu0 0
  %3175 = vmatpush1.bf16.msra.mxu0 %v2601
  %3176 = vmatprep.subr.bf16.mxu0 0
  %3177 = vmatpush1.bf16.msra.mxu0 %v2602
  %3178 = vmatprep.subr.bf16.mxu0 0
  %3179 = vmatpush1.bf16.msra.mxu0 %v2603
  %3180 = vmatprep.mubr.bf16.mxu0 %v986
  %3181 = vmatmul.mubr.bf16.gmra.mrb[0].mxu0 %v985
  %v3182 = vpop.f32.mrb[0].mxu0
  %v3183 = vadd.f32 %v3143, %v3182
  %v3184 = vpop.f32.mrb[0].mxu0
  %v3185 = vpop.f32.mrb[0].mxu0
  %v3186 = vpop.f32.mrb[0].mxu0
  %3187 = vdwg.mxu0
  %3188 = vmatprep.subr.bf16.mxu0 0
  %3189 = vmatpush1.bf16.msra.mxu0 %v2604
  %3190 = vmatprep.subr.bf16.mxu0 0
  %3191 = vmatpush1.bf16.msra.mxu0 %v2605
  %3192 = vmatprep.subr.bf16.mxu0 0
  %3193 = vmatpush1.bf16.msra.mxu0 %v2606
  %3194 = vmatprep.subr.bf16.mxu0 0
  %3195 = vmatpush1.bf16.msra.mxu0 %v2607
  %3196 = vmatprep.subr.bf16.mxu0 0
  %3197 = vmatpush1.bf16.msra.mxu0 %v2608
  %3198 = vmatprep.subr.bf16.mxu0 0
  %3199 = vmatpush1.bf16.msra.mxu0 %v2609
  %3200 = vmatprep.subr.bf16.mxu0 0
  %3201 = vmatpush1.bf16.msra.mxu0 %v2610
  %3202 = vmatprep.subr.bf16.mxu0 0
  %3203 = vmatpush1.bf16.msra.mxu0 %v2611
  %3204 = vmatprep.subr.bf16.mxu0 0
  %3205 = vmatpush1.bf16.msra.mxu0 %v2612
  %3206 = vmatprep.subr.bf16.mxu0 0
  %3207 = vmatpush1.bf16.msra.mxu0 %v2613
  %3208 = vmatprep.subr.bf16.mxu0 0
  %3209 = vmatpush1.bf16.msra.mxu0 %v2614
  %3210 = vmatprep.subr.bf16.mxu0 0
  %3211 = vmatpush1.bf16.msra.mxu0 %v2615
  %3212 = vmatprep.subr.bf16.mxu0 0
  %3213 = vmatpush1.bf16.msra.mxu0 %v2616
  %3214 = vmatprep.subr.bf16.mxu0 0
  %3215 = vmatpush1.bf16.msra.mxu0 %v2617
  %3216 = vmatprep.subr.bf16.mxu0 0
  %3217 = vmatpush1.bf16.msra.mxu0 %v2618
  %3218 = vmatprep.subr.bf16.mxu0 0
  %3219 = vmatpush1.bf16.msra.mxu0 %v2619
  %3220 = vmatprep.mubr.bf16.mxu0 %v988
  %3221 = vmatmul.mubr.bf16.gmra.mrb[0].mxu0 %v987
  %v3222 = vpop.f32.mrb[0].mxu0
  %v3223 = vadd.f32 %v3183, %v3222
  %v3224 = vpop.f32.mrb[0].mxu0
  %v3225 = vpop.f32.mrb[0].mxu0
  %v3226 = vpop.f32.mrb[0].mxu0
  %3227 = vdwg.mxu0
  %3228 = vmatprep.subr.bf16.mxu0 0
  %3229 = vmatpush1.bf16.msra.mxu0 %v2620
  %3230 = vmatprep.subr.bf16.mxu0 0
  %3231 = vmatpush1.bf16.msra.mxu0 %v2621
  %3232 = vmatprep.subr.bf16.mxu0 0
  %3233 = vmatpush1.bf16.msra.mxu0 %v2622
  %3234 = vmatprep.subr.bf16.mxu0 0
  %3235 = vmatpush1.bf16.msra.mxu0 %v2623
  %3236 = vmatprep.subr.bf16.mxu0 0
  %3237 = vmatpush1.bf16.msra.mxu0 %v2624
  %3238 = vmatprep.subr.bf16.mxu0 0
  %3239 = vmatpush1.bf16.msra.mxu0 %v2625
  %3240 = vmatprep.subr.bf16.mxu0 0
  %3241 = vmatpush1.bf16.msra.mxu0 %v2626
  %3242 = vmatprep.subr.bf16.mxu0 0
  %3243 = vmatpush1.bf16.msra.mxu0 %v2627
  %3244 = vmatprep.subr.bf16.mxu0 0
  %3245 = vmatpush1.bf16.msra.mxu0 %v2628
  %3246 = vmatprep.subr.bf16.mxu0 0
  %3247 = vmatpush1.bf16.msra.mxu0 %v2629
  %3248 = vmatprep.subr.bf16.mxu0 0
  %3249 = vmatpush1.bf16.msra.mxu0 %v2630
  %3250 = vmatprep.subr.bf16.mxu0 0
  %3251 = vmatpush1.bf16.msra.mxu0 %v2631
  %3252 = vmatprep.subr.bf16.mxu0 0
  %3253 = vmatpush1.bf16.msra.mxu0 %v2632
  %3254 = vmatprep.subr.bf16.mxu0 0
  %3255 = vmatpush1.bf16.msra.mxu0 %v2633
  %3256 = vmatprep.subr.bf16.mxu0 0
  %3257 = vmatpush1.bf16.msra.mxu0 %v2634
  %3258 = vmatprep.subr.bf16.mxu0 0
  %3259 = vmatpush1.bf16.msra.mxu0 %v2635
  %3260 = vmatprep.mubr.bf16.mxu0 %v990
  %3261 = vmatmul.mubr.bf16.gmra.mrb[0].mxu0 %v989
  %v3262 = vpop.f32.mrb[0].mxu0
  %v3263 = vadd.f32 %v3223, %v3262
  %v3264 = vpop.f32.mrb[0].mxu0
  %v3265 = vpop.f32.mrb[0].mxu0
  %v3266 = vpop.f32.mrb[0].mxu0
  %3267 = vdwg.mxu0
  %3268 = vmatprep.subr.bf16.mxu0 0
  %3269 = vmatpush1.bf16.msra.mxu0 %v2636
  %3270 = vmatprep.subr.bf16.mxu0 0
  %3271 = vmatpush1.bf16.msra.mxu0 %v2637
  %3272 = vmatprep.subr.bf16.mxu0 0
  %3273 = vmatpush1.bf16.msra.mxu0 %v2638
  %3274 = vmatprep.subr.bf16.mxu0 0
  %3275 = vmatpush1.bf16.msra.mxu0 %v2639
  %3276 = vmatprep.subr.bf16.mxu0 0
  %3277 = vmatpush1.bf16.msra.mxu0 %v2640
  %3278 = vmatprep.subr.bf16.mxu0 0
  %3279 = vmatpush1.bf16.msra.mxu0 %v2641
  %3280 = vmatprep.subr.bf16.mxu0 0
  %3281 = vmatpush1.bf16.msra.mxu0 %v2642
  %3282 = vmatprep.subr.bf16.mxu0 0
  %3283 = vmatpush1.bf16.msra.mxu0 %v2643
  %3284 = vmatprep.subr.bf16.mxu0 0
  %3285 = vmatpush1.bf16.msra.mxu0 %v2644
  %3286 = vmatprep.subr.bf16.mxu0 0
  %3287 = vmatpush1.bf16.msra.mxu0 %v2645
  %3288 = vmatprep.subr.bf16.mxu0 0
  %3289 = vmatpush1.bf16.msra.mxu0 %v2646
  %3290 = vmatprep.subr.bf16.mxu0 0
  %3291 = vmatpush1.bf16.msra.mxu0 %v2647
  %3292 = vmatprep.subr.bf16.mxu0 0
  %3293 = vmatpush1.bf16.msra.mxu0 %v2648
  %3294 = vmatprep.subr.bf16.mxu0 0
  %3295 = vmatpush1.bf16.msra.mxu0 %v2649
  %3296 = vmatprep.subr.bf16.mxu0 0
  %3297 = vmatpush1.bf16.msra.mxu0 %v2650
  %3298 = vmatprep.subr.bf16.mxu0 0
  %3299 = vmatpush1.bf16.msra.mxu0 %v2651
  %3300 = vmatprep.mubr.bf16.mxu0 %v992
  %3301 = vmatmul.mubr.bf16.gmra.mrb[0].mxu0 %v991
  %v3302 = vpop.f32.mrb[0].mxu0
  %v3303 = vadd.f32 %v3263, %v3302
  %v3304 = vpop.f32.mrb[0].mxu0
  %v3305 = vpop.f32.mrb[0].mxu0
  %v3306 = vpop.f32.mrb[0].mxu0
  %3307 = vdwg.mxu0
  %3308 = vmatprep.subr.bf16.mxu0 0
  %3309 = vmatpush1.bf16.msra.mxu0 %v2652
  %3310 = vmatprep.subr.bf16.mxu0 0
  %3311 = vmatpush1.bf16.msra.mxu0 %v2653
  %3312 = vmatprep.subr.bf16.mxu0 0
  %3313 = vmatpush1.bf16.msra.mxu0 %v2654
  %3314 = vmatprep.subr.bf16.mxu0 0
  %3315 = vmatpush1.bf16.msra.mxu0 %v2655
  %3316 = vmatprep.subr.bf16.mxu0 0
  %3317 = vmatpush1.bf16.msra.mxu0 %v2656
  %3318 = vmatprep.subr.bf16.mxu0 0
  %3319 = vmatpush1.bf16.msra.mxu0 %v2657
  %3320 = vmatprep.subr.bf16.mxu0 0
  %3321 = vmatpush1.bf16.msra.mxu0 %v2658
  %3322 = vmatprep.subr.bf16.mxu0 0
  %3323 = vmatpush1.bf16.msra.mxu0 %v2659
  %3324 = vmatprep.subr.bf16.mxu0 0
  %3325 = vmatpush1.bf16.msra.mxu0 %v2660
  %3326 = vmatprep.subr.bf16.mxu0 0
  %3327 = vmatpush1.bf16.msra.mxu0 %v2661
  %3328 = vmatprep.subr.bf16.mxu0 0
  %3329 = vmatpush1.bf16.msra.mxu0 %v2662
  %3330 = vmatprep.subr.bf16.mxu0 0
  %3331 = vmatpush1.bf16.msra.mxu0 %v2663
  %3332 = vmatprep.subr.bf16.mxu0 0
  %3333 = vmatpush1.bf16.msra.mxu0 %v2664
  %3334 = vmatprep.subr.bf16.mxu0 0
  %3335 = vmatpush1.bf16.msra.mxu0 %v2665
  %3336 = vmatprep.subr.bf16.mxu0 0
  %3337 = vmatpush1.bf16.msra.mxu0 %v2666
  %3338 = vmatprep.subr.bf16.mxu0 0
  %3339 = vmatpush1.bf16.msra.mxu0 %v2667
  %3340 = vmatprep.mubr.bf16.mxu0 %v994
  %3341 = vmatmul.mubr.bf16.gmra.mrb[0].mxu0 %v993
  %v3342 = vpop.f32.mrb[0].mxu0
  %v3343 = vadd.f32 %v3303, %v3342
  %v3344 = vpop.f32.mrb[0].mxu0
  %v3345 = vpop.f32.mrb[0].mxu0
  %v3346 = vpop.f32.mrb[0].mxu0
  %3347 = vdwg.mxu0
  %3348 = vmatprep.subr.bf16.mxu0 0
  %3349 = vmatpush1.bf16.msra.mxu0 %v2668
  %3350 = vmatprep.subr.bf16.mxu0 0
  %3351 = vmatpush1.bf16.msra.mxu0 %v2669
  %3352 = vmatprep.subr.bf16.mxu0 0
  %3353 = vmatpush1.bf16.msra.mxu0 %v2670
  %3354 = vmatprep.subr.bf16.mxu0 0
  %3355 = vmatpush1.bf16.msra.mxu0 %v2671
  %3356 = vmatprep.subr.bf16.mxu0 0
  %3357 = vmatpush1.bf16.msra.mxu0 %v2672
  %3358 = vmatprep.subr.bf16.mxu0 0
  %3359 = vmatpush1.bf16.msra.mxu0 %v2673
  %3360 = vmatprep.subr.bf16.mxu0 0
  %3361 = vmatpush1.bf16.msra.mxu0 %v2674
  %3362 = vmatprep.subr.bf16.mxu0 0
  %3363 = vmatpush1.bf16.msra.mxu0 %v2675
  %3364 = vmatprep.subr.bf16.mxu0 0
  %3365 = vmatpush1.bf16.msra.mxu0 %v2676
  %3366 = vmatprep.subr.bf16.mxu0 0
  %3367 = vmatpush1.bf16.msra.mxu0 %v2677
  %3368 = vmatprep.subr.bf16.mxu0 0
  %3369 = vmatpush1.bf16.msra.mxu0 %v2678
  %3370 = vmatprep.subr.bf16.mxu0 0
  %3371 = vmatpush1.bf16.msra.mxu0 %v2679
  %3372 = vmatprep.subr.bf16.mxu0 0
  %3373 = vmatpush1.bf16.msra.mxu0 %v2680
  %3374 = vmatprep.subr.bf16.mxu0 0
  %3375 = vmatpush1.bf16.msra.mxu0 %v2681
  %3376 = vmatprep.subr.bf16.mxu0 0
  %3377 = vmatpush1.bf16.msra.mxu0 %v2682
  %3378 = vmatprep.subr.bf16.mxu0 0
  %3379 = vmatpush1.bf16.msra.mxu0 %v2683
  %3380 = vmatprep.mubr.bf16.mxu0 %v996
  %3381 = vmatmul.mubr.bf16.gmra.mrb[0].mxu0 %v995
  %v3382 = vpop.f32.mrb[0].mxu0
  %v3383 = vadd.f32 %v3343, %v3382
  %v3384 = vpop.f32.mrb[0].mxu0
  %v3385 = vpop.f32.mrb[0].mxu0
  %v3386 = vpop.f32.mrb[0].mxu0
  %3387 = vdwg.mxu0
  %3388 = vmatprep.subr.bf16.mxu0 0
  %3389 = vmatpush1.bf16.msra.mxu0 %v2684
  %3390 = vmatprep.subr.bf16.mxu0 0
  %3391 = vmatpush1.bf16.msra.mxu0 %v2685
  %3392 = vmatprep.subr.bf16.mxu0 0
  %3393 = vmatpush1.bf16.msra.mxu0 %v2686
  %3394 = vmatprep.subr.bf16.mxu0 0
  %3395 = vmatpush1.bf16.msra.mxu0 %v2687
  %3396 = vmatprep.subr.bf16.mxu0 0
  %3397 = vmatpush1.bf16.msra.mxu0 %v2688
  %3398 = vmatprep.subr.bf16.mxu0 0
  %3399 = vmatpush1.bf16.msra.mxu0 %v2689
  %3400 = vmatprep.subr.bf16.mxu0 0
  %3401 = vmatpush1.bf16.msra.mxu0 %v2690
  %3402 = vmatprep.subr.bf16.mxu0 0
  %3403 = vmatpush1.bf16.msra.mxu0 %v2691
  %3404 = vmatprep.subr.bf16.mxu0 0
  %3405 = vmatpush1.bf16.msra.mxu0 %v2692
  %3406 = vmatprep.subr.bf16.mxu0 0
  %3407 = vmatpush1.bf16.msra.mxu0 %v2693
  %3408 = vmatprep.subr.bf16.mxu0 0
  %3409 = vmatpush1.bf16.msra.mxu0 %v2694
  %3410 = vmatprep.subr.bf16.mxu0 0
  %3411 = vmatpush1.bf16.msra.mxu0 %v2695
  %3412 = vmatprep.subr.bf16.mxu0 0
  %3413 = vmatpush1.bf16.msra.mxu0 %v2696
  %3414 = vmatprep.subr.bf16.mxu0 0
  %3415 = vmatpush1.bf16.msra.mxu0 %v2697
  %3416 = vmatprep.subr.bf16.mxu0 0
  %3417 = vmatpush1.bf16.msra.mxu0 %v2698
  %3418 = vmatprep.subr.bf16.mxu0 0
  %3419 = vmatpush1.bf16.msra.mxu0 %v2699
  %3420 = vmatprep.mubr.bf16.mxu0 %v998
  %3421 = vmatmul.mubr.bf16.gmra.mrb[0].mxu0 %v997
  %v3422 = vpop.f32.mrb[0].mxu0
  %v3423 = vadd.f32 %v3383, %v3422
  %v3424 = vpop.f32.mrb[0].mxu0
  %v3425 = vpop.f32.mrb[0].mxu0
  %v3426 = vpop.f32.mrb[0].mxu0
  %3427 = vdwg.mxu0
  %3428 = vmatprep.subr.bf16.mxu0 0
  %3429 = vmatpush1.bf16.msra.mxu0 %v2700
  %3430 = vmatprep.subr.bf16.mxu0 0
  %3431 = vmatpush1.bf16.msra.mxu0 %v2701
  %3432 = vmatprep.subr.bf16.mxu0 0
  %3433 = vmatpush1.bf16.msra.mxu0 %v2702
  %3434 = vmatprep.subr.bf16.mxu0 0
  %3435 = vmatpush1.bf16.msra.mxu0 %v2703
  %3436 = vmatprep.subr.bf16.mxu0 0
  %3437 = vmatpush1.bf16.msra.mxu0 %v2704
  %3438 = vmatprep.subr.bf16.mxu0 0
  %3439 = vmatpush1.bf16.msra.mxu0 %v2705
  %3440 = vmatprep.subr.bf16.mxu0 0
  %3441 = vmatpush1.bf16.msra.mxu0 %v2706
  %3442 = vmatprep.subr.bf16.mxu0 0
  %3443 = vmatpush1.bf16.msra.mxu0 %v2707
  %3444 = vmatprep.subr.bf16.mxu0 0
  %3445 = vmatpush1.bf16.msra.mxu0 %v2708
  %3446 = vmatprep.subr.bf16.mxu0 0
  %3447 = vmatpush1.bf16.msra.mxu0 %v2709
  %3448 = vmatprep.subr.bf16.mxu0 0
  %3449 = vmatpush1.bf16.msra.mxu0 %v2710
  %3450 = vmatprep.subr.bf16.mxu0 0
  %3451 = vmatpush1.bf16.msra.mxu0 %v2711
  %3452 = vmatprep.subr.bf16.mxu0 0
  %3453 = vmatpush1.bf16.msra.mxu0 %v2712
  %3454 = vmatprep.subr.bf16.mxu0 0
  %3455 = vmatpush1.bf16.msra.mxu0 %v2713
  %3456 = vmatprep.subr.bf16.mxu0 0
  %3457 = vmatpush1.bf16.msra.mxu0 %v2714
  %3458 = vmatprep.subr.bf16.mxu0 0
  %3459 = vmatpush1.bf16.msra.mxu0 %v2715
  %3460 = vmatprep.mubr.bf16.mxu0 %v1000
  %3461 = vmatmul.mubr.bf16.gmra.mrb[0].mxu0 %v999
  %v3462 = vpop.f32.mrb[0].mxu0
  %v3463 = vadd.f32 %v3423, %v3462
  %v3464 = vpop.f32.mrb[0].mxu0
  %v3465 = vpop.f32.mrb[0].mxu0
  %v3466 = vpop.f32.mrb[0].mxu0
  %3467 = vdwg.mxu0
  %3468 = vmatprep.subr.bf16.mxu0 0
  %3469 = vmatpush1.bf16.msra.mxu0 %v2716
  %3470 = vmatprep.subr.bf16.mxu0 0
  %3471 = vmatpush1.bf16.msra.mxu0 %v2717
  %3472 = vmatprep.subr.bf16.mxu0 0
  %3473 = vmatpush1.bf16.msra.mxu0 %v2718
  %3474 = vmatprep.subr.bf16.mxu0 0
  %3475 = vmatpush1.bf16.msra.mxu0 %v2719
  %3476 = vmatprep.subr.bf16.mxu0 0
  %3477 = vmatpush1.bf16.msra.mxu0 %v2720
  %3478 = vmatprep.subr.bf16.mxu0 0
  %3479 = vmatpush1.bf16.msra.mxu0 %v2721
  %3480 = vmatprep.subr.bf16.mxu0 0
  %3481 = vmatpush1.bf16.msra.mxu0 %v2722
  %3482 = vmatprep.subr.bf16.mxu0 0
  %3483 = vmatpush1.bf16.msra.mxu0 %v2723
  %3484 = vmatprep.subr.bf16.mxu0 0
  %3485 = vmatpush1.bf16.msra.mxu0 %v2724
  %3486 = vmatprep.subr.bf16.mxu0 0
  %3487 = vmatpush1.bf16.msra.mxu0 %v2725
  %3488 = vmatprep.subr.bf16.mxu0 0
  %3489 = vmatpush1.bf16.msra.mxu0 %v2726
  %3490 = vmatprep.subr.bf16.mxu0 0
  %3491 = vmatpush1.bf16.msra.mxu0 %v2727
  %3492 = vmatprep.subr.bf16.mxu0 0
  %3493 = vmatpush1.bf16.msra.mxu0 %v2728
  %3494 = vmatprep.subr.bf16.mxu0 0
  %3495 = vmatpush1.bf16.msra.mxu0 %v2729
  %3496 = vmatprep.subr.bf16.mxu0 0
  %3497 = vmatpush1.bf16.msra.mxu0 %v2730
  %3498 = vmatprep.subr.bf16.mxu0 0
  %3499 = vmatpush1.bf16.msra.mxu0 %v2731
  %3500 = vmatprep.mubr.bf16.mxu0 %v1002
  %3501 = vmatmul.mubr.bf16.gmra.mrb[0].mxu0 %v1001
  %v3502 = vpop.f32.mrb[0].mxu0
  %v3503 = vadd.f32 %v3463, %v3502
  %v3504 = vpop.f32.mrb[0].mxu0
  %v3505 = vpop.f32.mrb[0].mxu0
  %v3506 = vpop.f32.mrb[0].mxu0
  %3507 = vdwg.mxu0
  %3508 = vmatprep.subr.bf16.mxu0 0
  %3509 = vmatpush1.bf16.msra.mxu0 %v2732
  %3510 = vmatprep.subr.bf16.mxu0 0
  %3511 = vmatpush1.bf16.msra.mxu0 %v2733
  %3512 = vmatprep.subr.bf16.mxu0 0
  %3513 = vmatpush1.bf16.msra.mxu0 %v2734
  %3514 = vmatprep.subr.bf16.mxu0 0
  %3515 = vmatpush1.bf16.msra.mxu0 %v2735
  %3516 = vmatprep.subr.bf16.mxu0 0
  %3517 = vmatpush1.bf16.msra.mxu0 %v2736
  %3518 = vmatprep.subr.bf16.mxu0 0
  %3519 = vmatpush1.bf16.msra.mxu0 %v2737
  %3520 = vmatprep.subr.bf16.mxu0 0
  %3521 = vmatpush1.bf16.msra.mxu0 %v2738
  %3522 = vmatprep.subr.bf16.mxu0 0
  %3523 = vmatpush1.bf16.msra.mxu0 %v2739
  %3524 = vmatprep.subr.bf16.mxu0 0
  %3525 = vmatpush1.bf16.msra.mxu0 %v2740
  %3526 = vmatprep.subr.bf16.mxu0 0
  %3527 = vmatpush1.bf16.msra.mxu0 %v2741
  %3528 = vmatprep.subr.bf16.mxu0 0
  %3529 = vmatpush1.bf16.msra.mxu0 %v2742
  %3530 = vmatprep.subr.bf16.mxu0 0
  %3531 = vmatpush1.bf16.msra.mxu0 %v2743
  %3532 = vmatprep.subr.bf16.mxu0 0
  %3533 = vmatpush1.bf16.msra.mxu0 %v2744
  %3534 = vmatprep.subr.bf16.mxu0 0
  %3535 = vmatpush1.bf16.msra.mxu0 %v2745
  %3536 = vmatprep.subr.bf16.mxu0 0
  %3537 = vmatpush1.bf16.msra.mxu0 %v2746
  %3538 = vmatprep.subr.bf16.mxu0 0
  %3539 = vmatpush1.bf16.msra.mxu0 %v2747
  %3540 = vmatprep.mubr.bf16.mxu0 %v1004
  %3541 = vmatmul.mubr.bf16.gmra.mrb[0].mxu0 %v1003
  %v3542 = vpop.f32.mrb[0].mxu0
  %v3543 = vadd.f32 %v3503, %v3542
  %v3544 = vpop.f32.mrb[0].mxu0
  %v3545 = vpop.f32.mrb[0].mxu0
  %v3546 = vpop.f32.mrb[0].mxu0
  %3547 = vdwg.mxu0
  %3548 = vmatprep.subr.bf16.mxu0 0
  %3549 = vmatpush1.bf16.msra.mxu0 %v2748
  %3550 = vmatprep.subr.bf16.mxu0 0
  %3551 = vmatpush1.bf16.msra.mxu0 %v2749
  %3552 = vmatprep.subr.bf16.mxu0 0
  %3553 = vmatpush1.bf16.msra.mxu0 %v2750
  %3554 = vmatprep.subr.bf16.mxu0 0
  %3555 = vmatpush1.bf16.msra.mxu0 %v2751
  %3556 = vmatprep.subr.bf16.mxu0 0
  %3557 = vmatpush1.bf16.msra.mxu0 %v2752
  %3558 = vmatprep.subr.bf16.mxu0 0
  %3559 = vmatpush1.bf16.msra.mxu0 %v2753
  %3560 = vmatprep.subr.bf16.mxu0 0
  %3561 = vmatpush1.bf16.msra.mxu0 %v2754
  %3562 = vmatprep.subr.bf16.mxu0 0
  %3563 = vmatpush1.bf16.msra.mxu0 %v2755
  %3564 = vmatprep.subr.bf16.mxu0 0
  %3565 = vmatpush1.bf16.msra.mxu0 %v2756
  %3566 = vmatprep.subr.bf16.mxu0 0
  %3567 = vmatpush1.bf16.msra.mxu0 %v2757
  %3568 = vmatprep.subr.bf16.mxu0 0
  %3569 = vmatpush1.bf16.msra.mxu0 %v2758
  %3570 = vmatprep.subr.bf16.mxu0 0
  %3571 = vmatpush1.bf16.msra.mxu0 %v2759
  %3572 = vmatprep.subr.bf16.mxu0 0
  %3573 = vmatpush1.bf16.msra.mxu0 %v2760
  %3574 = vmatprep.subr.bf16.mxu0 0
  %3575 = vmatpush1.bf16.msra.mxu0 %v2761
  %3576 = vmatprep.subr.bf16.mxu0 0
  %3577 = vmatpush1.bf16.msra.mxu0 %v2762
  %3578 = vmatprep.subr.bf16.mxu0 0
  %3579 = vmatpush1.bf16.msra.mxu0 %v2763
  %3580 = vmatprep.mubr.bf16.mxu0 %v1006
  %3581 = vmatmul.mubr.bf16.gmra.mrb[0].mxu0 %v1005
  %v3582 = vpop.f32.mrb[0].mxu0
  %v3583 = vadd.f32 %v3543, %v3582
  %v3584 = vpop.f32.mrb[0].mxu0
  %v3585 = vpop.f32.mrb[0].mxu0
  %v3586 = vpop.f32.mrb[0].mxu0
  %3587 = vdwg.mxu0
  %3588 = vmatprep.subr.bf16.mxu0 0
  %3589 = vmatpush1.bf16.msra.mxu0 %v2764
  %3590 = vmatprep.subr.bf16.mxu0 0
  %3591 = vmatpush1.bf16.msra.mxu0 %v2765
  %3592 = vmatprep.subr.bf16.mxu0 0
  %3593 = vmatpush1.bf16.msra.mxu0 %v2766
  %3594 = vmatprep.subr.bf16.mxu0 0
  %3595 = vmatpush1.bf16.msra.mxu0 %v2767
  %3596 = vmatprep.subr.bf16.mxu0 0
  %3597 = vmatpush1.bf16.msra.mxu0 %v2768
  %3598 = vmatprep.subr.bf16.mxu0 0
  %3599 = vmatpush1.bf16.msra.mxu0 %v2769
  %3600 = vmatprep.subr.bf16.mxu0 0
  %3601 = vmatpush1.bf16.msra.mxu0 %v2770
  %3602 = vmatprep.subr.bf16.mxu0 0
  %3603 = vmatpush1.bf16.msra.mxu0 %v2771
  %3604 = vmatprep.subr.bf16.mxu0 0
  %3605 = vmatpush1.bf16.msra.mxu0 %v2772
  %3606 = vmatprep.subr.bf16.mxu0 0
  %3607 = vmatpush1.bf16.msra.mxu0 %v2773
  %3608 = vmatprep.subr.bf16.mxu0 0
  %3609 = vmatpush1.bf16.msra.mxu0 %v2774
  %3610 = vmatprep.subr.bf16.mxu0 0
  %3611 = vmatpush1.bf16.msra.mxu0 %v2775
  %3612 = vmatprep.subr.bf16.mxu0 0
  %3613 = vmatpush1.bf16.msra.mxu0 %v2776
  %3614 = vmatprep.subr.bf16.mxu0 0
  %3615 = vmatpush1.bf16.msra.mxu0 %v2777
  %3616 = vmatprep.subr.bf16.mxu0 0
  %3617 = vmatpush1.bf16.msra.mxu0 %v2778
  %3618 = vmatprep.subr.bf16.mxu0 0
  %3619 = vmatpush1.bf16.msra.mxu0 %v2779
  %3620 = vmatprep.mubr.bf16.mxu0 %v1008
  %3621 = vmatmul.mubr.bf16.gmra.mrb[0].mxu0 %v1007
  %v3622 = vpop.f32.mrb[0].mxu0
  %v3623 = vadd.f32 %v3583, %v3622
  %v3624 = vpop.f32.mrb[0].mxu0
  %v3625 = vpop.f32.mrb[0].mxu0
  %v3626 = vpop.f32.mrb[0].mxu0
  %3627 = vdwg.mxu0
  %3628 = vmatprep.subr.bf16.mxu0 0
  %3629 = vmatpush1.bf16.msra.mxu0 %v2780
  %3630 = vmatprep.subr.bf16.mxu0 0
  %3631 = vmatpush1.bf16.msra.mxu0 %v2781
  %3632 = vmatprep.subr.bf16.mxu0 0
  %3633 = vmatpush1.bf16.msra.mxu0 %v2782
  %3634 = vmatprep.subr.bf16.mxu0 0
  %3635 = vmatpush1.bf16.msra.mxu0 %v2783
  %3636 = vmatprep.subr.bf16.mxu0 0
  %3637 = vmatpush1.bf16.msra.mxu0 %v2784
  %3638 = vmatprep.subr.bf16.mxu0 0
  %3639 = vmatpush1.bf16.msra.mxu0 %v2785
  %3640 = vmatprep.subr.bf16.mxu0 0
  %3641 = vmatpush1.bf16.msra.mxu0 %v2786
  %3642 = vmatprep.subr.bf16.mxu0 0
  %3643 = vmatpush1.bf16.msra.mxu0 %v2787
  %3644 = vmatprep.subr.bf16.mxu0 0
  %3645 = vmatpush1.bf16.msra.mxu0 %v2788
  %3646 = vmatprep.subr.bf16.mxu0 0
  %3647 = vmatpush1.bf16.msra.mxu0 %v2789
  %3648 = vmatprep.subr.bf16.mxu0 0
  %3649 = vmatpush1.bf16.msra.mxu0 %v2790
  %3650 = vmatprep.subr.bf16.mxu0 0
  %3651 = vmatpush1.bf16.msra.mxu0 %v2791
  %3652 = vmatprep.subr.bf16.mxu0 0
  %3653 = vmatpush1.bf16.msra.mxu0 %v2792
  %3654 = vmatprep.subr.bf16.mxu0 0
  %3655 = vmatpush1.bf16.msra.mxu0 %v2793
  %3656 = vmatprep.subr.bf16.mxu0 0
  %3657 = vmatpush1.bf16.msra.mxu0 %v2794
  %3658 = vmatprep.subr.bf16.mxu0 0
  %3659 = vmatpush1.bf16.msra.mxu0 %v2795
  %3660 = vmatprep.mubr.bf16.mxu0 %v1010
  %3661 = vmatmul.mubr.bf16.gmra.mrb[0].mxu0 %v1009
  %v3662 = vpop.f32.mrb[0].mxu0
  %v3663 = vadd.f32 %v3623, %v3662
  %v3664 = vpop.f32.mrb[0].mxu0
  %v3665 = vpop.f32.mrb[0].mxu0
  %v3666 = vpop.f32.mrb[0].mxu0
  %3667 = vdwg.mxu0
  %3668 = vmatprep.subr.bf16.mxu0 0
  %3669 = vmatpush1.bf16.msra.mxu0 %v2796
  %3670 = vmatprep.subr.bf16.mxu0 0
  %3671 = vmatpush1.bf16.msra.mxu0 %v2797
  %3672 = vmatprep.subr.bf16.mxu0 0
  %3673 = vmatpush1.bf16.msra.mxu0 %v2798
  %3674 = vmatprep.subr.bf16.mxu0 0
  %3675 = vmatpush1.bf16.msra.mxu0 %v2799
  %3676 = vmatprep.subr.bf16.mxu0 0
  %3677 = vmatpush1.bf16.msra.mxu0 %v2800
  %3678 = vmatprep.subr.bf16.mxu0 0
  %3679 = vmatpush1.bf16.msra.mxu0 %v2801
  %3680 = vmatprep.subr.bf16.mxu0 0
  %3681 = vmatpush1.bf16.msra.mxu0 %v2802
  %3682 = vmatprep.subr.bf16.mxu0 0
  %3683 = vmatpush1.bf16.msra.mxu0 %v2803
  %3684 = vmatprep.subr.bf16.mxu0 0
  %3685 = vmatpush1.bf16.msra.mxu0 %v2804
  %3686 = vmatprep.subr.bf16.mxu0 0
  %3687 = vmatpush1.bf16.msra.mxu0 %v2805
  %3688 = vmatprep.subr.bf16.mxu0 0
  %3689 = vmatpush1.bf16.msra.mxu0 %v2806
  %3690 = vmatprep.subr.bf16.mxu0 0
  %3691 = vmatpush1.bf16.msra.mxu0 %v2807
  %3692 = vmatprep.subr.bf16.mxu0 0
  %3693 = vmatpush1.bf16.msra.mxu0 %v2808
  %3694 = vmatprep.subr.bf16.mxu0 0
  %3695 = vmatpush1.bf16.msra.mxu0 %v2809
  %3696 = vmatprep.subr.bf16.mxu0 0
  %3697 = vmatpush1.bf16.msra.mxu0 %v2810
  %3698 = vmatprep.subr.bf16.mxu0 0
  %3699 = vmatpush1.bf16.msra.mxu0 %v2811
  %3700 = vmatprep.mubr.bf16.mxu0 %v1012
  %3701 = vmatmul.mubr.bf16.gmra.mrb[0].mxu0 %v1011
  %v3702 = vpop.f32.mrb[0].mxu0
  %v3703 = vadd.f32 %v3663, %v3702
  %v3704 = vpop.f32.mrb[0].mxu0
  %v3705 = vpop.f32.mrb[0].mxu0
  %v3706 = vpop.f32.mrb[0].mxu0
  %3707 = vdwg.mxu0
  %vm3708 = vcmp.gt.f32.partialorder %v3703, 0.0
  %v3709 = vmul.f32 %v3703, 0.01
  %v3710 = vsel %vm3708, %v3703, %v3709
  %v3711 = vld [vmem:[%s11] sm:$0x1]
  %v3713 = vlaneseq
  %v3714 = vshrl.u32 %v3713, 7
  %v3715 = vsub.s32 0, %v3714
  %v3716 = vrot.slane %v3711, %v3715
  %v3718 = vmul.f32 %v3710, %v3716
  %vm3719 = vcmask 517120
  %v3720 = vsel %vm3719, %v3718, 0.0
  %3721 = vadd.xlane.f32.xlu0 %v3720
  %v3722 = vpop.xlane.xlu0 %3721
  %v3723 = vld [vmem:[#allocation3] sm:$0x1]
  %v3725 = vlaneseq
  %v3726 = vshrl.u32 %v3725, 7
  %v3727 = vsub.s32 0, %v3726
  %v3728 = vrot.slane %v3723, %v3727
  %v3730 = vadd.f32 %v3722, %v3728
  %vm3731 = vcmask 1024
  %3732 = vst.msk [vmem:[%s13] sm:$0x3] %vm3731, %v3730
  // Predicated region
  $region54: #{fcglvnn_forward.1} parent=0 // pred_check
    _
  $region55: #{fcglvnn_forward.1} parent=0 // pred_check_branch
    %3734 = sbr.rel (0) target = $region57
  $region56: #{fcglvnn_forward.1} parent=0 // pred_region
    _
  $region57: #{fcglvnn_forward.1} parent=0 // pred_fallthru
    _
  // Predicated region
  $region58: #{fcglvnn_forward.1} parent=0 // pred_check
    _
  $region59: #{fcglvnn_forward.1} parent=0 // pred_check_branch
    %3736 = sbr.rel (0) target = $region61
  $region60: #{fcglvnn_forward.1} parent=0 // pred_region
    _
  $region61: #{fcglvnn_forward.1} parent=0 // pred_fallthru
    _

</llo_original>
